<compile_context>
chip_gen: v7x
topology: tpu7x:2x2x1
jax: 0.10.0
libtpu: 0.0.40
codegen_flags: <defaults>
</compile_context>

<pallas_src>
import functools
import math

import jax
import jax.numpy as jnp
from jax.experimental import pallas as pl
from jax.experimental.pallas import tpu as pltpu


def _mha_kernel(q_ref, k_ref, v_ref, mask_ref,
                wq_ref, wk_ref, wv_ref, wo_ref,
                o_ref,
                acc_ref, bias_ref, kc_ref, vc_ref,
                *, heads_per_step):
    """Grid: (batch, query-tile, head-group); head-group (innermost) is the
    accumulation axis for the output projection."""
    qi = pl.program_id(1)
    hg = pl.program_id(2)
    g = heads_per_step
    cd = kc_ref.dtype                          # matmul operand dtype (bf16)
    d_k = wq_ref.shape[-1]
    scale = 1.0 / math.sqrt(d_k)

    # ---- per (batch, q-tile) init: zero the accumulator, build the additive
    # mask bias ONCE (reused by every head of this q tile). -----------------
    @pl.when(hg == 0)
    def _():
        acc_ref[...] = jnp.zeros_like(acc_ref)
        # mask is {0,1} int8 (normalized in the wrapper); arithmetic form
        # (keep -> 0, drop -> -1e9) avoids an int8-masked select.
        m01 = mask_ref[0, 0].astype(jnp.float32)            # (tq, L)
        bias_ref[...] = ((m01 - 1.0) * 1e9).astype(bias_ref.dtype)

    # ---- per (batch, head-group) K/V projection cache fill -----------------
    # qi is outer to hg, so the qi == 0 sweep visits every head group of the
    # current batch exactly once; later q tiles reuse the cached projections.
    @pl.when(qi == 0)
    def _():
        kb = k_ref[0]                                        # (L, D) bf16
        vb = v_ref[0]
        for i in range(g):
            h = hg * g + i
            kc_ref[h] = jnp.dot(kb, wk_ref[h],
                                preferred_element_type=jnp.float32).astype(cd)
            vc_ref[h] = jnp.dot(vb, wv_ref[h],
                                preferred_element_type=jnp.float32).astype(cd)

    # ---- attention for the g heads of this group ---------------------------
    qb = q_ref[0]                                            # (tq, D) bf16
    bias = bias_ref[...].astype(jnp.float32)                 # once per step

    contrib = None
    for i in range(g):
        h = hg * g + i
        # Per-head Q projection, pre-scaled so the (tq, L) score block needs
        # only one VPU pass (bias add) instead of scale + add.
        qh = jnp.dot(qb, wq_ref[h], preferred_element_type=jnp.float32)
        qh = (qh * scale).astype(cd)                         # (tq, d_k)

        # Q @ K^T, contracting the last dim of both operands (canonical flash
        # kernel form; uses the MXU's transposed-RHS path, no per-step vxpose).
        s = jax.lax.dot_general(
            qh, kc_ref[h],
            dimension_numbers=(((1,), (1,)), ((), ())),
            preferred_element_type=jnp.float32)              # (tq, L) f32
        s = s + bias

        # Softmax in f32; reciprocal goes to the EUP slot.
        m = jnp.max(s, axis=-1, keepdims=True)
        e = jnp.exp(s - m)
        r = pl.reciprocal(jnp.sum(e, axis=-1, keepdims=True), approx=True)
        p = (e * r).astype(cd)                               # (tq, L) bf16

        ctx = jnp.dot(p, vc_ref[h],
                      preferred_element_type=jnp.float32)    # (tq, d_k) f32
        # This head's slice of the output projection (replaces concat + GEMM).
        c = jnp.dot(ctx.astype(cd), wo_ref[h],
                    preferred_element_type=jnp.float32)      # (tq, D) f32
        contrib = c if contrib is None else contrib + c

    acc_ref[...] += contrib                                  # one RMW per step

    @pl.when(hg == pl.num_programs(2) - 1)
    def _():
        o_ref[0] = acc_ref[...].astype(o_ref.dtype)


def _vmem_limit_bytes():
    """Generation-aware scoped-VMEM limit: ~75% of physical VMEM, capped at
    100 MiB (v5e/v6e -> 96 MiB, v7x -> 48 MiB), leaving compiler headroom."""
    cap = 64 * 1024 * 1024          # conservative fallback if query fails
    try:
        cap = int(getattr(pltpu.get_tpu_info(), "vmem_capacity_bytes", cap))
    except Exception:
        pass
    return min(cap * 3 // 4, 100 * 1024 * 1024)


def multi_headed_attention(query, key, value, mask, w_q, w_k, w_v, w_o, *,
                           H, q_tile=256, head_group=None,
                           compute_dtype=jnp.bfloat16):
    """query/key/value: (B, L, D); mask: (B, 1, L, L) with nonzero = keep;
    w_*: (D, D) in PyTorch nn.Linear (out, in) layout, bias=False."""
    B, L, D = query.shape
    assert D % H == 0, "the number of heads must divide the embedding dim"
    d_k = D // H
    out_dtype = query.dtype

    tq = min(q_tile, L)
    assert L % tq == 0, "sequence length must be divisible by the query tile"
    n_q = L // tq

    # Heads processed per grid step.  Target ~256 output columns per group for
    # the 256-wide MXUs on v6e/v7x; pass head_group=2 to favour v5e (128-wide).
    if head_group is None:
        head_group = max(1, min(H, 256 // max(d_k, 1)))
    g = max(1, min(head_group, H))
    while H % g:
        g -= 1
    n_hg = H // g

    cd = compute_dtype

    if mask is None:
        mask_i8 = jnp.ones((B, 1, L, L), dtype=jnp.int8)
    else:
        assert mask.shape == (B, 1, L, L), "mask must have shape (B, 1, L, L)"
        mask_i8 = (mask != 0).astype(jnp.int8)       # 4x less DMA than int32

    # Pre-cast activations to bf16 in the wrapper: halves q/k/v HBM traffic
    # and removes the in-kernel cast scratch of the previous version.
    q_c = query.astype(cd)
    k_c = key.astype(cd)
    v_c = value.astype(cd)

    # PyTorch (out, in) -> (in, out), pre-sliced per head, bf16, so the kernel
    # never transposes weights nor takes lane-misaligned head slices.
    def split_out_heads(w):                          # (D, D) -> (H, D, d_k)
        return jnp.transpose(w.T.reshape(D, H, d_k), (1, 0, 2)).astype(cd)

    wq_h = split_out_heads(w_q)                      # columns of W_Q^T / head
    wk_h = split_out_heads(w_k)
    wv_h = split_out_heads(w_v)
    wo_h = w_o.T.reshape(H, d_k, D).astype(cd)       # rows of W_O^T / head

    kernel = functools.partial(_mha_kernel, heads_per_step=g)
    grid = (B, n_q, n_hg)

    def _call(use_single_buffer):
        # Single-buffer blocks whose index is constant within a batch (k, v)
        # or constant for the whole call (weights).
        pm = ({"pipeline_mode": pl.Buffered(1)}
              if (use_single_buffer and hasattr(pl, "Buffered")) else {})
        in_specs = [
            pl.BlockSpec((1, tq, D), lambda b, qi, hg: (b, qi, 0)),         # q
            pl.BlockSpec((1, L, D), lambda b, qi, hg: (b, 0, 0), **pm),     # k
            pl.BlockSpec((1, L, D), lambda b, qi, hg: (b, 0, 0), **pm),     # v
            pl.BlockSpec((1, 1, tq, L), lambda b, qi, hg: (b, 0, qi, 0)),   # mask
            # Whole-array, VMEM-resident weights (constant block index ->
            # fetched once per call, never re-streamed per grid step).
            pl.BlockSpec((H, D, d_k), lambda b, qi, hg: (0, 0, 0), **pm),   # W_Q^T
            pl.BlockSpec((H, D, d_k), lambda b, qi, hg: (0, 0, 0), **pm),   # W_K^T
            pl.BlockSpec((H, D, d_k), lambda b, qi, hg: (0, 0, 0), **pm),   # W_V^T
            pl.BlockSpec((H, d_k, D), lambda b, qi, hg: (0, 0, 0), **pm),   # W_O^T
        ]
        out_specs = pl.BlockSpec((1, tq, D), lambda b, qi, hg: (b, qi, 0))

        return pl.pallas_call(
            kernel,
            out_shape=jax.ShapeDtypeStruct((B, L, D), out_dtype),
            grid_spec=pltpu.PrefetchScalarGridSpec(
                num_scalar_prefetch=0,
                grid=grid,
                in_specs=in_specs,
                out_specs=out_specs,
                scratch_shapes=[
                    pltpu.VMEM((tq, D), jnp.float32),   # output accumulator
                    pltpu.VMEM((tq, L), cd),            # additive mask bias
                    pltpu.VMEM((H, L, d_k), cd),        # cached K projections
                    pltpu.VMEM((H, L, d_k), cd),        # cached V projections
                ]),
            compiler_params=pltpu.CompilerParams(
                # b: megacore-parallel.  qi: "arbitrary" because the K/V
                # projection caches are filled on the qi == 0 sweep and reused
                # by later q tiles.  hg: output accumulation axis.
                dimension_semantics=("parallel", "arbitrary", "arbitrary"),
                vmem_limit_bytes=_vmem_limit_bytes()),
        )(q_c, k_c, v_c, mask_i8, wq_h, wk_h, wv_h, wo_h)

    try:
        return _call(True)
    except Exception:
        # Fall back gracefully if this JAX build rejects pl.Buffered(1).
        return _call(False)


def _reference(query, key, value, mask, w_q, w_k, w_v, w_o, *, H,
               compute_dtype=jnp.float32):
    """Pure-JAX reference mirroring the PyTorch module.  With bf16 it mirrors
    the kernel's matmul-operand casting (f32 accumulation / softmax)."""
    B, L, D = query.shape
    d_k = D // H
    cd = compute_dtype
    scale = 1.0 / math.sqrt(d_k)

    def linear(x, w):  # PyTorch nn.Linear, bias=False: y = x @ W.T
        return jnp.einsum("bld,ed->ble", x.astype(cd), w.astype(cd),
                          preferred_element_type=jnp.float32)

    def split_heads(x):  # (B, L, D) -> (B, H, L, d_k)
        return x.reshape(B, L, H, d_k).transpose(0, 2, 1, 3)

    Q = split_heads(linear(query, w_q)) * scale
    K = split_heads(linear(key, w_k))
    V = split_heads(linear(value, w_v))

    s = jnp.einsum("bhld,bhmd->bhlm", Q.astype(cd), K.astype(cd),
                   preferred_element_type=jnp.float32)
    s = jnp.where(mask != 0, s, -1e9)
    p = jax.nn.softmax(s, axis=-1)
    ctx = jnp.einsum("bhlm,bhmd->bhld", p.astype(cd), V.astype(cd),
                     preferred_element_type=jnp.float32)
    ctx = ctx.transpose(0, 2, 1, 3).reshape(B, L, D)
    return jnp.einsum("bld,ed->ble", ctx.astype(cd), w_o.astype(cd),
                      preferred_element_type=jnp.float32)


if __name__ == "__main__":
    B, L, D, H = 2, 16, 32, 4

    key0 = jax.random.PRNGKey(0)
    kq, kk, kv, kwq, kwk, kwv, kwo = jax.random.split(key0, 7)

    query = jax.random.normal(kq, (B, L, D), dtype=jnp.float32)
    keyx = jax.random.normal(kk, (B, L, D), dtype=jnp.float32)
    value = jax.random.normal(kv, (B, L, D), dtype=jnp.float32)

    # Deterministic "xavier-like" weights, shape (out, in) = (D, D).
    lim = math.sqrt(6.0 / (D + D))
    w_q = jax.random.uniform(kwq, (D, D), jnp.float32, -lim, lim)
    w_k = jax.random.uniform(kwk, (D, D), jnp.float32, -lim, lim)
    w_v = jax.random.uniform(kwv, (D, D), jnp.float32, -lim, lim)
    w_o = jax.random.uniform(kwo, (D, D), jnp.float32, -lim, lim)

    # Causal mask (B, 1, L, L), 1 = keep.
    causal = jnp.tril(jnp.ones((L, L), dtype=jnp.int32))
    mask = jnp.broadcast_to(causal, (B, 1, L, L))

    ref_bf16 = _reference(query, keyx, value, mask, w_q, w_k, w_v, w_o,
                          H=H, compute_dtype=jnp.bfloat16)
    ref_f32 = _reference(query, keyx, value, mask, w_q, w_k, w_v, w_o,
                         H=H, compute_dtype=jnp.float32)

    # (1) small q tile + 2 head groups: exercises the K/V-cache reuse across
    #     q tiles and the head-group accumulation axis.
    out = multi_headed_attention(query, keyx, value, mask,
                                 w_q, w_k, w_v, w_o, H=H,
                                 q_tile=8, head_group=2)
    out = jax.block_until_ready(out)
    assert out.shape == (B, L, D)
    assert jnp.allclose(out, ref_bf16, atol=2e-2, rtol=2e-2), \
        "mismatch vs bf16-mirrored reference (tiled path)"
    assert jnp.allclose(out, ref_f32, atol=1e-1, rtol=1e-1), \
        "mismatch vs f32 reference (tiled path)"

    # (2) default configuration (single q tile, all heads in one group).
    out2 = multi_headed_attention(query, keyx, value, mask,
                                  w_q, w_k, w_v, w_o, H=H)
    out2 = jax.block_until_ready(out2)
    assert jnp.allclose(out2, ref_bf16, atol=2e-2, rtol=2e-2), \
        "mismatch vs bf16-mirrored reference (default path)"
    assert jnp.allclose(out2, ref_f32, atol=1e-1, rtol=1e-1), \
        "mismatch vs f32 reference (default path)"

    print("KERNEL_OK")
</pallas_src>

<mosaic_0001>
module attributes {stable_mosaic.version = 11 : i64} {
  func.func @_mha_kernel(%arg0: i32, %arg1: i32, %arg2: i32, %arg3: memref<1x8x32xbf16, #tpu.memory_space<vmem>>, %arg4: memref<1x16x32xbf16, #tpu.memory_space<vmem>>, %arg5: memref<1x16x32xbf16, #tpu.memory_space<vmem>>, %arg6: memref<1x1x8x16xi8, #tpu.memory_space<vmem>>, %arg7: memref<4x32x8xbf16, #tpu.memory_space<vmem>>, %arg8: memref<4x32x8xbf16, #tpu.memory_space<vmem>>, %arg9: memref<4x32x8xbf16, #tpu.memory_space<vmem>>, %arg10: memref<4x8x32xbf16, #tpu.memory_space<vmem>>, %arg11: memref<1x8x32xf32, #tpu.memory_space<vmem>>, %arg12: memref<8x32xf32, #tpu.memory_space<vmem>>, %arg13: memref<8x16xbf16, #tpu.memory_space<vmem>>, %arg14: memref<4x16x8xbf16, #tpu.memory_space<vmem>>, %arg15: memref<4x16x8xbf16, #tpu.memory_space<vmem>>) attributes {dimension_semantics = [#tpu.dimension_semantics<parallel>, #tpu.dimension_semantics<arbitrary>, #tpu.dimension_semantics<arbitrary>], iteration_bounds = array<i64: 2, 2, 2>, scalar_prefetch = 0 : i64, scratch_operands = 4 : i64, tpu.core_type = #tpu.core_type<tc>, window_params = [{transform_indices = @transform_0, window_bounds = array<i64: 1, 8, 32>}, {pipeline_mode = #tpu.pipeline_mode<synchronous>, transform_indices = @transform_1, window_bounds = array<i64: 1, 16, 32>}, {pipeline_mode = #tpu.pipeline_mode<synchronous>, transform_indices = @transform_2, window_bounds = array<i64: 1, 16, 32>}, {transform_indices = @transform_3, window_bounds = array<i64: 1, 1, 8, 16>}, {pipeline_mode = #tpu.pipeline_mode<synchronous>, transform_indices = @transform_4, window_bounds = array<i64: 4, 32, 8>}, {pipeline_mode = #tpu.pipeline_mode<synchronous>, transform_indices = @transform_5, window_bounds = array<i64: 4, 32, 8>}, {pipeline_mode = #tpu.pipeline_mode<synchronous>, transform_indices = @transform_6, window_bounds = array<i64: 4, 32, 8>}, {pipeline_mode = #tpu.pipeline_mode<synchronous>, transform_indices = @transform_7, window_bounds = array<i64: 4, 8, 32>}, {transform_indices = @transform_8, window_bounds = array<i64: 1, 8, 32>}]} {
    %c0_i32 = arith.constant 0 : i32
    %0 = arith.cmpi eq, %arg2, %c0_i32 : i32
    %1 = arith.extui %0 : i1 to i32
    %c0_i32_0 = arith.constant 0 : i32
    %2 = arith.cmpi ne, %1, %c0_i32_0 : i32
    scf.if %2 {
      %cst_44 = arith.constant 0.000000e+00 : f32
      %85 = vector.broadcast %cst_44 : f32 to vector<8x32xf32>
      %c0_45 = arith.constant 0 : index
      %c0_46 = arith.constant 0 : index
      %86 = vector.load %arg12[%c0_45, %c0_46] : memref<8x32xf32, #tpu.memory_space<vmem>>, vector<8x32xf32>
      tpu.vector_store %arg12[%c0_45, %c0_46], %85 {strides = array<i32>} : memref<8x32xf32, #tpu.memory_space<vmem>>, vector<8x32xf32>,
      %c0_47 = arith.constant 0 : index
      %c0_48 = arith.constant 0 : index
      %c0_49 = arith.constant 0 : index
      %c0_50 = arith.constant 0 : index
      %87 = vector.load %arg6[%c0_47, %c0_48, %c0_49, %c0_50] : memref<1x1x8x16xi8, #tpu.memory_space<vmem>>, vector<1x1x8x16xi8>
      %88 = vector.shape_cast %87 : vector<1x1x8x16xi8> to vector<8x16xi8>
      %89 = arith.sitofp %88 : vector<8x16xi8> to vector<8x16xf32>
      %cst_51 = arith.constant 1.000000e+00 : f32
      %90 = vector.broadcast %cst_51 : f32 to vector<8x16xf32>
      %91 = arith.subf %89, %90 : vector<8x16xf32>
      %cst_52 = arith.constant 1.000000e+09 : f32
      %92 = vector.broadcast %cst_52 : f32 to vector<8x16xf32>
      %93 = arith.mulf %91, %92 : vector<8x16xf32>
      %94 = arith.truncf %93 : vector<8x16xf32> to vector<8x16xbf16>
      %c0_53 = arith.constant 0 : index
      %c0_54 = arith.constant 0 : index
      %95 = vector.load %arg13[%c0_53, %c0_54] : memref<8x16xbf16, #tpu.memory_space<vmem>>, vector<8x16xbf16>
      tpu.vector_store %arg13[%c0_53, %c0_54], %94 {strides = array<i32>} : memref<8x16xbf16, #tpu.memory_space<vmem>>, vector<8x16xbf16>,
    } else {
    }
    %c0_i32_1 = arith.constant 0 : i32
    %3 = arith.cmpi eq, %arg1, %c0_i32_1 : i32
    %4 = arith.extui %3 : i1 to i32
    %c0_i32_2 = arith.constant 0 : i32
    %5 = arith.cmpi ne, %4, %c0_i32_2 : i32
    scf.if %5 {
      %c0_44 = arith.constant 0 : index
      %c0_45 = arith.constant 0 : index
      %c0_46 = arith.constant 0 : index
      %85 = vector.load %arg4[%c0_44, %c0_45, %c0_46] : memref<1x16x32xbf16, #tpu.memory_space<vmem>>, vector<1x16x32xbf16>
      %86 = vector.shape_cast %85 : vector<1x16x32xbf16> to vector<16x32xbf16>
      %c0_47 = arith.constant 0 : index
      %c0_48 = arith.constant 0 : index
      %c0_49 = arith.constant 0 : index
      %87 = vector.load %arg5[%c0_47, %c0_48, %c0_49] : memref<1x16x32xbf16, #tpu.memory_space<vmem>>, vector<1x16x32xbf16>
      %88 = vector.shape_cast %87 : vector<1x16x32xbf16> to vector<16x32xbf16>
      %c2_i32_50 = arith.constant 2 : i32
      %89 = arith.muli %arg2, %c2_i32_50 : i32
      %c0_i32_51 = arith.constant 0 : i32
      %90 = arith.addi %89, %c0_i32_51 : i32
      %91 = arith.index_cast %90 : i32 to index
      %c0_52 = arith.constant 0 : index
      %c0_53 = arith.constant 0 : index
      %92 = vector.load %arg8[%91, %c0_52, %c0_53] : memref<4x32x8xbf16, #tpu.memory_space<vmem>>, vector<1x32x8xbf16>
      %93 = vector.shape_cast %92 : vector<1x32x8xbf16> to vector<32x8xbf16>
      %cst_54 = arith.constant dense<0.000000e+00> : vector<16x8xf32>
      %94 = tpu.matmul %86, %93, %cst_54 {dimension_numbers = #tpu.dot_dimension_numbers<[1], [0], [0], [1], [0, 0, 1, 1], [], []>} : vector<16x32xbf16>, vector<32x8xbf16>, vector<16x8xf32> -> vector<16x8xf32>
      %95 = arith.truncf %94 : vector<16x8xf32> to vector<16x8xbf16>
      %96 = arith.index_cast %90 : i32 to index
      %c0_55 = arith.constant 0 : index
      %c0_56 = arith.constant 0 : index
      %97 = vector.load %arg14[%96, %c0_55, %c0_56] : memref<4x16x8xbf16, #tpu.memory_space<vmem>>, vector<1x16x8xbf16>
      %98 = vector.shape_cast %97 : vector<1x16x8xbf16> to vector<16x8xbf16>
      %99 = vector.shape_cast %95 : vector<16x8xbf16> to vector<1x16x8xbf16>
      tpu.vector_store %arg14[%96, %c0_55, %c0_56], %99 {strides = array<i32>} : memref<4x16x8xbf16, #tpu.memory_space<vmem>>, vector<1x16x8xbf16>,
      %100 = arith.index_cast %90 : i32 to index
      %c0_57 = arith.constant 0 : index
      %c0_58 = arith.constant 0 : index
      %101 = vector.load %arg9[%100, %c0_57, %c0_58] : memref<4x32x8xbf16, #tpu.memory_space<vmem>>, vector<1x32x8xbf16>
      %102 = vector.shape_cast %101 : vector<1x32x8xbf16> to vector<32x8xbf16>
      %cst_59 = arith.constant dense<0.000000e+00> : vector<16x8xf32>
      %103 = tpu.matmul %88, %102, %cst_59 {dimension_numbers = #tpu.dot_dimension_numbers<[1], [0], [0], [1], [0, 0, 1, 1], [], []>} : vector<16x32xbf16>, vector<32x8xbf16>, vector<16x8xf32> -> vector<16x8xf32>
      %104 = arith.truncf %103 : vector<16x8xf32> to vector<16x8xbf16>
      %105 = arith.index_cast %90 : i32 to index
      %c0_60 = arith.constant 0 : index
      %c0_61 = arith.constant 0 : index
      %106 = vector.load %arg15[%105, %c0_60, %c0_61] : memref<4x16x8xbf16, #tpu.memory_space<vmem>>, vector<1x16x8xbf16>
      %107 = vector.shape_cast %106 : vector<1x16x8xbf16> to vector<16x8xbf16>
      %108 = vector.shape_cast %104 : vector<16x8xbf16> to vector<1x16x8xbf16>
      tpu.vector_store %arg15[%105, %c0_60, %c0_61], %108 {strides = array<i32>} : memref<4x16x8xbf16, #tpu.memory_space<vmem>>, vector<1x16x8xbf16>,
      %c2_i32_62 = arith.constant 2 : i32
      %109 = arith.muli %arg2, %c2_i32_62 : i32
      %c1_i32_63 = arith.constant 1 : i32
      %110 = arith.addi %109, %c1_i32_63 : i32
      %111 = arith.index_cast %110 : i32 to index
      %c0_64 = arith.constant 0 : index
      %c0_65 = arith.constant 0 : index
      %112 = vector.load %arg8[%111, %c0_64, %c0_65] : memref<4x32x8xbf16, #tpu.memory_space<vmem>>, vector<1x32x8xbf16>
      %113 = vector.shape_cast %112 : vector<1x32x8xbf16> to vector<32x8xbf16>
      %cst_66 = arith.constant dense<0.000000e+00> : vector<16x8xf32>
      %114 = tpu.matmul %86, %113, %cst_66 {dimension_numbers = #tpu.dot_dimension_numbers<[1], [0], [0], [1], [0, 0, 1, 1], [], []>} : vector<16x32xbf16>, vector<32x8xbf16>, vector<16x8xf32> -> vector<16x8xf32>
      %115 = arith.truncf %114 : vector<16x8xf32> to vector<16x8xbf16>
      %116 = arith.index_cast %110 : i32 to index
      %c0_67 = arith.constant 0 : index
      %c0_68 = arith.constant 0 : index
      %117 = vector.load %arg14[%116, %c0_67, %c0_68] : memref<4x16x8xbf16, #tpu.memory_space<vmem>>, vector<1x16x8xbf16>
      %118 = vector.shape_cast %117 : vector<1x16x8xbf16> to vector<16x8xbf16>
      %119 = vector.shape_cast %115 : vector<16x8xbf16> to vector<1x16x8xbf16>
      tpu.vector_store %arg14[%116, %c0_67, %c0_68], %119 {strides = array<i32>} : memref<4x16x8xbf16, #tpu.memory_space<vmem>>, vector<1x16x8xbf16>,
      %120 = arith.index_cast %110 : i32 to index
      %c0_69 = arith.constant 0 : index
      %c0_70 = arith.constant 0 : index
      %121 = vector.load %arg9[%120, %c0_69, %c0_70] : memref<4x32x8xbf16, #tpu.memory_space<vmem>>, vector<1x32x8xbf16>
      %122 = vector.shape_cast %121 : vector<1x32x8xbf16> to vector<32x8xbf16>
      %cst_71 = arith.constant dense<0.000000e+00> : vector<16x8xf32>
      %123 = tpu.matmul %88, %122, %cst_71 {dimension_numbers = #tpu.dot_dimension_numbers<[1], [0], [0], [1], [0, 0, 1, 1], [], []>} : vector<16x32xbf16>, vector<32x8xbf16>, vector<16x8xf32> -> vector<16x8xf32>
      %124 = arith.truncf %123 : vector<16x8xf32> to vector<16x8xbf16>
      %125 = arith.index_cast %110 : i32 to index
      %c0_72 = arith.constant 0 : index
      %c0_73 = arith.constant 0 : index
      %126 = vector.load %arg15[%125, %c0_72, %c0_73] : memref<4x16x8xbf16, #tpu.memory_space<vmem>>, vector<1x16x8xbf16>
      %127 = vector.shape_cast %126 : vector<1x16x8xbf16> to vector<16x8xbf16>
      %128 = vector.shape_cast %124 : vector<16x8xbf16> to vector<1x16x8xbf16>
      tpu.vector_store %arg15[%125, %c0_72, %c0_73], %128 {strides = array<i32>} : memref<4x16x8xbf16, #tpu.memory_space<vmem>>, vector<1x16x8xbf16>,
    } else {
    }
    %c0 = arith.constant 0 : index
    %c0_3 = arith.constant 0 : index
    %c0_4 = arith.constant 0 : index
    %6 = vector.load %arg3[%c0, %c0_3, %c0_4] : memref<1x8x32xbf16, #tpu.memory_space<vmem>>, vector<1x8x32xbf16>
    %7 = vector.shape_cast %6 : vector<1x8x32xbf16> to vector<8x32xbf16>
    %c0_5 = arith.constant 0 : index
    %c0_6 = arith.constant 0 : index
    %8 = vector.load %arg13[%c0_5, %c0_6] : memref<8x16xbf16, #tpu.memory_space<vmem>>, vector<8x16xbf16>
    %9 = arith.extf %8 : vector<8x16xbf16> to vector<8x16xf32>
    %c2_i32 = arith.constant 2 : i32
    %10 = arith.muli %arg2, %c2_i32 : i32
    %c0_i32_7 = arith.constant 0 : i32
    %11 = arith.addi %10, %c0_i32_7 : i32
    %12 = arith.index_cast %11 : i32 to index
    %c0_8 = arith.constant 0 : index
    %c0_9 = arith.constant 0 : index
    %13 = vector.load %arg7[%12, %c0_8, %c0_9] : memref<4x32x8xbf16, #tpu.memory_space<vmem>>, vector<1x32x8xbf16>
    %14 = vector.shape_cast %13 : vector<1x32x8xbf16> to vector<32x8xbf16>
    %cst = arith.constant dense<0.000000e+00> : vector<8x8xf32>
    %15 = tpu.matmul %7, %14, %cst {dimension_numbers = #tpu.dot_dimension_numbers<[1], [0], [0], [1], [0, 0, 1, 1], [], []>} : vector<8x32xbf16>, vector<32x8xbf16>, vector<8x8xf32> -> vector<8x8xf32>
    %cst_10 = arith.constant 0.353553385 : f32
    %16 = vector.broadcast %cst_10 : f32 to vector<8x8xf32>
    %17 = arith.mulf %15, %16 : vector<8x8xf32>
    %18 = arith.truncf %17 : vector<8x8xf32> to vector<8x8xbf16>
    %19 = arith.index_cast %11 : i32 to index
    %c0_11 = arith.constant 0 : index
    %c0_12 = arith.constant 0 : index
    %20 = vector.load %arg14[%19, %c0_11, %c0_12] : memref<4x16x8xbf16, #tpu.memory_space<vmem>>, vector<1x16x8xbf16>
    %21 = vector.shape_cast %20 : vector<1x16x8xbf16> to vector<16x8xbf16>
    %cst_13 = arith.constant dense<0.000000e+00> : vector<8x16xf32>
    %22 = tpu.matmul %18, %21, %cst_13 {dimension_numbers = #tpu.dot_dimension_numbers<[1], [1], [0], [0], [0, 0, 1, 0], [], []>} : vector<8x8xbf16>, vector<16x8xbf16>, vector<8x16xf32> -> vector<8x16xf32>
    %23 = arith.addf %22, %9 : vector<8x16xf32>
    %cst_14 = arith.constant dense<0xFF800000> : vector<8xf32>
    %24 = vector.multi_reduction <maximumf>, %23, %cst_14 [1] : vector<8x16xf32> to vector<8xf32>
    %25 = vector.shape_cast %24 : vector<8xf32> to vector<8x1xf32>
    %26 = vector.broadcast %25 : vector<8x1xf32> to vector<8x16xf32>
    %27 = arith.subf %23, %26 : vector<8x16xf32>
    %28 = math.exp %27 : vector<8x16xf32>
    %cst_15 = arith.constant dense<0.000000e+00> : vector<8xf32>
    %29 = vector.multi_reduction <add>, %28, %cst_15 [1] : vector<8x16xf32> to vector<8xf32>
    %30 = vector.shape_cast %29 : vector<8xf32> to vector<8x1xf32>
    %31 = tpu.reciprocal %30 {approx = true} : vector<8x1xf32> -> vector<8x1xf32>
    %32 = vector.broadcast %31 : vector<8x1xf32> to vector<8x16xf32>
    %33 = arith.mulf %28, %32 : vector<8x16xf32>
    %34 = arith.truncf %33 : vector<8x16xf32> to vector<8x16xbf16>
    %35 = arith.index_cast %11 : i32 to index
    %c0_16 = arith.constant 0 : index
    %c0_17 = arith.constant 0 : index
    %36 = vector.load %arg15[%35, %c0_16, %c0_17] : memref<4x16x8xbf16, #tpu.memory_space<vmem>>, vector<1x16x8xbf16>
    %37 = vector.shape_cast %36 : vector<1x16x8xbf16> to vector<16x8xbf16>
    %cst_18 = arith.constant dense<0.000000e+00> : vector<8x8xf32>
    %38 = tpu.matmul %34, %37, %cst_18 {dimension_numbers = #tpu.dot_dimension_numbers<[1], [0], [0], [1], [0, 0, 1, 1], [], []>} : vector<8x16xbf16>, vector<16x8xbf16>, vector<8x8xf32> -> vector<8x8xf32>
    %39 = arith.truncf %38 : vector<8x8xf32> to vector<8x8xbf16>
    %40 = arith.index_cast %11 : i32 to index
    %c0_19 = arith.constant 0 : index
    %c0_20 = arith.constant 0 : index
    %41 = vector.load %arg10[%40, %c0_19, %c0_20] : memref<4x8x32xbf16, #tpu.memory_space<vmem>>, vector<1x8x32xbf16>
    %42 = vector.shape_cast %41 : vector<1x8x32xbf16> to vector<8x32xbf16>
    %cst_21 = arith.constant dense<0.000000e+00> : vector<8x32xf32>
    %43 = tpu.matmul %39, %42, %cst_21 {dimension_numbers = #tpu.dot_dimension_numbers<[1], [0], [0], [1], [0, 0, 1, 1], [], []>} : vector<8x8xbf16>, vector<8x32xbf16>, vector<8x32xf32> -> vector<8x32xf32>
    %c2_i32_22 = arith.constant 2 : i32
    %44 = arith.muli %arg2, %c2_i32_22 : i32
    %c1_i32 = arith.constant 1 : i32
    %45 = arith.addi %44, %c1_i32 : i32
    %46 = arith.index_cast %45 : i32 to index
    %c0_23 = arith.constant 0 : index
    %c0_24 = arith.constant 0 : index
    %47 = vector.load %arg7[%46, %c0_23, %c0_24] : memref<4x32x8xbf16, #tpu.memory_space<vmem>>, vector<1x32x8xbf16>
    %48 = vector.shape_cast %47 : vector<1x32x8xbf16> to vector<32x8xbf16>
    %cst_25 = arith.constant dense<0.000000e+00> : vector<8x8xf32>
    %49 = tpu.matmul %7, %48, %cst_25 {dimension_numbers = #tpu.dot_dimension_numbers<[1], [0], [0], [1], [0, 0, 1, 1], [], []>} : vector<8x32xbf16>, vector<32x8xbf16>, vector<8x8xf32> -> vector<8x8xf32>
    %cst_26 = arith.constant 0.353553385 : f32
    %50 = vector.broadcast %cst_26 : f32 to vector<8x8xf32>
    %51 = arith.mulf %49, %50 : vector<8x8xf32>
    %52 = arith.truncf %51 : vector<8x8xf32> to vector<8x8xbf16>
    %53 = arith.index_cast %45 : i32 to index
    %c0_27 = arith.constant 0 : index
    %c0_28 = arith.constant 0 : index
    %54 = vector.load %arg14[%53, %c0_27, %c0_28] : memref<4x16x8xbf16, #tpu.memory_space<vmem>>, vector<1x16x8xbf16>
    %55 = vector.shape_cast %54 : vector<1x16x8xbf16> to vector<16x8xbf16>
    %cst_29 = arith.constant dense<0.000000e+00> : vector<8x16xf32>
    %56 = tpu.matmul %52, %55, %cst_29 {dimension_numbers = #tpu.dot_dimension_numbers<[1], [1], [0], [0], [0, 0, 1, 0], [], []>} : vector<8x8xbf16>, vector<16x8xbf16>, vector<8x16xf32> -> vector<8x16xf32>
    %57 = arith.addf %56, %9 : vector<8x16xf32>
    %cst_30 = arith.constant dense<0xFF800000> : vector<8xf32>
    %58 = vector.multi_reduction <maximumf>, %57, %cst_30 [1] : vector<8x16xf32> to vector<8xf32>
    %59 = vector.shape_cast %58 : vector<8xf32> to vector<8x1xf32>
    %60 = vector.broadcast %59 : vector<8x1xf32> to vector<8x16xf32>
    %61 = arith.subf %57, %60 : vector<8x16xf32>
    %62 = math.exp %61 : vector<8x16xf32>
    %cst_31 = arith.constant dense<0.000000e+00> : vector<8xf32>
    %63 = vector.multi_reduction <add>, %62, %cst_31 [1] : vector<8x16xf32> to vector<8xf32>
    %64 = vector.shape_cast %63 : vector<8xf32> to vector<8x1xf32>
    %65 = tpu.reciprocal %64 {approx = true} : vector<8x1xf32> -> vector<8x1xf32>
    %66 = vector.broadcast %65 : vector<8x1xf32> to vector<8x16xf32>
    %67 = arith.mulf %62, %66 : vector<8x16xf32>
    %68 = arith.truncf %67 : vector<8x16xf32> to vector<8x16xbf16>
    %69 = arith.index_cast %45 : i32 to index
    %c0_32 = arith.constant 0 : index
    %c0_33 = arith.constant 0 : index
    %70 = vector.load %arg15[%69, %c0_32, %c0_33] : memref<4x16x8xbf16, #tpu.memory_space<vmem>>, vector<1x16x8xbf16>
    %71 = vector.shape_cast %70 : vector<1x16x8xbf16> to vector<16x8xbf16>
    %cst_34 = arith.constant dense<0.000000e+00> : vector<8x8xf32>
    %72 = tpu.matmul %68, %71, %cst_34 {dimension_numbers = #tpu.dot_dimension_numbers<[1], [0], [0], [1], [0, 0, 1, 1], [], []>} : vector<8x16xbf16>, vector<16x8xbf16>, vector<8x8xf32> -> vector<8x8xf32>
    %73 = arith.truncf %72 : vector<8x8xf32> to vector<8x8xbf16>
    %74 = arith.index_cast %45 : i32 to index
    %c0_35 = arith.constant 0 : index
    %c0_36 = arith.constant 0 : index
    %75 = vector.load %arg10[%74, %c0_35, %c0_36] : memref<4x8x32xbf16, #tpu.memory_space<vmem>>, vector<1x8x32xbf16>
    %76 = vector.shape_cast %75 : vector<1x8x32xbf16> to vector<8x32xbf16>
    %cst_37 = arith.constant dense<0.000000e+00> : vector<8x32xf32>
    %77 = tpu.matmul %73, %76, %cst_37 {dimension_numbers = #tpu.dot_dimension_numbers<[1], [0], [0], [1], [0, 0, 1, 1], [], []>} : vector<8x8xbf16>, vector<8x32xbf16>, vector<8x32xf32> -> vector<8x32xf32>
    %78 = arith.addf %43, %77 : vector<8x32xf32>
    %c0_38 = arith.constant 0 : index
    %c0_39 = arith.constant 0 : index
    %79 = vector.load %arg12[%c0_38, %c0_39] : memref<8x32xf32, #tpu.memory_space<vmem>>, vector<8x32xf32>
    %80 = arith.addf %79, %78 : vector<8x32xf32>
    %c0_40 = arith.constant 0 : index
    %c0_41 = arith.constant 0 : index
    %81 = vector.load %arg12[%c0_40, %c0_41] : memref<8x32xf32, #tpu.memory_space<vmem>>, vector<8x32xf32>
    tpu.vector_store %arg12[%c0_40, %c0_41], %80 {strides = array<i32>} : memref<8x32xf32, #tpu.memory_space<vmem>>, vector<8x32xf32>,
    %c1_i32_42 = arith.constant 1 : i32
    %82 = arith.cmpi eq, %arg2, %c1_i32_42 : i32
    %83 = arith.extui %82 : i1 to i32
    %c0_i32_43 = arith.constant 0 : i32
    %84 = arith.cmpi ne, %83, %c0_i32_43 : i32
    scf.if %84 {
      %c0_44 = arith.constant 0 : index
      %c0_45 = arith.constant 0 : index
      %85 = vector.load %arg12[%c0_44, %c0_45] : memref<8x32xf32, #tpu.memory_space<vmem>>, vector<8x32xf32>
      %c0_46 = arith.constant 0 : index
      %c0_47 = arith.constant 0 : index
      %c0_48 = arith.constant 0 : index
      %86 = vector.load %arg11[%c0_46, %c0_47, %c0_48] : memref<1x8x32xf32, #tpu.memory_space<vmem>>, vector<1x8x32xf32>
      %87 = vector.shape_cast %86 : vector<1x8x32xf32> to vector<8x32xf32>
      %88 = vector.shape_cast %85 : vector<8x32xf32> to vector<1x8x32xf32>
      tpu.vector_store %arg11[%c0_46, %c0_47, %c0_48], %88 {strides = array<i32>} : memref<1x8x32xf32, #tpu.memory_space<vmem>>, vector<1x8x32xf32>,
    } else {
    }
    return
  }
  func.func @transform_0(%arg0: i32, %arg1: i32, %arg2: i32) -> (i32, i32, i32) {
    %c0_i32 = arith.constant 0 : i32
    %c0_i32_0 = arith.constant 0 : i32
    return %arg0, %arg1, %c0_i32 : i32, i32, i32
  }
  func.func @transform_1(%arg0: i32, %arg1: i32, %arg2: i32) -> (i32, i32, i32) {
    %c0_i32 = arith.constant 0 : i32
    %c0_i32_0 = arith.constant 0 : i32
    %c0_i32_1 = arith.constant 0 : i32
    return %arg0, %c0_i32, %c0_i32_0 : i32, i32, i32
  }
  func.func @transform_2(%arg0: i32, %arg1: i32, %arg2: i32) -> (i32, i32, i32) {
    %c0_i32 = arith.constant 0 : i32
    %c0_i32_0 = arith.constant 0 : i32
    %c0_i32_1 = arith.constant 0 : i32
    return %arg0, %c0_i32, %c0_i32_0 : i32, i32, i32
  }
  func.func @transform_3(%arg0: i32, %arg1: i32, %arg2: i32) -> (i32, i32, i32, i32) {
    %c0_i32 = arith.constant 0 : i32
    %c0_i32_0 = arith.constant 0 : i32
    %c0_i32_1 = arith.constant 0 : i32
    return %arg0, %c0_i32, %arg1, %c0_i32_0 : i32, i32, i32, i32
  }
  func.func @transform_4(%arg0: i32, %arg1: i32, %arg2: i32) -> (i32, i32, i32) {
    %c0_i32 = arith.constant 0 : i32
    %c0_i32_0 = arith.constant 0 : i32
    %c0_i32_1 = arith.constant 0 : i32
    %c0_i32_2 = arith.constant 0 : i32
    return %c0_i32, %c0_i32_0, %c0_i32_1 : i32, i32, i32
  }
  func.func @transform_5(%arg0: i32, %arg1: i32, %arg2: i32) -> (i32, i32, i32) {
    %c0_i32 = arith.constant 0 : i32
    %c0_i32_0 = arith.constant 0 : i32
    %c0_i32_1 = arith.constant 0 : i32
    %c0_i32_2 = arith.constant 0 : i32
    return %c0_i32, %c0_i32_0, %c0_i32_1 : i32, i32, i32
  }
  func.func @transform_6(%arg0: i32, %arg1: i32, %arg2: i32) -> (i32, i32, i32) {
    %c0_i32 = arith.constant 0 : i32
    %c0_i32_0 = arith.constant 0 : i32
    %c0_i32_1 = arith.constant 0 : i32
    %c0_i32_2 = arith.constant 0 : i32
    return %c0_i32, %c0_i32_0, %c0_i32_1 : i32, i32, i32
  }
  func.func @transform_7(%arg0: i32, %arg1: i32, %arg2: i32) -> (i32, i32, i32) {
    %c0_i32 = arith.constant 0 : i32
    %c0_i32_0 = arith.constant 0 : i32
    %c0_i32_1 = arith.constant 0 : i32
    %c0_i32_2 = arith.constant 0 : i32
    return %c0_i32, %c0_i32_0, %c0_i32_1 : i32, i32, i32
  }
  func.func @transform_8(%arg0: i32, %arg1: i32, %arg2: i32) -> (i32, i32, i32) {
    %c0_i32 = arith.constant 0 : i32
    %c0_i32_0 = arith.constant 0 : i32
    return %arg0, %arg1, %c0_i32 : i32, i32, i32
  }
}

module attributes {stable_mosaic.version = 11 : i64} {
  func.func @_mha_kernel(%arg0: i32, %arg1: i32, %arg2: i32, %arg3: memref<1x8x32xbf16, #tpu.memory_space<vmem>>, %arg4: memref<1x16x32xbf16, #tpu.memory_space<vmem>>, %arg5: memref<1x16x32xbf16, #tpu.memory_space<vmem>>, %arg6: memref<1x1x8x16xi8, #tpu.memory_space<vmem>>, %arg7: memref<4x32x8xbf16, #tpu.memory_space<vmem>>, %arg8: memref<4x32x8xbf16, #tpu.memory_space<vmem>>, %arg9: memref<4x32x8xbf16, #tpu.memory_space<vmem>>, %arg10: memref<4x8x32xbf16, #tpu.memory_space<vmem>>, %arg11: memref<1x8x32xf32, #tpu.memory_space<vmem>>, %arg12: memref<8x32xf32, #tpu.memory_space<vmem>>, %arg13: memref<8x16xbf16, #tpu.memory_space<vmem>>, %arg14: memref<4x16x8xbf16, #tpu.memory_space<vmem>>, %arg15: memref<4x16x8xbf16, #tpu.memory_space<vmem>>) attributes {dimension_semantics = [#tpu.dimension_semantics<parallel>, #tpu.dimension_semantics<arbitrary>, #tpu.dimension_semantics<arbitrary>], iteration_bounds = array<i64: 2, 2, 2>, scalar_prefetch = 0 : i64, scratch_operands = 4 : i64, tpu.core_type = #tpu.core_type<tc>, window_params = [{transform_indices = @transform_0, window_bounds = array<i64: 1, 8, 32>}, {transform_indices = @transform_1, window_bounds = array<i64: 1, 16, 32>}, {transform_indices = @transform_2, window_bounds = array<i64: 1, 16, 32>}, {transform_indices = @transform_3, window_bounds = array<i64: 1, 1, 8, 16>}, {pipeline_mode = #tpu.pipeline_mode<synchronous>, transform_indices = @transform_4, window_bounds = array<i64: 4, 32, 8>}, {pipeline_mode = #tpu.pipeline_mode<synchronous>, transform_indices = @transform_5, window_bounds = array<i64: 4, 32, 8>}, {pipeline_mode = #tpu.pipeline_mode<synchronous>, transform_indices = @transform_6, window_bounds = array<i64: 4, 32, 8>}, {pipeline_mode = #tpu.pipeline_mode<synchronous>, transform_indices = @transform_7, window_bounds = array<i64: 4, 8, 32>}, {transform_indices = @transform_8, window_bounds = array<i64: 1, 8, 32>}]} {
    %c0_i32 = arith.constant 0 : i32
    %0 = arith.cmpi eq, %arg2, %c0_i32 : i32
    %1 = arith.extui %0 : i1 to i32
    %c0_i32_0 = arith.constant 0 : i32
    %2 = arith.cmpi ne, %1, %c0_i32_0 : i32
    scf.if %2 {
      %cst_44 = arith.constant 0.000000e+00 : f32
      %85 = vector.broadcast %cst_44 : f32 to vector<8x32xf32>
      %c0_45 = arith.constant 0 : index
      %c0_46 = arith.constant 0 : index
      %86 = vector.load %arg12[%c0_45, %c0_46] : memref<8x32xf32, #tpu.memory_space<vmem>>, vector<8x32xf32>
      tpu.vector_store %arg12[%c0_45, %c0_46], %85 {strides = array<i32>} : memref<8x32xf32, #tpu.memory_space<vmem>>, vector<8x32xf32>,
      %c0_47 = arith.constant 0 : index
      %c0_48 = arith.constant 0 : index
      %c0_49 = arith.constant 0 : index
      %c0_50 = arith.constant 0 : index
      %87 = vector.load %arg6[%c0_47, %c0_48, %c0_49, %c0_50] : memref<1x1x8x16xi8, #tpu.memory_space<vmem>>, vector<1x1x8x16xi8>
      %88 = vector.shape_cast %87 : vector<1x1x8x16xi8> to vector<8x16xi8>
      %89 = arith.sitofp %88 : vector<8x16xi8> to vector<8x16xf32>
      %cst_51 = arith.constant 1.000000e+00 : f32
      %90 = vector.broadcast %cst_51 : f32 to vector<8x16xf32>
      %91 = arith.subf %89, %90 : vector<8x16xf32>
      %cst_52 = arith.constant 1.000000e+09 : f32
      %92 = vector.broadcast %cst_52 : f32 to vector<8x16xf32>
      %93 = arith.mulf %91, %92 : vector<8x16xf32>
      %94 = arith.truncf %93 : vector<8x16xf32> to vector<8x16xbf16>
      %c0_53 = arith.constant 0 : index
      %c0_54 = arith.constant 0 : index
      %95 = vector.load %arg13[%c0_53, %c0_54] : memref<8x16xbf16, #tpu.memory_space<vmem>>, vector<8x16xbf16>
      tpu.vector_store %arg13[%c0_53, %c0_54], %94 {strides = array<i32>} : memref<8x16xbf16, #tpu.memory_space<vmem>>, vector<8x16xbf16>,
    } else {
    }
    %c0_i32_1 = arith.constant 0 : i32
    %3 = arith.cmpi eq, %arg1, %c0_i32_1 : i32
    %4 = arith.extui %3 : i1 to i32
    %c0_i32_2 = arith.constant 0 : i32
    %5 = arith.cmpi ne, %4, %c0_i32_2 : i32
    scf.if %5 {
      %c0_44 = arith.constant 0 : index
      %c0_45 = arith.constant 0 : index
      %c0_46 = arith.constant 0 : index
      %85 = vector.load %arg4[%c0_44, %c0_45, %c0_46] : memref<1x16x32xbf16, #tpu.memory_space<vmem>>, vector<1x16x32xbf16>
      %86 = vector.shape_cast %85 : vector<1x16x32xbf16> to vector<16x32xbf16>
      %c0_47 = arith.constant 0 : index
      %c0_48 = arith.constant 0 : index
      %c0_49 = arith.constant 0 : index
      %87 = vector.load %arg5[%c0_47, %c0_48, %c0_49] : memref<1x16x32xbf16, #tpu.memory_space<vmem>>, vector<1x16x32xbf16>
      %88 = vector.shape_cast %87 : vector<1x16x32xbf16> to vector<16x32xbf16>
      %c2_i32_50 = arith.constant 2 : i32
      %89 = arith.muli %arg2, %c2_i32_50 : i32
      %c0_i32_51 = arith.constant 0 : i32
      %90 = arith.addi %89, %c0_i32_51 : i32
      %91 = arith.index_cast %90 : i32 to index
      %c0_52 = arith.constant 0 : index
      %c0_53 = arith.constant 0 : index
      %92 = vector.load %arg8[%91, %c0_52, %c0_53] : memref<4x32x8xbf16, #tpu.memory_space<vmem>>, vector<1x32x8xbf16>
      %93 = vector.shape_cast %92 : vector<1x32x8xbf16> to vector<32x8xbf16>
      %cst_54 = arith.constant dense<0.000000e+00> : vector<16x8xf32>
      %94 = tpu.matmul %86, %93, %cst_54 {dimension_numbers = #tpu.dot_dimension_numbers<[1], [0], [0], [1], [0, 0, 1, 1], [], []>} : vector<16x32xbf16>, vector<32x8xbf16>, vector<16x8xf32> -> vector<16x8xf32>
      %95 = arith.truncf %94 : vector<16x8xf32> to vector<16x8xbf16>
      %96 = arith.index_cast %90 : i32 to index
      %c0_55 = arith.constant 0 : index
      %c0_56 = arith.constant 0 : index
      %97 = vector.load %arg14[%96, %c0_55, %c0_56] : memref<4x16x8xbf16, #tpu.memory_space<vmem>>, vector<1x16x8xbf16>
      %98 = vector.shape_cast %97 : vector<1x16x8xbf16> to vector<16x8xbf16>
      %99 = vector.shape_cast %95 : vector<16x8xbf16> to vector<1x16x8xbf16>
      tpu.vector_store %arg14[%96, %c0_55, %c0_56], %99 {strides = array<i32>} : memref<4x16x8xbf16, #tpu.memory_space<vmem>>, vector<1x16x8xbf16>,
      %100 = arith.index_cast %90 : i32 to index
      %c0_57 = arith.constant 0 : index
      %c0_58 = arith.constant 0 : index
      %101 = vector.load %arg9[%100, %c0_57, %c0_58] : memref<4x32x8xbf16, #tpu.memory_space<vmem>>, vector<1x32x8xbf16>
      %102 = vector.shape_cast %101 : vector<1x32x8xbf16> to vector<32x8xbf16>
      %cst_59 = arith.constant dense<0.000000e+00> : vector<16x8xf32>
      %103 = tpu.matmul %88, %102, %cst_59 {dimension_numbers = #tpu.dot_dimension_numbers<[1], [0], [0], [1], [0, 0, 1, 1], [], []>} : vector<16x32xbf16>, vector<32x8xbf16>, vector<16x8xf32> -> vector<16x8xf32>
      %104 = arith.truncf %103 : vector<16x8xf32> to vector<16x8xbf16>
      %105 = arith.index_cast %90 : i32 to index
      %c0_60 = arith.constant 0 : index
      %c0_61 = arith.constant 0 : index
      %106 = vector.load %arg15[%105, %c0_60, %c0_61] : memref<4x16x8xbf16, #tpu.memory_space<vmem>>, vector<1x16x8xbf16>
      %107 = vector.shape_cast %106 : vector<1x16x8xbf16> to vector<16x8xbf16>
      %108 = vector.shape_cast %104 : vector<16x8xbf16> to vector<1x16x8xbf16>
      tpu.vector_store %arg15[%105, %c0_60, %c0_61], %108 {strides = array<i32>} : memref<4x16x8xbf16, #tpu.memory_space<vmem>>, vector<1x16x8xbf16>,
      %c2_i32_62 = arith.constant 2 : i32
      %109 = arith.muli %arg2, %c2_i32_62 : i32
      %c1_i32_63 = arith.constant 1 : i32
      %110 = arith.addi %109, %c1_i32_63 : i32
      %111 = arith.index_cast %110 : i32 to index
      %c0_64 = arith.constant 0 : index
      %c0_65 = arith.constant 0 : index
      %112 = vector.load %arg8[%111, %c0_64, %c0_65] : memref<4x32x8xbf16, #tpu.memory_space<vmem>>, vector<1x32x8xbf16>
      %113 = vector.shape_cast %112 : vector<1x32x8xbf16> to vector<32x8xbf16>
      %cst_66 = arith.constant dense<0.000000e+00> : vector<16x8xf32>
      %114 = tpu.matmul %86, %113, %cst_66 {dimension_numbers = #tpu.dot_dimension_numbers<[1], [0], [0], [1], [0, 0, 1, 1], [], []>} : vector<16x32xbf16>, vector<32x8xbf16>, vector<16x8xf32> -> vector<16x8xf32>
      %115 = arith.truncf %114 : vector<16x8xf32> to vector<16x8xbf16>
      %116 = arith.index_cast %110 : i32 to index
      %c0_67 = arith.constant 0 : index
      %c0_68 = arith.constant 0 : index
      %117 = vector.load %arg14[%116, %c0_67, %c0_68] : memref<4x16x8xbf16, #tpu.memory_space<vmem>>, vector<1x16x8xbf16>
      %118 = vector.shape_cast %117 : vector<1x16x8xbf16> to vector<16x8xbf16>
      %119 = vector.shape_cast %115 : vector<16x8xbf16> to vector<1x16x8xbf16>
      tpu.vector_store %arg14[%116, %c0_67, %c0_68], %119 {strides = array<i32>} : memref<4x16x8xbf16, #tpu.memory_space<vmem>>, vector<1x16x8xbf16>,
      %120 = arith.index_cast %110 : i32 to index
      %c0_69 = arith.constant 0 : index
      %c0_70 = arith.constant 0 : index
      %121 = vector.load %arg9[%120, %c0_69, %c0_70] : memref<4x32x8xbf16, #tpu.memory_space<vmem>>, vector<1x32x8xbf16>
      %122 = vector.shape_cast %121 : vector<1x32x8xbf16> to vector<32x8xbf16>
      %cst_71 = arith.constant dense<0.000000e+00> : vector<16x8xf32>
      %123 = tpu.matmul %88, %122, %cst_71 {dimension_numbers = #tpu.dot_dimension_numbers<[1], [0], [0], [1], [0, 0, 1, 1], [], []>} : vector<16x32xbf16>, vector<32x8xbf16>, vector<16x8xf32> -> vector<16x8xf32>
      %124 = arith.truncf %123 : vector<16x8xf32> to vector<16x8xbf16>
      %125 = arith.index_cast %110 : i32 to index
      %c0_72 = arith.constant 0 : index
      %c0_73 = arith.constant 0 : index
      %126 = vector.load %arg15[%125, %c0_72, %c0_73] : memref<4x16x8xbf16, #tpu.memory_space<vmem>>, vector<1x16x8xbf16>
      %127 = vector.shape_cast %126 : vector<1x16x8xbf16> to vector<16x8xbf16>
      %128 = vector.shape_cast %124 : vector<16x8xbf16> to vector<1x16x8xbf16>
      tpu.vector_store %arg15[%125, %c0_72, %c0_73], %128 {strides = array<i32>} : memref<4x16x8xbf16, #tpu.memory_space<vmem>>, vector<1x16x8xbf16>,
    } else {
    }
    %c0 = arith.constant 0 : index
    %c0_3 = arith.constant 0 : index
    %c0_4 = arith.constant 0 : index
    %6 = vector.load %arg3[%c0, %c0_3, %c0_4] : memref<1x8x32xbf16, #tpu.memory_space<vmem>>, vector<1x8x32xbf16>
    %7 = vector.shape_cast %6 : vector<1x8x32xbf16> to vector<8x32xbf16>
    %c0_5 = arith.constant 0 : index
    %c0_6 = arith.constant 0 : index
    %8 = vector.load %arg13[%c0_5, %c0_6] : memref<8x16xbf16, #tpu.memory_space<vmem>>, vector<8x16xbf16>
    %9 = arith.extf %8 : vector<8x16xbf16> to vector<8x16xf32>
    %c2_i32 = arith.constant 2 : i32
    %10 = arith.muli %arg2, %c2_i32 : i32
    %c0_i32_7 = arith.constant 0 : i32
    %11 = arith.addi %10, %c0_i32_7 : i32
    %12 = arith.index_cast %11 : i32 to index
    %c0_8 = arith.constant 0 : index
    %c0_9 = arith.constant 0 : index
    %13 = vector.load %arg7[%12, %c0_8, %c0_9] : memref<4x32x8xbf16, #tpu.memory_space<vmem>>, vector<1x32x8xbf16>
    %14 = vector.shape_cast %13 : vector<1x32x8xbf16> to vector<32x8xbf16>
    %cst = arith.constant dense<0.000000e+00> : vector<8x8xf32>
    %15 = tpu.matmul %7, %14, %cst {dimension_numbers = #tpu.dot_dimension_numbers<[1], [0], [0], [1], [0, 0, 1, 1], [], []>} : vector<8x32xbf16>, vector<32x8xbf16>, vector<8x8xf32> -> vector<8x8xf32>
    %cst_10 = arith.constant 0.353553385 : f32
    %16 = vector.broadcast %cst_10 : f32 to vector<8x8xf32>
    %17 = arith.mulf %15, %16 : vector<8x8xf32>
    %18 = arith.truncf %17 : vector<8x8xf32> to vector<8x8xbf16>
    %19 = arith.index_cast %11 : i32 to index
    %c0_11 = arith.constant 0 : index
    %c0_12 = arith.constant 0 : index
    %20 = vector.load %arg14[%19, %c0_11, %c0_12] : memref<4x16x8xbf16, #tpu.memory_space<vmem>>, vector<1x16x8xbf16>
    %21 = vector.shape_cast %20 : vector<1x16x8xbf16> to vector<16x8xbf16>
    %cst_13 = arith.constant dense<0.000000e+00> : vector<8x16xf32>
    %22 = tpu.matmul %18, %21, %cst_13 {dimension_numbers = #tpu.dot_dimension_numbers<[1], [1], [0], [0], [0, 0, 1, 0], [], []>} : vector<8x8xbf16>, vector<16x8xbf16>, vector<8x16xf32> -> vector<8x16xf32>
    %23 = arith.addf %22, %9 : vector<8x16xf32>
    %cst_14 = arith.constant dense<0xFF800000> : vector<8xf32>
    %24 = vector.multi_reduction <maximumf>, %23, %cst_14 [1] : vector<8x16xf32> to vector<8xf32>
    %25 = vector.shape_cast %24 : vector<8xf32> to vector<8x1xf32>
    %26 = vector.broadcast %25 : vector<8x1xf32> to vector<8x16xf32>
    %27 = arith.subf %23, %26 : vector<8x16xf32>
    %28 = math.exp %27 : vector<8x16xf32>
    %cst_15 = arith.constant dense<0.000000e+00> : vector<8xf32>
    %29 = vector.multi_reduction <add>, %28, %cst_15 [1] : vector<8x16xf32> to vector<8xf32>
    %30 = vector.shape_cast %29 : vector<8xf32> to vector<8x1xf32>
    %31 = tpu.reciprocal %30 {approx = true} : vector<8x1xf32> -> vector<8x1xf32>
    %32 = vector.broadcast %31 : vector<8x1xf32> to vector<8x16xf32>
    %33 = arith.mulf %28, %32 : vector<8x16xf32>
    %34 = arith.truncf %33 : vector<8x16xf32> to vector<8x16xbf16>
    %35 = arith.index_cast %11 : i32 to index
    %c0_16 = arith.constant 0 : index
    %c0_17 = arith.constant 0 : index
    %36 = vector.load %arg15[%35, %c0_16, %c0_17] : memref<4x16x8xbf16, #tpu.memory_space<vmem>>, vector<1x16x8xbf16>
    %37 = vector.shape_cast %36 : vector<1x16x8xbf16> to vector<16x8xbf16>
    %cst_18 = arith.constant dense<0.000000e+00> : vector<8x8xf32>
    %38 = tpu.matmul %34, %37, %cst_18 {dimension_numbers = #tpu.dot_dimension_numbers<[1], [0], [0], [1], [0, 0, 1, 1], [], []>} : vector<8x16xbf16>, vector<16x8xbf16>, vector<8x8xf32> -> vector<8x8xf32>
    %39 = arith.truncf %38 : vector<8x8xf32> to vector<8x8xbf16>
    %40 = arith.index_cast %11 : i32 to index
    %c0_19 = arith.constant 0 : index
    %c0_20 = arith.constant 0 : index
    %41 = vector.load %arg10[%40, %c0_19, %c0_20] : memref<4x8x32xbf16, #tpu.memory_space<vmem>>, vector<1x8x32xbf16>
    %42 = vector.shape_cast %41 : vector<1x8x32xbf16> to vector<8x32xbf16>
    %cst_21 = arith.constant dense<0.000000e+00> : vector<8x32xf32>
    %43 = tpu.matmul %39, %42, %cst_21 {dimension_numbers = #tpu.dot_dimension_numbers<[1], [0], [0], [1], [0, 0, 1, 1], [], []>} : vector<8x8xbf16>, vector<8x32xbf16>, vector<8x32xf32> -> vector<8x32xf32>
    %c2_i32_22 = arith.constant 2 : i32
    %44 = arith.muli %arg2, %c2_i32_22 : i32
    %c1_i32 = arith.constant 1 : i32
    %45 = arith.addi %44, %c1_i32 : i32
    %46 = arith.index_cast %45 : i32 to index
    %c0_23 = arith.constant 0 : index
    %c0_24 = arith.constant 0 : index
    %47 = vector.load %arg7[%46, %c0_23, %c0_24] : memref<4x32x8xbf16, #tpu.memory_space<vmem>>, vector<1x32x8xbf16>
    %48 = vector.shape_cast %47 : vector<1x32x8xbf16> to vector<32x8xbf16>
    %cst_25 = arith.constant dense<0.000000e+00> : vector<8x8xf32>
    %49 = tpu.matmul %7, %48, %cst_25 {dimension_numbers = #tpu.dot_dimension_numbers<[1], [0], [0], [1], [0, 0, 1, 1], [], []>} : vector<8x32xbf16>, vector<32x8xbf16>, vector<8x8xf32> -> vector<8x8xf32>
    %cst_26 = arith.constant 0.353553385 : f32
    %50 = vector.broadcast %cst_26 : f32 to vector<8x8xf32>
    %51 = arith.mulf %49, %50 : vector<8x8xf32>
    %52 = arith.truncf %51 : vector<8x8xf32> to vector<8x8xbf16>
    %53 = arith.index_cast %45 : i32 to index
    %c0_27 = arith.constant 0 : index
    %c0_28 = arith.constant 0 : index
    %54 = vector.load %arg14[%53, %c0_27, %c0_28] : memref<4x16x8xbf16, #tpu.memory_space<vmem>>, vector<1x16x8xbf16>
    %55 = vector.shape_cast %54 : vector<1x16x8xbf16> to vector<16x8xbf16>
    %cst_29 = arith.constant dense<0.000000e+00> : vector<8x16xf32>
    %56 = tpu.matmul %52, %55, %cst_29 {dimension_numbers = #tpu.dot_dimension_numbers<[1], [1], [0], [0], [0, 0, 1, 0], [], []>} : vector<8x8xbf16>, vector<16x8xbf16>, vector<8x16xf32> -> vector<8x16xf32>
    %57 = arith.addf %56, %9 : vector<8x16xf32>
    %cst_30 = arith.constant dense<0xFF800000> : vector<8xf32>
    %58 = vector.multi_reduction <maximumf>, %57, %cst_30 [1] : vector<8x16xf32> to vector<8xf32>
    %59 = vector.shape_cast %58 : vector<8xf32> to vector<8x1xf32>
    %60 = vector.broadcast %59 : vector<8x1xf32> to vector<8x16xf32>
    %61 = arith.subf %57, %60 : vector<8x16xf32>
    %62 = math.exp %61 : vector<8x16xf32>
    %cst_31 = arith.constant dense<0.000000e+00> : vector<8xf32>
    %63 = vector.multi_reduction <add>, %62, %cst_31 [1] : vector<8x16xf32> to vector<8xf32>
    %64 = vector.shape_cast %63 : vector<8xf32> to vector<8x1xf32>
    %65 = tpu.reciprocal %64 {approx = true} : vector<8x1xf32> -> vector<8x1xf32>
    %66 = vector.broadcast %65 : vector<8x1xf32> to vector<8x16xf32>
    %67 = arith.mulf %62, %66 : vector<8x16xf32>
    %68 = arith.truncf %67 : vector<8x16xf32> to vector<8x16xbf16>
    %69 = arith.index_cast %45 : i32 to index
    %c0_32 = arith.constant 0 : index
    %c0_33 = arith.constant 0 : index
    %70 = vector.load %arg15[%69, %c0_32, %c0_33] : memref<4x16x8xbf16, #tpu.memory_space<vmem>>, vector<1x16x8xbf16>
    %71 = vector.shape_cast %70 : vector<1x16x8xbf16> to vector<16x8xbf16>
    %cst_34 = arith.constant dense<0.000000e+00> : vector<8x8xf32>
    %72 = tpu.matmul %68, %71, %cst_34 {dimension_numbers = #tpu.dot_dimension_numbers<[1], [0], [0], [1], [0, 0, 1, 1], [], []>} : vector<8x16xbf16>, vector<16x8xbf16>, vector<8x8xf32> -> vector<8x8xf32>
    %73 = arith.truncf %72 : vector<8x8xf32> to vector<8x8xbf16>
    %74 = arith.index_cast %45 : i32 to index
    %c0_35 = arith.constant 0 : index
    %c0_36 = arith.constant 0 : index
    %75 = vector.load %arg10[%74, %c0_35, %c0_36] : memref<4x8x32xbf16, #tpu.memory_space<vmem>>, vector<1x8x32xbf16>
    %76 = vector.shape_cast %75 : vector<1x8x32xbf16> to vector<8x32xbf16>
    %cst_37 = arith.constant dense<0.000000e+00> : vector<8x32xf32>
    %77 = tpu.matmul %73, %76, %cst_37 {dimension_numbers = #tpu.dot_dimension_numbers<[1], [0], [0], [1], [0, 0, 1, 1], [], []>} : vector<8x8xbf16>, vector<8x32xbf16>, vector<8x32xf32> -> vector<8x32xf32>
    %78 = arith.addf %43, %77 : vector<8x32xf32>
    %c0_38 = arith.constant 0 : index
    %c0_39 = arith.constant 0 : index
    %79 = vector.load %arg12[%c0_38, %c0_39] : memref<8x32xf32, #tpu.memory_space<vmem>>, vector<8x32xf32>
    %80 = arith.addf %79, %78 : vector<8x32xf32>
    %c0_40 = arith.constant 0 : index
    %c0_41 = arith.constant 0 : index
    %81 = vector.load %arg12[%c0_40, %c0_41] : memref<8x32xf32, #tpu.memory_space<vmem>>, vector<8x32xf32>
    tpu.vector_store %arg12[%c0_40, %c0_41], %80 {strides = array<i32>} : memref<8x32xf32, #tpu.memory_space<vmem>>, vector<8x32xf32>,
    %c1_i32_42 = arith.constant 1 : i32
    %82 = arith.cmpi eq, %arg2, %c1_i32_42 : i32
    %83 = arith.extui %82 : i1 to i32
    %c0_i32_43 = arith.constant 0 : i32
    %84 = arith.cmpi ne, %83, %c0_i32_43 : i32
    scf.if %84 {
      %c0_44 = arith.constant 0 : index
      %c0_45 = arith.constant 0 : index
      %85 = vector.load %arg12[%c0_44, %c0_45] : memref<8x32xf32, #tpu.memory_space<vmem>>, vector<8x32xf32>
      %c0_46 = arith.constant 0 : index
      %c0_47 = arith.constant 0 : index
      %c0_48 = arith.constant 0 : index
      %86 = vector.load %arg11[%c0_46, %c0_47, %c0_48] : memref<1x8x32xf32, #tpu.memory_space<vmem>>, vector<1x8x32xf32>
      %87 = vector.shape_cast %86 : vector<1x8x32xf32> to vector<8x32xf32>
      %88 = vector.shape_cast %85 : vector<8x32xf32> to vector<1x8x32xf32>
      tpu.vector_store %arg11[%c0_46, %c0_47, %c0_48], %88 {strides = array<i32>} : memref<1x8x32xf32, #tpu.memory_space<vmem>>, vector<1x8x32xf32>,
    } else {
    }
    return
  }
  func.func @transform_0(%arg0: i32, %arg1: i32, %arg2: i32) -> (i32, i32, i32) {
    %c0_i32 = arith.constant 0 : i32
    %c0_i32_0 = arith.constant 0 : i32
    return %arg0, %arg1, %c0_i32 : i32, i32, i32
  }
  func.func @transform_1(%arg0: i32, %arg1: i32, %arg2: i32) -> (i32, i32, i32) {
    %c0_i32 = arith.constant 0 : i32
    %c0_i32_0 = arith.constant 0 : i32
    %c0_i32_1 = arith.constant 0 : i32
    return %arg0, %c0_i32, %c0_i32_0 : i32, i32, i32
  }
  func.func @transform_2(%arg0: i32, %arg1: i32, %arg2: i32) -> (i32, i32, i32) {
    %c0_i32 = arith.constant 0 : i32
    %c0_i32_0 = arith.constant 0 : i32
    %c0_i32_1 = arith.constant 0 : i32
    return %arg0, %c0_i32, %c0_i32_0 : i32, i32, i32
  }
  func.func @transform_3(%arg0: i32, %arg1: i32, %arg2: i32) -> (i32, i32, i32, i32) {
    %c0_i32 = arith.constant 0 : i32
    %c0_i32_0 = arith.constant 0 : i32
    %c0_i32_1 = arith.constant 0 : i32
    return %arg0, %c0_i32, %arg1, %c0_i32_0 : i32, i32, i32, i32
  }
  func.func @transform_4(%arg0: i32, %arg1: i32, %arg2: i32) -> (i32, i32, i32) {
    %c0_i32 = arith.constant 0 : i32
    %c0_i32_0 = arith.constant 0 : i32
    %c0_i32_1 = arith.constant 0 : i32
    %c0_i32_2 = arith.constant 0 : i32
    return %c0_i32, %c0_i32_0, %c0_i32_1 : i32, i32, i32
  }
  func.func @transform_5(%arg0: i32, %arg1: i32, %arg2: i32) -> (i32, i32, i32) {
    %c0_i32 = arith.constant 0 : i32
    %c0_i32_0 = arith.constant 0 : i32
    %c0_i32_1 = arith.constant 0 : i32
    %c0_i32_2 = arith.constant 0 : i32
    return %c0_i32, %c0_i32_0, %c0_i32_1 : i32, i32, i32
  }
  func.func @transform_6(%arg0: i32, %arg1: i32, %arg2: i32) -> (i32, i32, i32) {
    %c0_i32 = arith.constant 0 : i32
    %c0_i32_0 = arith.constant 0 : i32
    %c0_i32_1 = arith.constant 0 : i32
    %c0_i32_2 = arith.constant 0 : i32
    return %c0_i32, %c0_i32_0, %c0_i32_1 : i32, i32, i32
  }
  func.func @transform_7(%arg0: i32, %arg1: i32, %arg2: i32) -> (i32, i32, i32) {
    %c0_i32 = arith.constant 0 : i32
    %c0_i32_0 = arith.constant 0 : i32
    %c0_i32_1 = arith.constant 0 : i32
    %c0_i32_2 = arith.constant 0 : i32
    return %c0_i32, %c0_i32_0, %c0_i32_1 : i32, i32, i32
  }
  func.func @transform_8(%arg0: i32, %arg1: i32, %arg2: i32) -> (i32, i32, i32) {
    %c0_i32 = arith.constant 0 : i32
    %c0_i32_0 = arith.constant 0 : i32
    return %arg0, %arg1, %c0_i32 : i32, i32, i32
  }
}

</mosaic_0001>

<llo_original>
// kernel: tpu_custom_call.1
$region0: #{tpu_custom_call.1}
  #allocation0 [shape = 'u32[]', space=smem, size = 0x4, offset = 0x4, fixed_abs, tag = 'smem constant byte address 0x4 - core index']
  #allocation1 [shape = 'u32[144,128]{1,0:T(1,128)}', space=vmem, size = 0x12000, scoped, tag = 'internal scratch']
  #allocation2 [shape = 'f32[8,32]{1,0:T(8,128)}', space=vmem, size = 0x1000, scoped, tag = 'scratch operand']
  #allocation3 [shape = 'bf16[8,16]{1,0:T(8,128)(2,1)}', space=vmem, size = 0x800, scoped, tag = 'scratch operand']
  #allocation4 [shape = 'bf16[4,16,8]{2,1,0:T(16,128)(2,1)}', space=vmem, size = 0x4000, scoped, tag = 'scratch operand']
  #allocation5 [shape = 'bf16[4,16,8]{2,1,0:T(16,128)(2,1)}', space=vmem, size = 0x4000, scoped, tag = 'scratch operand']
  %s0 = inlined_call_operand.vmem [shape: bf16[2,16,32], index: 0, kind: input, shape index: {}]
  %s1 = inlined_call_operand.vmem [shape: bf16[2,16,32], index: 1, kind: input, shape index: {}]
  %s2 = inlined_call_operand.vmem [shape: bf16[2,16,32], index: 2, kind: input, shape index: {}]
  %s3 = inlined_call_operand.vmem [shape: s8[2,1,16,16], index: 3, kind: input, shape index: {}]
  %s4 = inlined_call_operand.vmem [shape: bf16[4,32,8], index: 4, kind: input, shape index: {}]
  %s5 = inlined_call_operand.vmem [shape: bf16[4,32,8], index: 5, kind: input, shape index: {}]
  %s6 = inlined_call_operand.vmem [shape: bf16[4,32,8], index: 6, kind: input, shape index: {}]
  %s7 = inlined_call_operand.vmem [shape: bf16[4,8,32], index: 7, kind: input, shape index: {}]
  %s8 = inlined_call_operand.hbm [shape: f32[2,16,32], index: 8, kind: output, shape index: {}]
  %s9 = sld [smem:[#allocation0]]
  $region77: #{tpu_custom_call.1} parent=0
    _
  %s11 = ssub.s32 1, %s9
  %s12 = scalar_select 0, %s11, %s9
  $region1: #{tpu_custom_call.1} parent=0
    #allocation6 [shape = 'u8[8192]{0}', space=vmem, size = 0x2000, scoped, tag = 'output window, operand 0']
    #allocation7 [shape = 's32[2]{0}', space=sflag, size = 0x8, scoped, tag = 'scoped memory for tpu_custom_call.1']
    %13 = vsyncpa [#allocation7], 0
    %s14 = scalar_lea.sflag [#allocation7], 1
    %15 = vsyncpa %s14, 0
    loop: start=0, step=1, limit=10
    $region2: #{tpu_custom_call.1} parent=1 // loop_pre_header
      _
    $region3: #{tpu_custom_call.1} parent=1 // loop_header
      %s17 = sphi 0, %s21
      %p18 = scmp.ge.s32.totalorder %s17, 10
      %s24 = sphi 0, %s43
      %s25 = sphi 0, %s39
      %s26 = sphi 0, %s35
      %s27 = sphi 0, %s24
      %s28 = sphi 0, %s25
      %s29 = sphi 0, %s26
      %s30 = sphi 0, %s27
      %s31 = sphi 0, %s28
      %s32 = sphi 0, %s29
      %s48 = sphi 0, %s50
      %s51 = sphi 0, %s48
      %s52 = sphi 0, %s51
      %s68 = sphi 0, %s52
      %s74 = sphi 0, %s76
      %s77 = sphi 0, %s74
      %s78 = sphi 0, %s77
      %s94 = sphi 0, %s78
      %s100 = sphi 0, %s102
      %s103 = sphi 0, %s100
      %s104 = sphi 0, %s103
      %s120 = sphi 0, %s104
      %s128 = sphi 0, %s130
      %s131 = sphi 0, %s128
      %s132 = sphi 0, %s131
      %s148 = sphi 0, %s132
      %s152 = sphi 0, %s152
      %s154 = sphi 0, %s152
      %s155 = sphi 0, %s154
      %s169 = sphi 0, %s155
      %s173 = sphi 0, %s173
      %s175 = sphi 0, %s173
      %s176 = sphi 0, %s175
      %s190 = sphi 0, %s176
      %s194 = sphi 0, %s194
      %s196 = sphi 0, %s194
      %s197 = sphi 0, %s196
      %s211 = sphi 0, %s197
      %s215 = sphi 0, %s215
      %s217 = sphi 0, %s215
      %s218 = sphi 0, %s217
      %s232 = sphi 0, %s218
      %s240 = sphi 0, %s242
      %s243 = sphi 0, %s240
      %s244 = sphi 0, %s243
      %s260 = sphi 0, %s244
    $region4: #{tpu_custom_call.1} parent=1 // loop_header_branch
      %20 = sbr.rel (%p18) target = $region8
    $region5: #{tpu_custom_call.1} parent=1 // loop_body
      %s22 = ssub.s32 %s17, 1
      %s23 = ssub.s32 %s17, 2
      %s33 = sadd.s32 1, %s26
      %p34 = scmp.ge.s32.totalorder %s33, 2
      %s35 = scalar_select %p34, 0, %s33
      %s36 = sadd.s32 1, %s25
      %s37 = scalar_select %p34, %s36, %s25
      %p38 = scmp.ge.s32.totalorder %s37, 2
      %s39 = scalar_select %p38, 0, %s37
      %s40 = sadd.s32 1, %s24
      %s41 = scalar_select %p38, %s40, %s24
      %p42 = scmp.ge.s32.totalorder %s41, 2
      %s43 = scalar_select %p42, 0, %s41
      %s44 = ssub.s32 %s24, %s43
      %s45 = ssub.s32 %s25, %s39
      %s46 = sor.u32 %s44, %s45
      %p47 = scmp.eq.s32.totalorder %s46, 0
      %s49 = sadd.s32 %s48, 1
      %s50 = scalar_select %p47, %s48, %s49
      %p53 = pneg %p47
      %p54 = scmp.eq.s32.totalorder %s17, 7
      %p55 = por %p53, %p54
      %p56 = scmp.ne.s32.totalorder %s48, %s51
      %p57 = scmp.eq.s32.totalorder %s17, 0
      %p58 = por %p56, %p57
      %p59 = scmp.ne.s32.totalorder %s48, %s51
      %p60 = scmp.eq.s32.totalorder %s22, 7
      %p61 = por %p59, %p60
      %p62 = scmp.ne.s32.totalorder %s51, %s52
      %p63 = scmp.eq.s32.totalorder %s22, 0
      %p64 = por %p62, %p63
      %p65 = scmp.ne.s32.totalorder %s51, %s52
      %p66 = scmp.eq.s32.totalorder %s23, 7
      %p67 = por %p65, %p66
      %p69 = scmp.ne.s32.totalorder %s52, %s68
      %p70 = scmp.eq.s32.totalorder %s23, 0
      %p71 = por %p69, %p70
      %s72 = ssub.s32 %s24, %s43
      %p73 = scmp.eq.s32.totalorder %s72, 0
      %s75 = sadd.s32 %s74, 1
      %s76 = scalar_select %p73, %s74, %s75
      %p79 = pneg %p73
      %p80 = scmp.eq.s32.totalorder %s17, 7
      %p81 = por %p79, %p80
      %p82 = scmp.ne.s32.totalorder %s74, %s77
      %p83 = scmp.eq.s32.totalorder %s17, 0
      %p84 = por %p82, %p83
      %p85 = scmp.ne.s32.totalorder %s74, %s77
      %p86 = scmp.eq.s32.totalorder %s22, 7
      %p87 = por %p85, %p86
      %p88 = scmp.ne.s32.totalorder %s77, %s78
      %p89 = scmp.eq.s32.totalorder %s22, 0
      %p90 = por %p88, %p89
      %p91 = scmp.ne.s32.totalorder %s77, %s78
      %p92 = scmp.eq.s32.totalorder %s23, 7
      %p93 = por %p91, %p92
      %p95 = scmp.ne.s32.totalorder %s78, %s94
      %p96 = scmp.eq.s32.totalorder %s23, 0
      %p97 = por %p95, %p96
      %s98 = ssub.s32 %s24, %s43
      %p99 = scmp.eq.s32.totalorder %s98, 0
      %s101 = sadd.s32 %s100, 1
      %s102 = scalar_select %p99, %s100, %s101
      %p105 = pneg %p99
      %p106 = scmp.eq.s32.totalorder %s17, 7
      %p107 = por %p105, %p106
      %p108 = scmp.ne.s32.totalorder %s100, %s103
      %p109 = scmp.eq.s32.totalorder %s17, 0
      %p110 = por %p108, %p109
      %p111 = scmp.ne.s32.totalorder %s100, %s103
      %p112 = scmp.eq.s32.totalorder %s22, 7
      %p113 = por %p111, %p112
      %p114 = scmp.ne.s32.totalorder %s103, %s104
      %p115 = scmp.eq.s32.totalorder %s22, 0
      %p116 = por %p114, %p115
      %p117 = scmp.ne.s32.totalorder %s103, %s104
      %p118 = scmp.eq.s32.totalorder %s23, 7
      %p119 = por %p117, %p118
      %p121 = scmp.ne.s32.totalorder %s104, %s120
      %p122 = scmp.eq.s32.totalorder %s23, 0
      %p123 = por %p121, %p122
      %s124 = ssub.s32 %s24, %s43
      %s125 = ssub.s32 %s25, %s39
      %s126 = sor.u32 %s124, %s125
      %p127 = scmp.eq.s32.totalorder %s126, 0
      %s129 = sadd.s32 %s128, 1
      %s130 = scalar_select %p127, %s128, %s129
      %p133 = pneg %p127
      %p134 = scmp.eq.s32.totalorder %s17, 7
      %p135 = por %p133, %p134
      %p136 = scmp.ne.s32.totalorder %s128, %s131
      %p137 = scmp.eq.s32.totalorder %s17, 0
      %p138 = por %p136, %p137
      %p139 = scmp.ne.s32.totalorder %s128, %s131
      %p140 = scmp.eq.s32.totalorder %s22, 7
      %p141 = por %p139, %p140
      %p142 = scmp.ne.s32.totalorder %s131, %s132
      %p143 = scmp.eq.s32.totalorder %s22, 0
      %p144 = por %p142, %p143
      %p145 = scmp.ne.s32.totalorder %s131, %s132
      %p146 = scmp.eq.s32.totalorder %s23, 7
      %p147 = por %p145, %p146
      %p149 = scmp.ne.s32.totalorder %s132, %s148
      %p150 = scmp.eq.s32.totalorder %s23, 0
      %p151 = por %p149, %p150
      %s153 = sadd.s32 %s152, 1
      %p156 = scmp.eq.s32.totalorder %s17, 7
      %p157 = scmp.ne.s32.totalorder %s152, %s154
      %p158 = scmp.eq.s32.totalorder %s17, 0
      %p159 = por %p157, %p158
      %p160 = scmp.ne.s32.totalorder %s152, %s154
      %p161 = scmp.eq.s32.totalorder %s22, 7
      %p162 = por %p160, %p161
      %p163 = scmp.ne.s32.totalorder %s154, %s155
      %p164 = scmp.eq.s32.totalorder %s22, 0
      %p165 = por %p163, %p164
      %p166 = scmp.ne.s32.totalorder %s154, %s155
      %p167 = scmp.eq.s32.totalorder %s23, 7
      %p168 = por %p166, %p167
      %p170 = scmp.ne.s32.totalorder %s155, %s169
      %p171 = scmp.eq.s32.totalorder %s23, 0
      %p172 = por %p170, %p171
      %s174 = sadd.s32 %s173, 1
      %p177 = scmp.eq.s32.totalorder %s17, 7
      %p178 = scmp.ne.s32.totalorder %s173, %s175
      %p179 = scmp.eq.s32.totalorder %s17, 0
      %p180 = por %p178, %p179
      %p181 = scmp.ne.s32.totalorder %s173, %s175
      %p182 = scmp.eq.s32.totalorder %s22, 7
      %p183 = por %p181, %p182
      %p184 = scmp.ne.s32.totalorder %s175, %s176
      %p185 = scmp.eq.s32.totalorder %s22, 0
      %p186 = por %p184, %p185
      %p187 = scmp.ne.s32.totalorder %s175, %s176
      %p188 = scmp.eq.s32.totalorder %s23, 7
      %p189 = por %p187, %p188
      %p191 = scmp.ne.s32.totalorder %s176, %s190
      %p192 = scmp.eq.s32.totalorder %s23, 0
      %p193 = por %p191, %p192
      %s195 = sadd.s32 %s194, 1
      %p198 = scmp.eq.s32.totalorder %s17, 7
      %p199 = scmp.ne.s32.totalorder %s194, %s196
      %p200 = scmp.eq.s32.totalorder %s17, 0
      %p201 = por %p199, %p200
      %p202 = scmp.ne.s32.totalorder %s194, %s196
      %p203 = scmp.eq.s32.totalorder %s22, 7
      %p204 = por %p202, %p203
      %p205 = scmp.ne.s32.totalorder %s196, %s197
      %p206 = scmp.eq.s32.totalorder %s22, 0
      %p207 = por %p205, %p206
      %p208 = scmp.ne.s32.totalorder %s196, %s197
      %p209 = scmp.eq.s32.totalorder %s23, 7
      %p210 = por %p208, %p209
      %p212 = scmp.ne.s32.totalorder %s197, %s211
      %p213 = scmp.eq.s32.totalorder %s23, 0
      %p214 = por %p212, %p213
      %s216 = sadd.s32 %s215, 1
      %p219 = scmp.eq.s32.totalorder %s17, 7
      %p220 = scmp.ne.s32.totalorder %s215, %s217
      %p221 = scmp.eq.s32.totalorder %s17, 0
      %p222 = por %p220, %p221
      %p223 = scmp.ne.s32.totalorder %s215, %s217
      %p224 = scmp.eq.s32.totalorder %s22, 7
      %p225 = por %p223, %p224
      %p226 = scmp.ne.s32.totalorder %s217, %s218
      %p227 = scmp.eq.s32.totalorder %s22, 0
      %p228 = por %p226, %p227
      %p229 = scmp.ne.s32.totalorder %s217, %s218
      %p230 = scmp.eq.s32.totalorder %s23, 7
      %p231 = por %p229, %p230
      %p233 = scmp.ne.s32.totalorder %s218, %s232
      %p234 = scmp.eq.s32.totalorder %s23, 0
      %p235 = por %p233, %p234
      %s236 = ssub.s32 %s24, %s43
      %s237 = ssub.s32 %s25, %s39
      %s238 = sor.u32 %s236, %s237
      %p239 = scmp.eq.s32.totalorder %s238, 0
      %s241 = sadd.s32 %s240, 1
      %s242 = scalar_select %p239, %s240, %s241
      %p245 = pneg %p239
      %p246 = scmp.eq.s32.totalorder %s17, 7
      %p247 = por %p245, %p246
      %p248 = scmp.ne.s32.totalorder %s240, %s243
      %p249 = scmp.eq.s32.totalorder %s17, 0
      %p250 = por %p248, %p249
      %p251 = scmp.ne.s32.totalorder %s240, %s243
      %p252 = scmp.eq.s32.totalorder %s22, 7
      %p253 = por %p251, %p252
      %p254 = scmp.ne.s32.totalorder %s243, %s244
      %p255 = scmp.eq.s32.totalorder %s22, 0
      %p256 = por %p254, %p255
      %p257 = scmp.ne.s32.totalorder %s243, %s244
      %p258 = scmp.eq.s32.totalorder %s23, 7
      %p259 = por %p257, %p258
      %p261 = scmp.ne.s32.totalorder %s244, %s260
      %p262 = scmp.eq.s32.totalorder %s23, 0
      %p263 = por %p261, %p262
      %p264 = scmp.le.s32.totalorder 1, %s17
      %p265 = scmp.lt.s32.totalorder %s17, 9
      %p266 = pnand %p264, %p265
      %p267 = pneg %p266
      // Predicated region
      $region9: #{tpu_custom_call.1} parent=5 // pred_check
        _
      $region10: #{tpu_custom_call.1} parent=5 // pred_check_branch
        %269 = sbr.rel (%p266) target = $region12
      $region11: #{tpu_custom_call.1} parent=5 // pred_region
        %s270 = ssub.s32 %s17, 1
        // Predicated region
        $region13: #{tpu_custom_call.1} parent=11 // pred_check
          %p271 = pneg %p90
        $region14: #{tpu_custom_call.1} parent=11 // pred_check_branch
          %273 = sbr.rel (%p271) target = $region16
        $region15: #{tpu_custom_call.1} parent=11 // pred_region
          %p274 = scmp.lt.s32.totalorder %s27, 1
          %s275 = scalar_select %p274, %s27, 1
          %s276 = smul.addr %s275, 2
          %s277 = smul.addr %s276, 4
          %s278 = scalar_lea.vmem %s1, %s277
        $region16: #{tpu_custom_call.1} parent=11 // pred_fallthru
          _
        // Predicated region
        $region17: #{tpu_custom_call.1} parent=11 // pred_check
          %p279 = pneg %p116
        $region18: #{tpu_custom_call.1} parent=11 // pred_check_branch
          %281 = sbr.rel (%p279) target = $region20
        $region19: #{tpu_custom_call.1} parent=11 // pred_region
          %p282 = scmp.lt.s32.totalorder %s27, 1
          %s283 = scalar_select %p282, %s27, 1
          %s284 = smul.addr %s283, 2
          %s285 = smul.addr %s284, 4
          %s286 = scalar_lea.vmem %s2, %s285
        $region20: #{tpu_custom_call.1} parent=11 // pred_fallthru
          _
        // Predicated region
        $region21: #{tpu_custom_call.1} parent=11 // pred_check
          %p287 = pneg %p165
        $region22: #{tpu_custom_call.1} parent=11 // pred_check_branch
          %289 = sbr.rel (%p287) target = $region24
        $region23: #{tpu_custom_call.1} parent=11 // pred_region
          _
        $region24: #{tpu_custom_call.1} parent=11 // pred_fallthru
          _
        // Predicated region
        $region25: #{tpu_custom_call.1} parent=11 // pred_check
          %p290 = pneg %p186
        $region26: #{tpu_custom_call.1} parent=11 // pred_check_branch
          %292 = sbr.rel (%p290) target = $region28
        $region27: #{tpu_custom_call.1} parent=11 // pred_region
          _
        $region28: #{tpu_custom_call.1} parent=11 // pred_fallthru
          _
        // Predicated region
        $region29: #{tpu_custom_call.1} parent=11 // pred_check
          %p293 = pneg %p207
        $region30: #{tpu_custom_call.1} parent=11 // pred_check_branch
          %295 = sbr.rel (%p293) target = $region32
        $region31: #{tpu_custom_call.1} parent=11 // pred_region
          _
        $region32: #{tpu_custom_call.1} parent=11 // pred_fallthru
          _
        // Predicated region
        $region33: #{tpu_custom_call.1} parent=11 // pred_check
          %p296 = pneg %p228
        $region34: #{tpu_custom_call.1} parent=11 // pred_check_branch
          %298 = sbr.rel (%p296) target = $region36
        $region35: #{tpu_custom_call.1} parent=11 // pred_region
          _
        $region36: #{tpu_custom_call.1} parent=11 // pred_fallthru
          _
      $region12: #{tpu_custom_call.1} parent=5 // pred_fallthru
        _
      %p299 = scmp.lt.s32.totalorder %s17, 8
      // Predicated region
      $region37: #{tpu_custom_call.1} parent=5 // pred_check
        %p300 = pneg %p299
      $region38: #{tpu_custom_call.1} parent=5 // pred_check_branch
        %302 = sbr.rel (%p300) target = $region40
      $region39: #{tpu_custom_call.1} parent=5 // pred_region
        // Predicated region
        $region41: #{tpu_custom_call.1} parent=39 // pred_check
          %p303 = pneg %p58
        $region42: #{tpu_custom_call.1} parent=39 // pred_check_branch
          %305 = sbr.rel (%p303) target = $region44
        $region43: #{tpu_custom_call.1} parent=39 // pred_region
          %p306 = scmp.lt.s32.totalorder %s24, 1
          %s307 = scalar_select %p306, %s24, 1
          %p308 = scmp.lt.s32.totalorder %s25, 1
          %s309 = scalar_select %p308, %s25, 1
          %s310 = smul.addr %s307, 2
          %s311 = sadd.s32 %s309, %s310
          %s312 = smul.addr %s311, 4
          %s313 = scalar_lea.vmem %s0, %s312
        $region44: #{tpu_custom_call.1} parent=39 // pred_fallthru
          _
        // Predicated region
        $region45: #{tpu_custom_call.1} parent=39 // pred_check
          %p314 = pneg %p138
        $region46: #{tpu_custom_call.1} parent=39 // pred_check_branch
          %316 = sbr.rel (%p314) target = $region48
        $region47: #{tpu_custom_call.1} parent=39 // pred_region
          %p317 = scmp.lt.s32.totalorder %s24, 1
          %s318 = scalar_select %p317, %s24, 1
          %p319 = scmp.lt.s32.totalorder %s25, 1
          %s320 = scalar_select %p319, %s25, 1
          %s321 = smul.addr %s318, 2
          %s322 = sadd.s32 %s320, %s321
          %s323 = smul.addr %s322, 2
          %s324 = scalar_lea.vmem %s3, %s323
        $region48: #{tpu_custom_call.1} parent=39 // pred_fallthru
          _
      $region40: #{tpu_custom_call.1} parent=5 // pred_fallthru
        _
      %p325 = scmp.le.s32.totalorder 1, %s17
      %p326 = scmp.lt.s32.totalorder %s17, 9
      %p327 = pnand %p325, %p326
      %p328 = pneg %p327
      // Predicated region
      $region49: #{tpu_custom_call.1} parent=5 // pred_check
        _
      $region50: #{tpu_custom_call.1} parent=5 // pred_check_branch
        %330 = sbr.rel (%p327) target = $region52
      $region51: #{tpu_custom_call.1} parent=5 // pred_region
        %s331 = ssub.s32 %s17, 1
        %p332 = scmp.lt.s32.totalorder %s27, 1
        %s333 = scalar_select %p332, %s27, 1
        %p334 = scmp.lt.s32.totalorder %s28, 1
        %s335 = scalar_select %p334, %s28, 1
        %s336 = smul.addr %s333, 2
        %s337 = sadd.s32 %s335, %s336
        %s338 = smul.addr %s337, 4
        %s339 = scalar_lea.vmem %s0, %s338
        %p340 = pneg %p64
        %p341 = pneg %p61
        %p342 = scmp.lt.s32.totalorder %s27, 1
        %s343 = scalar_select %p342, %s27, 1
        %s344 = smul.addr %s343, 2
        %s345 = smul.addr %s344, 4
        %s346 = scalar_lea.vmem %s1, %s345
        %p347 = pneg %p90
        %p348 = pneg %p87
        %p349 = scmp.lt.s32.totalorder %s27, 1
        %s350 = scalar_select %p349, %s27, 1
        %s351 = smul.addr %s350, 2
        %s352 = smul.addr %s351, 4
        %s353 = scalar_lea.vmem %s2, %s352
        %p354 = pneg %p116
        %p355 = pneg %p113
        %p356 = scmp.lt.s32.totalorder %s27, 1
        %s357 = scalar_select %p356, %s27, 1
        %p358 = scmp.lt.s32.totalorder %s28, 1
        %s359 = scalar_select %p358, %s28, 1
        %s360 = smul.addr %s357, 2
        %s361 = sadd.s32 %s359, %s360
        %s362 = smul.addr %s361, 2
        %s363 = scalar_lea.vmem %s3, %s362
        %p364 = pneg %p144
        %p365 = pneg %p141
        %p366 = pneg %p165
        %p367 = pneg %p162
        %p368 = pneg %p186
        %p369 = pneg %p183
        %p370 = pneg %p207
        %p371 = pneg %p204
        %p372 = pneg %p228
        %p373 = pneg %p225
        %p374 = pneg %p256
        %p375 = pneg %p253
        %s376 = sand.u32 %s243, 1
        %s377 = scalar_lea.sflag [#allocation7], %s376
        %s378 = sand.u32 %s243, 1
        %s379 = smul.addr %s378, 8
        %s380 = scalar_lea.vmem [#allocation6], %s379
        %p381 = scmp.lt.s32.totalorder %s27, 1
        %s382 = scalar_select %p381, %s27, 1
        %p383 = scmp.lt.s32.totalorder %s28, 1
        %s384 = scalar_select %p383, %s28, 1
        %s385 = smul.addr %s382, 2
        %s386 = sadd.s32 %s384, %s385
        %s387 = smul.addr %s386, 4
        %s388 = scalar_lea.vmem %s0, %s387
        %p389 = scmp.lt.s32.totalorder %s27, 1
        %s390 = scalar_select %p389, %s27, 1
        %s391 = smul.addr %s390, 2
        %s392 = smul.addr %s391, 4
        %s393 = scalar_lea.vmem %s1, %s392
        %p394 = scmp.lt.s32.totalorder %s27, 1
        %s395 = scalar_select %p394, %s27, 1
        %s396 = smul.addr %s395, 2
        %s397 = smul.addr %s396, 4
        %s398 = scalar_lea.vmem %s2, %s397
        %p399 = scmp.lt.s32.totalorder %s27, 1
        %s400 = scalar_select %p399, %s27, 1
        %p401 = scmp.lt.s32.totalorder %s28, 1
        %s402 = scalar_select %p401, %s28, 1
        %s403 = smul.addr %s400, 2
        %s404 = sadd.s32 %s402, %s403
        %s405 = smul.addr %s404, 2
        %s406 = scalar_lea.vmem %s3, %s405
        %p408 = scmp.eq.s32.totalorder %s29, 0
        // Predicated region
        $region53: #{tpu_custom_call.1} parent=51 // pred_check
          %p409 = pneg %p408
        $region54: #{tpu_custom_call.1} parent=51 // pred_check_branch
          %411 = sbr.rel (%p409) target = $region56
        $region55: #{tpu_custom_call.1} parent=51 // pred_region
          %vm412 = vcmask 261120
          %413 = vst.msk [vmem:[#allocation2] sm:$0xff] %vm412, 0.0
          %v414 = vld [vmem:[%s406] sm:$0x3]
          %v415 = vunpack.c.0.s8 %v414
          %v416 = vcvt.s32.f32 %v415
          %v417 = vsub.f32 %v416, 1.0
          %v418 = vmul.f32 %v417, 1e+09
          %v419 = vpack.c.bf16 %v418, %v418
          %vm420 = vcmask 125952
          %421 = vst.msk [vmem:[#allocation3] sm:$0xf] %vm420, %v419
        $region56: #{tpu_custom_call.1} parent=51 // pred_fallthru
          _
        %p422 = scmp.eq.s32.totalorder %s28, 0
        // Predicated region
        $region57: #{tpu_custom_call.1} parent=51 // pred_check
          %p423 = pneg %p422
        $region58: #{tpu_custom_call.1} parent=51 // pred_check_branch
          %425 = sbr.rel (%p423) target = $region60
        $region59: #{tpu_custom_call.1} parent=51 // pred_region
          %v426 = vld [vmem:[%s393] sm:$0xf]
          %v427 = vld [vmem:[%s393 + $0x4] sm:$0xf]
          %v428 = vld [vmem:[%s398] sm:$0xf]
          %v429 = vld [vmem:[%s398 + $0x4] sm:$0xf]
          %s430 = smul.u32 %s29, 2
          %s431 = smul.u32 %s430, 4
          %s432 = smul.addr %s431, 4
          %s433 = scalar_lea.vmem %s5, %s432
          %v434 = vld [vmem:[%s433] sm:$0xf]
          %v435 = vld [vmem:[%s433 + $0x4] sm:$0xf]
          %v436 = vld [vmem:[%s433 + $0x8] sm:$0xf]
          %v437 = vld [vmem:[%s433 + $0xc] sm:$0xf]
          %v440 = vunpack.c.l.b16 %v426
          %v441 = vunpack.c.l.b16 %v427
          %v442 = vpack.c.b16 %v441, %v440
          %v447 = vunpack.c.l.b16 %v434
          %v448 = vunpack.c.l.b16 %v435
          %v449 = vunpack.c.l.b16 %v436
          %v450 = vunpack.c.l.b16 %v437
          %v451 = vpack.c.b16 %v448, %v447
          %v452 = vpack.c.b16 %v450, %v449
          %vm455 = vcmask 261120
          %v457 = vsel %vm455, %v442, 0
          %459 = vmatprep.subr.bf16.mxu0 0
          %460 = vmatpush1.bf16.msra.mxu0 %v451
          %461 = vmatprep.subr.bf16.mxu0 0
          %462 = vmatpush1.bf16.msra.mxu0 %v452
          %463 = vmatprep.subr.bf16.mxu0 0
          %464 = vmatpush1.bf16.msra.mxu0 0
          %465 = vmatprep.subr.bf16.mxu0 0
          %466 = vmatpush1.bf16.msra.mxu0 0
          %467 = vmatprep.subr.bf16.mxu0 0
          %468 = vmatpush1.bf16.msra.mxu0 0
          %469 = vmatprep.subr.bf16.mxu0 0
          %470 = vmatpush1.bf16.msra.mxu0 0
          %471 = vmatprep.subr.bf16.mxu0 0
          %472 = vmatpush1.bf16.msra.mxu0 0
          %473 = vmatprep.subr.bf16.mxu0 0
          %474 = vmatpush1.bf16.msra.mxu0 0
          %475 = vmatprep.subr.bf16.mxu0 0
          %476 = vmatpush1.bf16.msra.mxu0 0
          %477 = vmatprep.subr.bf16.mxu0 0
          %478 = vmatpush1.bf16.msra.mxu0 0
          %479 = vmatprep.subr.bf16.mxu0 0
          %480 = vmatpush1.bf16.msra.mxu0 0
          %481 = vmatprep.subr.bf16.mxu0 0
          %482 = vmatpush1.bf16.msra.mxu0 0
          %483 = vmatprep.subr.bf16.mxu0 0
          %484 = vmatpush1.bf16.msra.mxu0 0
          %485 = vmatprep.subr.bf16.mxu0 0
          %486 = vmatpush1.bf16.msra.mxu0 0
          %487 = vmatprep.subr.bf16.mxu0 0
          %488 = vmatpush1.bf16.msra.mxu0 0
          %489 = vmatprep.subr.bf16.mxu0 0
          %490 = vmatpush1.bf16.msra.mxu0 0
          %491 = vmatprep.mubr.bf16.mxu0 0
          %492 = vmatmul.mubr.bf16.gmra.mrb[0].mxu0 %v457
          %v493 = vpop.f32.mrb[0].mxu0
          %v494 = vadd.f32 0.0, %v493
          %v495 = vpop.f32.mrb[0].mxu0
          %v496 = vpop.f32.mrb[0].mxu0
          %v497 = vadd.f32 0.0, %v496
          %v498 = vpop.f32.mrb[0].mxu0
          %499 = vdwg.mxu0
          %v500 = vpack.c.bf16 %v497, %v494
          %s501 = smul.addr %s430, 8
          %s502 = scalar_lea.vmem [#allocation4], %s501
          %vm503 = vcmask 64512
          %504 = vst.msk [vmem:[%s502] sm:$0xff] %vm503, %v500
          %s505 = smul.addr %s431, 4
          %s506 = scalar_lea.vmem %s6, %s505
          %v507 = vld [vmem:[%s506] sm:$0xf]
          %v508 = vld [vmem:[%s506 + $0x4] sm:$0xf]
          %v509 = vld [vmem:[%s506 + $0x8] sm:$0xf]
          %v510 = vld [vmem:[%s506 + $0xc] sm:$0xf]
          %v513 = vunpack.c.l.b16 %v428
          %v514 = vunpack.c.l.b16 %v429
          %v515 = vpack.c.b16 %v514, %v513
          %v520 = vunpack.c.l.b16 %v507
          %v521 = vunpack.c.l.b16 %v508
          %v522 = vunpack.c.l.b16 %v509
          %v523 = vunpack.c.l.b16 %v510
          %v524 = vpack.c.b16 %v521, %v520
          %v525 = vpack.c.b16 %v523, %v522
          %v529 = vsel %vm455, %v515, 0
          %531 = vmatprep.subr.bf16.mxu0 0
          %532 = vmatpush1.bf16.msra.mxu0 %v524
          %533 = vmatprep.subr.bf16.mxu0 0
          %534 = vmatpush1.bf16.msra.mxu0 %v525
          %535 = vmatprep.subr.bf16.mxu0 0
          %536 = vmatpush1.bf16.msra.mxu0 0
          %537 = vmatprep.subr.bf16.mxu0 0
          %538 = vmatpush1.bf16.msra.mxu0 0
          %539 = vmatprep.subr.bf16.mxu0 0
          %540 = vmatpush1.bf16.msra.mxu0 0
          %541 = vmatprep.subr.bf16.mxu0 0
          %542 = vmatpush1.bf16.msra.mxu0 0
          %543 = vmatprep.subr.bf16.mxu0 0
          %544 = vmatpush1.bf16.msra.mxu0 0
          %545 = vmatprep.subr.bf16.mxu0 0
          %546 = vmatpush1.bf16.msra.mxu0 0
          %547 = vmatprep.subr.bf16.mxu0 0
          %548 = vmatpush1.bf16.msra.mxu0 0
          %549 = vmatprep.subr.bf16.mxu0 0
          %550 = vmatpush1.bf16.msra.mxu0 0
          %551 = vmatprep.subr.bf16.mxu0 0
          %552 = vmatpush1.bf16.msra.mxu0 0
          %553 = vmatprep.subr.bf16.mxu0 0
          %554 = vmatpush1.bf16.msra.mxu0 0
          %555 = vmatprep.subr.bf16.mxu0 0
          %556 = vmatpush1.bf16.msra.mxu0 0
          %557 = vmatprep.subr.bf16.mxu0 0
          %558 = vmatpush1.bf16.msra.mxu0 0
          %559 = vmatprep.subr.bf16.mxu0 0
          %560 = vmatpush1.bf16.msra.mxu0 0
          %561 = vmatprep.subr.bf16.mxu0 0
          %562 = vmatpush1.bf16.msra.mxu0 0
          %563 = vmatprep.mubr.bf16.mxu0 0
          %564 = vmatmul.mubr.bf16.gmra.mrb[0].mxu0 %v529
          %v565 = vpop.f32.mrb[0].mxu0
          %v566 = vadd.f32 0.0, %v565
          %v567 = vpop.f32.mrb[0].mxu0
          %v568 = vpop.f32.mrb[0].mxu0
          %v569 = vadd.f32 0.0, %v568
          %v570 = vpop.f32.mrb[0].mxu0
          %571 = vdwg.mxu0
          %v572 = vpack.c.bf16 %v569, %v566
          %s573 = smul.addr %s430, 8
          %s574 = scalar_lea.vmem [#allocation5], %s573
          %575 = vst.msk [vmem:[%s574] sm:$0xff] %vm503, %v572
          %s576 = sadd.s32 %s430, 1
          %s577 = smul.u32 %s576, 4
          %s578 = smul.addr %s577, 4
          %s579 = scalar_lea.vmem %s5, %s578
          %v580 = vld [vmem:[%s579] sm:$0xf]
          %v581 = vld [vmem:[%s579 + $0x4] sm:$0xf]
          %v582 = vld [vmem:[%s579 + $0x8] sm:$0xf]
          %v583 = vld [vmem:[%s579 + $0xc] sm:$0xf]
          %v588 = vunpack.c.l.b16 %v580
          %v589 = vunpack.c.l.b16 %v581
          %v590 = vunpack.c.l.b16 %v582
          %v591 = vunpack.c.l.b16 %v583
          %v592 = vpack.c.b16 %v589, %v588
          %v593 = vpack.c.b16 %v591, %v590
          %596 = vmatprep.subr.bf16.mxu0 0
          %597 = vmatpush1.bf16.msra.mxu0 %v592
          %598 = vmatprep.subr.bf16.mxu0 0
          %599 = vmatpush1.bf16.msra.mxu0 %v593
          %600 = vmatprep.subr.bf16.mxu0 0
          %601 = vmatpush1.bf16.msra.mxu0 0
          %602 = vmatprep.subr.bf16.mxu0 0
          %603 = vmatpush1.bf16.msra.mxu0 0
          %604 = vmatprep.subr.bf16.mxu0 0
          %605 = vmatpush1.bf16.msra.mxu0 0
          %606 = vmatprep.subr.bf16.mxu0 0
          %607 = vmatpush1.bf16.msra.mxu0 0
          %608 = vmatprep.subr.bf16.mxu0 0
          %609 = vmatpush1.bf16.msra.mxu0 0
          %610 = vmatprep.subr.bf16.mxu0 0
          %611 = vmatpush1.bf16.msra.mxu0 0
          %612 = vmatprep.subr.bf16.mxu0 0
          %613 = vmatpush1.bf16.msra.mxu0 0
          %614 = vmatprep.subr.bf16.mxu0 0
          %615 = vmatpush1.bf16.msra.mxu0 0
          %616 = vmatprep.subr.bf16.mxu0 0
          %617 = vmatpush1.bf16.msra.mxu0 0
          %618 = vmatprep.subr.bf16.mxu0 0
          %619 = vmatpush1.bf16.msra.mxu0 0
          %620 = vmatprep.subr.bf16.mxu0 0
          %621 = vmatpush1.bf16.msra.mxu0 0
          %622 = vmatprep.subr.bf16.mxu0 0
          %623 = vmatpush1.bf16.msra.mxu0 0
          %624 = vmatprep.subr.bf16.mxu0 0
          %625 = vmatpush1.bf16.msra.mxu0 0
          %626 = vmatprep.subr.bf16.mxu0 0
          %627 = vmatpush1.bf16.msra.mxu0 0
          %628 = vmatprep.mubr.bf16.mxu0 0
          %629 = vmatmul.mubr.bf16.gmra.mrb[0].mxu0 %v457
          %v630 = vpop.f32.mrb[0].mxu0
          %v631 = vadd.f32 0.0, %v630
          %v632 = vpop.f32.mrb[0].mxu0
          %v633 = vpop.f32.mrb[0].mxu0
          %v634 = vadd.f32 0.0, %v633
          %v635 = vpop.f32.mrb[0].mxu0
          %636 = vdwg.mxu0
          %v637 = vpack.c.bf16 %v634, %v631
          %s638 = smul.addr %s576, 8
          %s639 = scalar_lea.vmem [#allocation4], %s638
          %640 = vst.msk [vmem:[%s639] sm:$0xff] %vm503, %v637
          %s641 = smul.addr %s577, 4
          %s642 = scalar_lea.vmem %s6, %s641
          %v643 = vld [vmem:[%s642] sm:$0xf]
          %v644 = vld [vmem:[%s642 + $0x4] sm:$0xf]
          %v645 = vld [vmem:[%s642 + $0x8] sm:$0xf]
          %v646 = vld [vmem:[%s642 + $0xc] sm:$0xf]
          %v651 = vunpack.c.l.b16 %v643
          %v652 = vunpack.c.l.b16 %v644
          %v653 = vunpack.c.l.b16 %v645
          %v654 = vunpack.c.l.b16 %v646
          %v655 = vpack.c.b16 %v652, %v651
          %v656 = vpack.c.b16 %v654, %v653
          %659 = vmatprep.subr.bf16.mxu0 0
          %660 = vmatpush1.bf16.msra.mxu0 %v655
          %661 = vmatprep.subr.bf16.mxu0 0
          %662 = vmatpush1.bf16.msra.mxu0 %v656
          %663 = vmatprep.subr.bf16.mxu0 0
          %664 = vmatpush1.bf16.msra.mxu0 0
          %665 = vmatprep.subr.bf16.mxu0 0
          %666 = vmatpush1.bf16.msra.mxu0 0
          %667 = vmatprep.subr.bf16.mxu0 0
          %668 = vmatpush1.bf16.msra.mxu0 0
          %669 = vmatprep.subr.bf16.mxu0 0
          %670 = vmatpush1.bf16.msra.mxu0 0
          %671 = vmatprep.subr.bf16.mxu0 0
          %672 = vmatpush1.bf16.msra.mxu0 0
          %673 = vmatprep.subr.bf16.mxu0 0
          %674 = vmatpush1.bf16.msra.mxu0 0
          %675 = vmatprep.subr.bf16.mxu0 0
          %676 = vmatpush1.bf16.msra.mxu0 0
          %677 = vmatprep.subr.bf16.mxu0 0
          %678 = vmatpush1.bf16.msra.mxu0 0
          %679 = vmatprep.subr.bf16.mxu0 0
          %680 = vmatpush1.bf16.msra.mxu0 0
          %681 = vmatprep.subr.bf16.mxu0 0
          %682 = vmatpush1.bf16.msra.mxu0 0
          %683 = vmatprep.subr.bf16.mxu0 0
          %684 = vmatpush1.bf16.msra.mxu0 0
          %685 = vmatprep.subr.bf16.mxu0 0
          %686 = vmatpush1.bf16.msra.mxu0 0
          %687 = vmatprep.subr.bf16.mxu0 0
          %688 = vmatpush1.bf16.msra.mxu0 0
          %689 = vmatprep.subr.bf16.mxu0 0
          %690 = vmatpush1.bf16.msra.mxu0 0
          %691 = vmatprep.mubr.bf16.mxu0 0
          %692 = vmatmul.mubr.bf16.gmra.mrb[0].mxu0 %v529
          %v693 = vpop.f32.mrb[0].mxu0
          %v694 = vadd.f32 0.0, %v693
          %v695 = vpop.f32.mrb[0].mxu0
          %v696 = vpop.f32.mrb[0].mxu0
          %v697 = vadd.f32 0.0, %v696
          %v698 = vpop.f32.mrb[0].mxu0
          %699 = vdwg.mxu0
          %v700 = vpack.c.bf16 %v697, %v694
          %s701 = smul.addr %s576, 8
          %s702 = scalar_lea.vmem [#allocation5], %s701
          %703 = vst.msk [vmem:[%s702] sm:$0xff] %vm503, %v700
        $region60: #{tpu_custom_call.1} parent=51 // pred_fallthru
          _
        %v704 = vld [vmem:[%s388] sm:$0xf]
        %v705 = vld [vmem:[#allocation3] sm:$0xf]
        %v706 = vunpack.c.l.bf16 %v705
        %s707 = smul.u32 %s29, 2
        %s708 = smul.u32 %s707, 4
        %s709 = smul.addr %s708, 4
        %s710 = scalar_lea.vmem %s4, %s709
        %v711 = vld [vmem:[%s710] sm:$0xf]
        %v712 = vld [vmem:[%s710 + $0x4] sm:$0xf]
        %v713 = vld [vmem:[%s710 + $0x8] sm:$0xf]
        %v714 = vld [vmem:[%s710 + $0xc] sm:$0xf]
        %v719 = vunpack.c.l.b16 %v711
        %v720 = vunpack.c.l.b16 %v712
        %v721 = vunpack.c.l.b16 %v713
        %v722 = vunpack.c.l.b16 %v714
        %v723 = vpack.c.b16 %v720, %v719
        %v724 = vpack.c.b16 %v722, %v721
        %vm727 = vcmask 261120
        %v729 = vsel %vm727, %v704, 0
        %731 = vmatprep.subr.bf16.mxu0 0
        %732 = vmatpush1.bf16.msra.mxu0 %v723
        %733 = vmatprep.subr.bf16.mxu0 0
        %734 = vmatpush1.bf16.msra.mxu0 %v724
        %735 = vmatprep.subr.bf16.mxu0 0
        %736 = vmatpush1.bf16.msra.mxu0 0
        %737 = vmatprep.subr.bf16.mxu0 0
        %738 = vmatpush1.bf16.msra.mxu0 0
        %739 = vmatprep.subr.bf16.mxu0 0
        %740 = vmatpush1.bf16.msra.mxu0 0
        %741 = vmatprep.subr.bf16.mxu0 0
        %742 = vmatpush1.bf16.msra.mxu0 0
        %743 = vmatprep.subr.bf16.mxu0 0
        %744 = vmatpush1.bf16.msra.mxu0 0
        %745 = vmatprep.subr.bf16.mxu0 0
        %746 = vmatpush1.bf16.msra.mxu0 0
        %747 = vmatprep.subr.bf16.mxu0 0
        %748 = vmatpush1.bf16.msra.mxu0 0
        %749 = vmatprep.subr.bf16.mxu0 0
        %750 = vmatpush1.bf16.msra.mxu0 0
        %751 = vmatprep.subr.bf16.mxu0 0
        %752 = vmatpush1.bf16.msra.mxu0 0
        %753 = vmatprep.subr.bf16.mxu0 0
        %754 = vmatpush1.bf16.msra.mxu0 0
        %755 = vmatprep.subr.bf16.mxu0 0
        %756 = vmatpush1.bf16.msra.mxu0 0
        %757 = vmatprep.subr.bf16.mxu0 0
        %758 = vmatpush1.bf16.msra.mxu0 0
        %759 = vmatprep.subr.bf16.mxu0 0
        %760 = vmatpush1.bf16.msra.mxu0 0
        %761 = vmatprep.subr.bf16.mxu0 0
        %762 = vmatpush1.bf16.msra.mxu0 0
        %763 = vmatprep.mubr.bf16.mxu0 0
        %764 = vmatmul.mubr.bf16.gmra.mrb[0].mxu0 %v729
        %v765 = vpop.f32.mrb[0].mxu0
        %v766 = vadd.f32 0.0, %v765
        %v767 = vpop.f32.mrb[0].mxu0
        %v768 = vpop.f32.mrb[0].mxu0
        %v769 = vpop.f32.mrb[0].mxu0
        %770 = vdwg.mxu0
        %v771 = vmul.f32 %v766, 0.35355338
        %v772 = vpack.c.bf16 %v771, %v771
        %s773 = smul.addr %s707, 8
        %s774 = scalar_lea.vmem [#allocation4], %s773
        %v775 = vld [vmem:[%s774] sm:$0xff]
        %vm776 = vcmask 64512
        %v778 = vsel %vm776, %v772, 0
        %v781 = vsel %vm776, %v775, 0
        %783 = vmatprep.subr.bf16.mxu0 0
        %784 = vmatpush1.bf16.xpose.msra.mxu0 %v781
        %785 = vmatprep.subr.bf16.mxu0 0
        %786 = vmatpush1.bf16.xpose.msra.mxu0 0
        %787 = vmatprep.subr.bf16.mxu0 0
        %788 = vmatpush1.bf16.xpose.msra.mxu0 0
        %789 = vmatprep.subr.bf16.mxu0 0
        %790 = vmatpush1.bf16.xpose.msra.mxu0 0
        %791 = vmatprep.subr.bf16.mxu0 0
        %792 = vmatpush1.bf16.xpose.msra.mxu0 0
        %793 = vmatprep.subr.bf16.mxu0 0
        %794 = vmatpush1.bf16.xpose.msra.mxu0 0
        %795 = vmatprep.subr.bf16.mxu0 0
        %796 = vmatpush1.bf16.xpose.msra.mxu0 0
        %797 = vmatprep.subr.bf16.mxu0 0
        %798 = vmatpush1.bf16.xpose.msra.mxu0 0
        %799 = vmatprep.subr.bf16.mxu0 0
        %800 = vmatpush1.bf16.xpose.msra.mxu0 0
        %801 = vmatprep.subr.bf16.mxu0 0
        %802 = vmatpush1.bf16.xpose.msra.mxu0 0
        %803 = vmatprep.subr.bf16.mxu0 0
        %804 = vmatpush1.bf16.xpose.msra.mxu0 0
        %805 = vmatprep.subr.bf16.mxu0 0
        %806 = vmatpush1.bf16.xpose.msra.mxu0 0
        %807 = vmatprep.subr.bf16.mxu0 0
        %808 = vmatpush1.bf16.xpose.msra.mxu0 0
        %809 = vmatprep.subr.bf16.mxu0 0
        %810 = vmatpush1.bf16.xpose.msra.mxu0 0
        %811 = vmatprep.subr.bf16.mxu0 0
        %812 = vmatpush1.bf16.xpose.msra.mxu0 0
        %813 = vmatprep.subr.bf16.mxu0 0
        %814 = vmatpush1.bf16.xpose.msra.mxu0 0
        %815 = vmatprep.mubr.bf16.mxu0 0
        %816 = vmatmul.mubr.bf16.gmra.mrb[0].mxu0 %v778
        %v817 = vpop.f32.mrb[0].mxu0
        %v818 = vadd.f32 %v706, %v817
        %v819 = vpop.f32.mrb[0].mxu0
        %v820 = vpop.f32.mrb[0].mxu0
        %v821 = vpop.f32.mrb[0].mxu0
        %822 = vdwg.mxu0
        %vm823 = vcmask 130048
        %v824 = vsel %vm823, %v818, -inf
        %825 = vmax.xlane.f32.xlu0 %v824
        %v826 = vpop.xlane.xlu0 %825
        %v827 = vsub.f32 %v818, %v826
        %v828 = vmul.f32 %v827, 1.442695
        %v829 = vpow.pop %v828
        %v830 = vsel %vm823, %v829, 0.0
        %831 = vadd.xlane.f32.xlu0 %v830
        %v832 = vpop.xlane.xlu0 %831
        %v833 = vrcp.pop %v832
        %v834 = vmul.f32 %v829, %v833
        %v835 = vpack.c.bf16 %v834, %v834
        %s836 = smul.addr %s707, 8
        %s837 = scalar_lea.vmem [#allocation5], %s836
        %v838 = vld [vmem:[%s837] sm:$0xff]
        %v840 = vsel %vm823, %v835, 0
        %842 = vmatprep.subr.bf16.mxu0 0
        %843 = vmatpush1.bf16.msra.mxu0 %v838
        %844 = vmatprep.subr.bf16.mxu0 0
        %845 = vmatpush1.bf16.msra.mxu0 0
        %846 = vmatprep.subr.bf16.mxu0 0
        %847 = vmatpush1.bf16.msra.mxu0 0
        %848 = vmatprep.subr.bf16.mxu0 0
        %849 = vmatpush1.bf16.msra.mxu0 0
        %850 = vmatprep.subr.bf16.mxu0 0
        %851 = vmatpush1.bf16.msra.mxu0 0
        %852 = vmatprep.subr.bf16.mxu0 0
        %853 = vmatpush1.bf16.msra.mxu0 0
        %854 = vmatprep.subr.bf16.mxu0 0
        %855 = vmatpush1.bf16.msra.mxu0 0
        %856 = vmatprep.subr.bf16.mxu0 0
        %857 = vmatpush1.bf16.msra.mxu0 0
        %858 = vmatprep.subr.bf16.mxu0 0
        %859 = vmatpush1.bf16.msra.mxu0 0
        %860 = vmatprep.subr.bf16.mxu0 0
        %861 = vmatpush1.bf16.msra.mxu0 0
        %862 = vmatprep.subr.bf16.mxu0 0
        %863 = vmatpush1.bf16.msra.mxu0 0
        %864 = vmatprep.subr.bf16.mxu0 0
        %865 = vmatpush1.bf16.msra.mxu0 0
        %866 = vmatprep.subr.bf16.mxu0 0
        %867 = vmatpush1.bf16.msra.mxu0 0
        %868 = vmatprep.subr.bf16.mxu0 0
        %869 = vmatpush1.bf16.msra.mxu0 0
        %870 = vmatprep.subr.bf16.mxu0 0
        %871 = vmatpush1.bf16.msra.mxu0 0
        %872 = vmatprep.subr.bf16.mxu0 0
        %873 = vmatpush1.bf16.msra.mxu0 0
        %874 = vmatprep.mubr.bf16.mxu0 0
        %875 = vmatmul.mubr.bf16.gmra.mrb[0].mxu0 %v840
        %v876 = vpop.f32.mrb[0].mxu0
        %v877 = vadd.f32 0.0, %v876
        %v878 = vpop.f32.mrb[0].mxu0
        %v879 = vpop.f32.mrb[0].mxu0
        %v880 = vpop.f32.mrb[0].mxu0
        %881 = vdwg.mxu0
        %v882 = vpack.c.bf16 %v877, %v877
        %s883 = smul.addr %s707, 4
        %s884 = scalar_lea.vmem %s7, %s883
        %v885 = vld [vmem:[%s884] sm:$0xf]
        %s886 = sadd.s32 %s707, 1
        %s887 = smul.u32 %s886, 4
        %s888 = smul.addr %s887, 4
        %s889 = scalar_lea.vmem %s4, %s888
        %v890 = vld [vmem:[%s889] sm:$0xf]
        %v891 = vld [vmem:[%s889 + $0x4] sm:$0xf]
        %v892 = vld [vmem:[%s889 + $0x8] sm:$0xf]
        %v893 = vld [vmem:[%s889 + $0xc] sm:$0xf]
        %v898 = vunpack.c.l.b16 %v890
        %v899 = vunpack.c.l.b16 %v891
        %v900 = vunpack.c.l.b16 %v892
        %v901 = vunpack.c.l.b16 %v893
        %v902 = vpack.c.b16 %v899, %v898
        %v903 = vpack.c.b16 %v901, %v900
        %906 = vmatprep.subr.bf16.mxu0 0
        %907 = vmatpush1.bf16.msra.mxu0 %v902
        %908 = vmatprep.subr.bf16.mxu0 0
        %909 = vmatpush1.bf16.msra.mxu0 %v903
        %910 = vmatprep.subr.bf16.mxu0 0
        %911 = vmatpush1.bf16.msra.mxu0 0
        %912 = vmatprep.subr.bf16.mxu0 0
        %913 = vmatpush1.bf16.msra.mxu0 0
        %914 = vmatprep.subr.bf16.mxu0 0
        %915 = vmatpush1.bf16.msra.mxu0 0
        %916 = vmatprep.subr.bf16.mxu0 0
        %917 = vmatpush1.bf16.msra.mxu0 0
        %918 = vmatprep.subr.bf16.mxu0 0
        %919 = vmatpush1.bf16.msra.mxu0 0
        %920 = vmatprep.subr.bf16.mxu0 0
        %921 = vmatpush1.bf16.msra.mxu0 0
        %922 = vmatprep.subr.bf16.mxu0 0
        %923 = vmatpush1.bf16.msra.mxu0 0
        %924 = vmatprep.subr.bf16.mxu0 0
        %925 = vmatpush1.bf16.msra.mxu0 0
        %926 = vmatprep.subr.bf16.mxu0 0
        %927 = vmatpush1.bf16.msra.mxu0 0
        %928 = vmatprep.subr.bf16.mxu0 0
        %929 = vmatpush1.bf16.msra.mxu0 0
        %930 = vmatprep.subr.bf16.mxu0 0
        %931 = vmatpush1.bf16.msra.mxu0 0
        %932 = vmatprep.subr.bf16.mxu0 0
        %933 = vmatpush1.bf16.msra.mxu0 0
        %934 = vmatprep.subr.bf16.mxu0 0
        %935 = vmatpush1.bf16.msra.mxu0 0
        %936 = vmatprep.subr.bf16.mxu0 0
        %937 = vmatpush1.bf16.msra.mxu0 0
        %938 = vmatprep.mubr.bf16.mxu0 0
        %939 = vmatmul.mubr.bf16.gmra.mrb[0].mxu0 %v729
        %v940 = vpop.f32.mrb[0].mxu0
        %v941 = vadd.f32 0.0, %v940
        %v942 = vpop.f32.mrb[0].mxu0
        %v943 = vpop.f32.mrb[0].mxu0
        %v944 = vpop.f32.mrb[0].mxu0
        %945 = vdwg.mxu0
        %v946 = vmul.f32 %v941, 0.35355338
        %v947 = vpack.c.bf16 %v946, %v946
        %s948 = smul.addr %s886, 8
        %s949 = scalar_lea.vmem [#allocation4], %s948
        %v950 = vld [vmem:[%s949] sm:$0xff]
        %v952 = vsel %vm776, %v947, 0
        %v955 = vsel %vm776, %v950, 0
        %957 = vmatprep.subr.bf16.mxu0 0
        %958 = vmatpush1.bf16.xpose.msra.mxu0 %v955
        %959 = vmatprep.subr.bf16.mxu0 0
        %960 = vmatpush1.bf16.xpose.msra.mxu0 0
        %961 = vmatprep.subr.bf16.mxu0 0
        %962 = vmatpush1.bf16.xpose.msra.mxu0 0
        %963 = vmatprep.subr.bf16.mxu0 0
        %964 = vmatpush1.bf16.xpose.msra.mxu0 0
        %965 = vmatprep.subr.bf16.mxu0 0
        %966 = vmatpush1.bf16.xpose.msra.mxu0 0
        %967 = vmatprep.subr.bf16.mxu0 0
        %968 = vmatpush1.bf16.xpose.msra.mxu0 0
        %969 = vmatprep.subr.bf16.mxu0 0
        %970 = vmatpush1.bf16.xpose.msra.mxu0 0
        %971 = vmatprep.subr.bf16.mxu0 0
        %972 = vmatpush1.bf16.xpose.msra.mxu0 0
        %973 = vmatprep.subr.bf16.mxu0 0
        %974 = vmatpush1.bf16.xpose.msra.mxu0 0
        %975 = vmatprep.subr.bf16.mxu0 0
        %976 = vmatpush1.bf16.xpose.msra.mxu0 0
        %977 = vmatprep.subr.bf16.mxu0 0
        %978 = vmatpush1.bf16.xpose.msra.mxu0 0
        %979 = vmatprep.subr.bf16.mxu0 0
        %980 = vmatpush1.bf16.xpose.msra.mxu0 0
        %981 = vmatprep.subr.bf16.mxu0 0
        %982 = vmatpush1.bf16.xpose.msra.mxu0 0
        %983 = vmatprep.subr.bf16.mxu0 0
        %984 = vmatpush1.bf16.xpose.msra.mxu0 0
        %985 = vmatprep.subr.bf16.mxu0 0
        %986 = vmatpush1.bf16.xpose.msra.mxu0 0
        %987 = vmatprep.subr.bf16.mxu0 0
        %988 = vmatpush1.bf16.xpose.msra.mxu0 0
        %989 = vmatprep.mubr.bf16.mxu0 0
        %990 = vmatmul.mubr.bf16.gmra.mrb[0].mxu0 %v952
        %v991 = vpop.f32.mrb[0].mxu0
        %v992 = vadd.f32 %v706, %v991
        %v993 = vpop.f32.mrb[0].mxu0
        %v994 = vpop.f32.mrb[0].mxu0
        %v995 = vpop.f32.mrb[0].mxu0
        %996 = vdwg.mxu0
        %v997 = vsel %vm823, %v992, -inf
        %998 = vmax.xlane.f32.xlu0 %v997
        %v999 = vpop.xlane.xlu0 %998
        %v1000 = vsub.f32 %v992, %v999
        %v1001 = vmul.f32 %v1000, 1.442695
        %v1002 = vpow.pop %v1001
        %v1003 = vsel %vm823, %v1002, 0.0
        %1004 = vadd.xlane.f32.xlu0 %v1003
        %v1005 = vpop.xlane.xlu0 %1004
        %v1006 = vrcp.pop %v1005
        %v1007 = vmul.f32 %v1002, %v1006
        %v1008 = vpack.c.bf16 %v1007, %v1007
        %s1009 = smul.addr %s886, 8
        %s1010 = scalar_lea.vmem [#allocation5], %s1009
        %v1011 = vld [vmem:[%s1010] sm:$0xff]
        %v1013 = vsel %vm823, %v1008, 0
        %1015 = vmatprep.subr.bf16.mxu0 0
        %1016 = vmatpush1.bf16.msra.mxu0 %v1011
        %1017 = vmatprep.subr.bf16.mxu0 0
        %1018 = vmatpush1.bf16.msra.mxu0 0
        %1019 = vmatprep.subr.bf16.mxu0 0
        %1020 = vmatpush1.bf16.msra.mxu0 0
        %1021 = vmatprep.subr.bf16.mxu0 0
        %1022 = vmatpush1.bf16.msra.mxu0 0
        %1023 = vmatprep.subr.bf16.mxu0 0
        %1024 = vmatpush1.bf16.msra.mxu0 0
        %1025 = vmatprep.subr.bf16.mxu0 0
        %1026 = vmatpush1.bf16.msra.mxu0 0
        %1027 = vmatprep.subr.bf16.mxu0 0
        %1028 = vmatpush1.bf16.msra.mxu0 0
        %1029 = vmatprep.subr.bf16.mxu0 0
        %1030 = vmatpush1.bf16.msra.mxu0 0
        %1031 = vmatprep.subr.bf16.mxu0 0
        %1032 = vmatpush1.bf16.msra.mxu0 0
        %1033 = vmatprep.subr.bf16.mxu0 0
        %1034 = vmatpush1.bf16.msra.mxu0 0
        %1035 = vmatprep.subr.bf16.mxu0 0
        %1036 = vmatpush1.bf16.msra.mxu0 0
        %1037 = vmatprep.subr.bf16.mxu0 0
        %1038 = vmatpush1.bf16.msra.mxu0 0
        %1039 = vmatprep.subr.bf16.mxu0 0
        %1040 = vmatpush1.bf16.msra.mxu0 0
        %1041 = vmatprep.subr.bf16.mxu0 0
        %1042 = vmatpush1.bf16.msra.mxu0 0
        %1043 = vmatprep.subr.bf16.mxu0 0
        %1044 = vmatpush1.bf16.msra.mxu0 0
        %1045 = vmatprep.subr.bf16.mxu0 0
        %1046 = vmatpush1.bf16.msra.mxu0 0
        %1047 = vmatprep.mubr.bf16.mxu0 0
        %1048 = vmatmul.mubr.bf16.gmra.mrb[0].mxu0 %v1013
        %v1049 = vpop.f32.mrb[0].mxu0
        %v1050 = vadd.f32 0.0, %v1049
        %v1051 = vpop.f32.mrb[0].mxu0
        %v1052 = vpop.f32.mrb[0].mxu0
        %v1053 = vpop.f32.mrb[0].mxu0
        %1054 = vdwg.mxu0
        %v1055 = vpack.c.bf16 %v1050, %v1050
        %s1056 = smul.addr %s886, 4
        %s1057 = scalar_lea.vmem %s7, %s1056
        %v1058 = vld [vmem:[%s1057] sm:$0xf]
        %v1060 = vsel %vm776, %v1055, 0
        %vm1062 = vcmask 1043456
        %v1064 = vsel %vm1062, %v1058, 0
        %1066 = vmatprep.subr.bf16.mxu0 0
        %1067 = vmatpush1.bf16.msra.mxu0 %v1064
        %1068 = vmatprep.subr.bf16.mxu0 0
        %1069 = vmatpush1.bf16.msra.mxu0 0
        %1070 = vmatprep.subr.bf16.mxu0 0
        %1071 = vmatpush1.bf16.msra.mxu0 0
        %1072 = vmatprep.subr.bf16.mxu0 0
        %1073 = vmatpush1.bf16.msra.mxu0 0
        %1074 = vmatprep.subr.bf16.mxu0 0
        %1075 = vmatpush1.bf16.msra.mxu0 0
        %1076 = vmatprep.subr.bf16.mxu0 0
        %1077 = vmatpush1.bf16.msra.mxu0 0
        %1078 = vmatprep.subr.bf16.mxu0 0
        %1079 = vmatpush1.bf16.msra.mxu0 0
        %1080 = vmatprep.subr.bf16.mxu0 0
        %1081 = vmatpush1.bf16.msra.mxu0 0
        %1082 = vmatprep.subr.bf16.mxu0 0
        %1083 = vmatpush1.bf16.msra.mxu0 0
        %1084 = vmatprep.subr.bf16.mxu0 0
        %1085 = vmatpush1.bf16.msra.mxu0 0
        %1086 = vmatprep.subr.bf16.mxu0 0
        %1087 = vmatpush1.bf16.msra.mxu0 0
        %1088 = vmatprep.subr.bf16.mxu0 0
        %1089 = vmatpush1.bf16.msra.mxu0 0
        %1090 = vmatprep.subr.bf16.mxu0 0
        %1091 = vmatpush1.bf16.msra.mxu0 0
        %1092 = vmatprep.subr.bf16.mxu0 0
        %1093 = vmatpush1.bf16.msra.mxu0 0
        %1094 = vmatprep.subr.bf16.mxu0 0
        %1095 = vmatpush1.bf16.msra.mxu0 0
        %1096 = vmatprep.subr.bf16.mxu0 0
        %1097 = vmatpush1.bf16.msra.mxu0 0
        %1098 = vmatprep.mubr.bf16.mxu0 0
        %1099 = vmatmul.mubr.bf16.gmra.mrb[0].mxu0 %v1060
        %v1100 = vpop.f32.mrb[0].mxu0
        %v1101 = vadd.f32 0.0, %v1100
        %v1102 = vpop.f32.mrb[0].mxu0
        %v1103 = vpop.f32.mrb[0].mxu0
        %v1104 = vpop.f32.mrb[0].mxu0
        %1105 = vdwg.mxu0
        %v1107 = vsel %vm776, %v882, 0
        %v1110 = vsel %vm1062, %v885, 0
        %1112 = vmatprep.subr.bf16.mxu0 0
        %1113 = vmatpush1.bf16.msra.mxu0 %v1110
        %1114 = vmatprep.subr.bf16.mxu0 0
        %1115 = vmatpush1.bf16.msra.mxu0 0
        %1116 = vmatprep.subr.bf16.mxu0 0
        %1117 = vmatpush1.bf16.msra.mxu0 0
        %1118 = vmatprep.subr.bf16.mxu0 0
        %1119 = vmatpush1.bf16.msra.mxu0 0
        %1120 = vmatprep.subr.bf16.mxu0 0
        %1121 = vmatpush1.bf16.msra.mxu0 0
        %1122 = vmatprep.subr.bf16.mxu0 0
        %1123 = vmatpush1.bf16.msra.mxu0 0
        %1124 = vmatprep.subr.bf16.mxu0 0
        %1125 = vmatpush1.bf16.msra.mxu0 0
        %1126 = vmatprep.subr.bf16.mxu0 0
        %1127 = vmatpush1.bf16.msra.mxu0 0
        %1128 = vmatprep.subr.bf16.mxu0 0
        %1129 = vmatpush1.bf16.msra.mxu0 0
        %1130 = vmatprep.subr.bf16.mxu0 0
        %1131 = vmatpush1.bf16.msra.mxu0 0
        %1132 = vmatprep.subr.bf16.mxu0 0
        %1133 = vmatpush1.bf16.msra.mxu0 0
        %1134 = vmatprep.subr.bf16.mxu0 0
        %1135 = vmatpush1.bf16.msra.mxu0 0
        %1136 = vmatprep.subr.bf16.mxu0 0
        %1137 = vmatpush1.bf16.msra.mxu0 0
        %1138 = vmatprep.subr.bf16.mxu0 0
        %1139 = vmatpush1.bf16.msra.mxu0 0
        %1140 = vmatprep.subr.bf16.mxu0 0
        %1141 = vmatpush1.bf16.msra.mxu0 0
        %1142 = vmatprep.subr.bf16.mxu0 0
        %1143 = vmatpush1.bf16.msra.mxu0 0
        %1144 = vmatprep.mubr.bf16.mxu0 0
        %1145 = vmatmul.mubr.bf16.gmra.mrb[0].mxu0 %v1107
        %v1146 = vpop.f32.mrb[0].mxu0
        %v1147 = vadd.f32 %v1101, %v1146
        %v1148 = vpop.f32.mrb[0].mxu0
        %v1149 = vpop.f32.mrb[0].mxu0
        %v1150 = vpop.f32.mrb[0].mxu0
        %1151 = vdwg.mxu0
        %v1152 = vld [vmem:[#allocation2] sm:$0xff]
        %v1153 = vadd.f32 %v1152, %v1147
        %1154 = vst.msk [vmem:[#allocation2] sm:$0xff] %vm727, %v1153
        %p1155 = scmp.eq.s32.totalorder %s29, 1
        // Predicated region
        $region61: #{tpu_custom_call.1} parent=51 // pred_check
          %p1156 = pneg %p1155
        $region62: #{tpu_custom_call.1} parent=51 // pred_check_branch
          %1158 = sbr.rel (%p1156) target = $region64
        $region63: #{tpu_custom_call.1} parent=51 // pred_region
          %v1159 = vld [vmem:[#allocation2] sm:$0xff]
          %1160 = vst.msk [vmem:[%s380] sm:$0xff] %vm727, %v1159
        $region64: #{tpu_custom_call.1} parent=51 // pred_fallthru
          _
        %s1161 = sand.u32 %s243, 1
        %s1162 = scalar_lea.sflag [#allocation7], %s1161
        %s1163 = sand.u32 %s243, 1
        %s1164 = smul.addr %s1163, 8
        %s1165 = scalar_lea.vmem [#allocation6], %s1164
        // Predicated region
        $region65: #{tpu_custom_call.1} parent=51 // pred_check
          %p1166 = pneg %p253
        $region66: #{tpu_custom_call.1} parent=51 // pred_check_branch
          %1168 = sbr.rel (%p1166) target = $region68
        $region67: #{tpu_custom_call.1} parent=51 // pred_region
          %s1170 = ssub.s32 128, 128
          %1171 = vsyncadd %s1162, %s1170
          %s1172 = smul.addr %s27, 2
          %s1173 = sadd.s32 %s28, %s1172
          %s1174 = smul.addr %s1173, 128
          %s1175 = scalar_lea.hbm %s8, %s1174
          %s1177 = sshll.u32 %s1165, 4
          %s1178 = int_to_ptr.vmem [resolvable:$true] %s1177
          %1180 = dma.vmem_to_hbm [thread:$0]  %s1178, 128, %s1175, %s1162
        $region68: #{tpu_custom_call.1} parent=51 // pred_fallthru
          _
      $region52: #{tpu_custom_call.1} parent=5 // pred_fallthru
        _
      %p1181 = scmp.le.s32.totalorder 2, %s17
      // Predicated region
      $region69: #{tpu_custom_call.1} parent=5 // pred_check
        %p1182 = pneg %p1181
      $region70: #{tpu_custom_call.1} parent=5 // pred_check_branch
        %1184 = sbr.rel (%p1182) target = $region72
      $region71: #{tpu_custom_call.1} parent=5 // pred_region
        %s1185 = ssub.s32 %s17, 2
        // Predicated region
        $region73: #{tpu_custom_call.1} parent=71 // pred_check
          %p1186 = pneg %p259
        $region74: #{tpu_custom_call.1} parent=71 // pred_check_branch
          %1188 = sbr.rel (%p1186) target = $region76
        $region75: #{tpu_custom_call.1} parent=71 // pred_region
          %s1189 = sand.u32 %s244, 1
          %s1190 = scalar_lea.sflag [#allocation7], %s1189
          %s1191 = sand.u32 %s244, 1
          %s1192 = smul.addr %s1191, 8
          %s1193 = scalar_lea.vmem [#allocation6], %s1192
          %1194 = dma.done %s1190, 128
        $region76: #{tpu_custom_call.1} parent=71 // pred_fallthru
          _
      $region72: #{tpu_custom_call.1} parent=5 // pred_fallthru
        _
    $region6: #{tpu_custom_call.1} parent=1 // loop_footer
      %s21 = sadd.s32 1, %s17
    $region7: #{tpu_custom_call.1} parent=1 // loop_footer_branch
      %16 = sbr.rel target = $region3
    $region8: #{tpu_custom_call.1} parent=1 // loop_exit
      _
    %1195 = vsyncpa [#allocation7], 1
    %s1196 = scalar_lea.sflag [#allocation7], 1
    %1197 = vsyncpa %s1196, 1

// kernel: tpu_custom_call.1
$region0: #{tpu_custom_call.1}
  #allocation0 [shape = 'u32[]', space=smem, size = 0x4, offset = 0x4, fixed_abs, tag = 'smem constant byte address 0x4 - core index']
  #allocation1 [shape = 'u32[144,128]{1,0:T(1,128)}', space=vmem, size = 0x12000, scoped, tag = 'internal scratch']
  #allocation2 [shape = 'f32[8,32]{1,0:T(8,128)}', space=vmem, size = 0x1000, scoped, tag = 'scratch operand']
  #allocation3 [shape = 'bf16[8,16]{1,0:T(8,128)(2,1)}', space=vmem, size = 0x800, scoped, tag = 'scratch operand']
  #allocation4 [shape = 'bf16[4,16,8]{2,1,0:T(16,128)(2,1)}', space=vmem, size = 0x4000, scoped, tag = 'scratch operand']
  #allocation5 [shape = 'bf16[4,16,8]{2,1,0:T(16,128)(2,1)}', space=vmem, size = 0x4000, scoped, tag = 'scratch operand']
  %s0 = inlined_call_operand.vmem [shape: bf16[2,16,32], index: 0, kind: input, shape index: {}]
  %s1 = inlined_call_operand.vmem [shape: bf16[2,16,32], index: 1, kind: input, shape index: {}]
  %s2 = inlined_call_operand.vmem [shape: bf16[2,16,32], index: 2, kind: input, shape index: {}]
  %s3 = inlined_call_operand.vmem [shape: s8[2,1,16,16], index: 3, kind: input, shape index: {}]
  %s4 = inlined_call_operand.vmem [shape: bf16[4,32,8], index: 4, kind: input, shape index: {}]
  %s5 = inlined_call_operand.vmem [shape: bf16[4,32,8], index: 5, kind: input, shape index: {}]
  %s6 = inlined_call_operand.vmem [shape: bf16[4,32,8], index: 6, kind: input, shape index: {}]
  %s7 = inlined_call_operand.vmem [shape: bf16[4,8,32], index: 7, kind: input, shape index: {}]
  %s8 = inlined_call_operand.hbm [shape: f32[2,16,32], index: 8, kind: output, shape index: {}]
  %s9 = sld [smem:[#allocation0]]
  $region77: #{tpu_custom_call.1} parent=0
    _
  %s11 = ssub.s32 1, %s9
  %s12 = scalar_select 0, %s11, %s9
  $region1: #{tpu_custom_call.1} parent=0
    #allocation6 [shape = 'u8[8192]{0}', space=vmem, size = 0x2000, scoped, tag = 'output window, operand 0']
    #allocation7 [shape = 's32[2]{0}', space=sflag, size = 0x8, scoped, tag = 'scoped memory for tpu_custom_call.1']
    %13 = vsyncpa [#allocation7], 0
    %s14 = scalar_lea.sflag [#allocation7], 1
    %15 = vsyncpa %s14, 0
    loop: start=0, step=1, limit=10
    $region2: #{tpu_custom_call.1} parent=1 // loop_pre_header
      _
    $region3: #{tpu_custom_call.1} parent=1 // loop_header
      %s17 = sphi 0, %s21
      %p18 = scmp.ge.s32.totalorder %s17, 10
      %s24 = sphi 0, %s43
      %s25 = sphi 0, %s39
      %s26 = sphi 0, %s35
      %s27 = sphi 0, %s24
      %s28 = sphi 0, %s25
      %s29 = sphi 0, %s26
      %s30 = sphi 0, %s27
      %s31 = sphi 0, %s28
      %s32 = sphi 0, %s29
      %s48 = sphi 0, %s50
      %s51 = sphi 0, %s48
      %s52 = sphi 0, %s51
      %s68 = sphi 0, %s52
      %s74 = sphi 0, %s76
      %s77 = sphi 0, %s74
      %s78 = sphi 0, %s77
      %s94 = sphi 0, %s78
      %s100 = sphi 0, %s102
      %s103 = sphi 0, %s100
      %s104 = sphi 0, %s103
      %s120 = sphi 0, %s104
      %s128 = sphi 0, %s130
      %s131 = sphi 0, %s128
      %s132 = sphi 0, %s131
      %s148 = sphi 0, %s132
      %s152 = sphi 0, %s152
      %s154 = sphi 0, %s152
      %s155 = sphi 0, %s154
      %s169 = sphi 0, %s155
      %s173 = sphi 0, %s173
      %s175 = sphi 0, %s173
      %s176 = sphi 0, %s175
      %s190 = sphi 0, %s176
      %s194 = sphi 0, %s194
      %s196 = sphi 0, %s194
      %s197 = sphi 0, %s196
      %s211 = sphi 0, %s197
      %s215 = sphi 0, %s215
      %s217 = sphi 0, %s215
      %s218 = sphi 0, %s217
      %s232 = sphi 0, %s218
      %s240 = sphi 0, %s242
      %s243 = sphi 0, %s240
      %s244 = sphi 0, %s243
      %s260 = sphi 0, %s244
    $region4: #{tpu_custom_call.1} parent=1 // loop_header_branch
      %20 = sbr.rel (%p18) target = $region8
    $region5: #{tpu_custom_call.1} parent=1 // loop_body
      %s22 = ssub.s32 %s17, 1
      %s23 = ssub.s32 %s17, 2
      %s33 = sadd.s32 1, %s26
      %p34 = scmp.ge.s32.totalorder %s33, 2
      %s35 = scalar_select %p34, 0, %s33
      %s36 = sadd.s32 1, %s25
      %s37 = scalar_select %p34, %s36, %s25
      %p38 = scmp.ge.s32.totalorder %s37, 2
      %s39 = scalar_select %p38, 0, %s37
      %s40 = sadd.s32 1, %s24
      %s41 = scalar_select %p38, %s40, %s24
      %p42 = scmp.ge.s32.totalorder %s41, 2
      %s43 = scalar_select %p42, 0, %s41
      %s44 = ssub.s32 %s24, %s43
      %s45 = ssub.s32 %s25, %s39
      %s46 = sor.u32 %s44, %s45
      %p47 = scmp.eq.s32.totalorder %s46, 0
      %s49 = sadd.s32 %s48, 1
      %s50 = scalar_select %p47, %s48, %s49
      %p53 = pneg %p47
      %p54 = scmp.eq.s32.totalorder %s17, 7
      %p55 = por %p53, %p54
      %p56 = scmp.ne.s32.totalorder %s48, %s51
      %p57 = scmp.eq.s32.totalorder %s17, 0
      %p58 = por %p56, %p57
      %p59 = scmp.ne.s32.totalorder %s48, %s51
      %p60 = scmp.eq.s32.totalorder %s22, 7
      %p61 = por %p59, %p60
      %p62 = scmp.ne.s32.totalorder %s51, %s52
      %p63 = scmp.eq.s32.totalorder %s22, 0
      %p64 = por %p62, %p63
      %p65 = scmp.ne.s32.totalorder %s51, %s52
      %p66 = scmp.eq.s32.totalorder %s23, 7
      %p67 = por %p65, %p66
      %p69 = scmp.ne.s32.totalorder %s52, %s68
      %p70 = scmp.eq.s32.totalorder %s23, 0
      %p71 = por %p69, %p70
      %s72 = ssub.s32 %s24, %s43
      %p73 = scmp.eq.s32.totalorder %s72, 0
      %s75 = sadd.s32 %s74, 1
      %s76 = scalar_select %p73, %s74, %s75
      %p79 = pneg %p73
      %p80 = scmp.eq.s32.totalorder %s17, 7
      %p81 = por %p79, %p80
      %p82 = scmp.ne.s32.totalorder %s74, %s77
      %p83 = scmp.eq.s32.totalorder %s17, 0
      %p84 = por %p82, %p83
      %p85 = scmp.ne.s32.totalorder %s74, %s77
      %p86 = scmp.eq.s32.totalorder %s22, 7
      %p87 = por %p85, %p86
      %p88 = scmp.ne.s32.totalorder %s77, %s78
      %p89 = scmp.eq.s32.totalorder %s22, 0
      %p90 = por %p88, %p89
      %p91 = scmp.ne.s32.totalorder %s77, %s78
      %p92 = scmp.eq.s32.totalorder %s23, 7
      %p93 = por %p91, %p92
      %p95 = scmp.ne.s32.totalorder %s78, %s94
      %p96 = scmp.eq.s32.totalorder %s23, 0
      %p97 = por %p95, %p96
      %s98 = ssub.s32 %s24, %s43
      %p99 = scmp.eq.s32.totalorder %s98, 0
      %s101 = sadd.s32 %s100, 1
      %s102 = scalar_select %p99, %s100, %s101
      %p105 = pneg %p99
      %p106 = scmp.eq.s32.totalorder %s17, 7
      %p107 = por %p105, %p106
      %p108 = scmp.ne.s32.totalorder %s100, %s103
      %p109 = scmp.eq.s32.totalorder %s17, 0
      %p110 = por %p108, %p109
      %p111 = scmp.ne.s32.totalorder %s100, %s103
      %p112 = scmp.eq.s32.totalorder %s22, 7
      %p113 = por %p111, %p112
      %p114 = scmp.ne.s32.totalorder %s103, %s104
      %p115 = scmp.eq.s32.totalorder %s22, 0
      %p116 = por %p114, %p115
      %p117 = scmp.ne.s32.totalorder %s103, %s104
      %p118 = scmp.eq.s32.totalorder %s23, 7
      %p119 = por %p117, %p118
      %p121 = scmp.ne.s32.totalorder %s104, %s120
      %p122 = scmp.eq.s32.totalorder %s23, 0
      %p123 = por %p121, %p122
      %s124 = ssub.s32 %s24, %s43
      %s125 = ssub.s32 %s25, %s39
      %s126 = sor.u32 %s124, %s125
      %p127 = scmp.eq.s32.totalorder %s126, 0
      %s129 = sadd.s32 %s128, 1
      %s130 = scalar_select %p127, %s128, %s129
      %p133 = pneg %p127
      %p134 = scmp.eq.s32.totalorder %s17, 7
      %p135 = por %p133, %p134
      %p136 = scmp.ne.s32.totalorder %s128, %s131
      %p137 = scmp.eq.s32.totalorder %s17, 0
      %p138 = por %p136, %p137
      %p139 = scmp.ne.s32.totalorder %s128, %s131
      %p140 = scmp.eq.s32.totalorder %s22, 7
      %p141 = por %p139, %p140
      %p142 = scmp.ne.s32.totalorder %s131, %s132
      %p143 = scmp.eq.s32.totalorder %s22, 0
      %p144 = por %p142, %p143
      %p145 = scmp.ne.s32.totalorder %s131, %s132
      %p146 = scmp.eq.s32.totalorder %s23, 7
      %p147 = por %p145, %p146
      %p149 = scmp.ne.s32.totalorder %s132, %s148
      %p150 = scmp.eq.s32.totalorder %s23, 0
      %p151 = por %p149, %p150
      %s153 = sadd.s32 %s152, 1
      %p156 = scmp.eq.s32.totalorder %s17, 7
      %p157 = scmp.ne.s32.totalorder %s152, %s154
      %p158 = scmp.eq.s32.totalorder %s17, 0
      %p159 = por %p157, %p158
      %p160 = scmp.ne.s32.totalorder %s152, %s154
      %p161 = scmp.eq.s32.totalorder %s22, 7
      %p162 = por %p160, %p161
      %p163 = scmp.ne.s32.totalorder %s154, %s155
      %p164 = scmp.eq.s32.totalorder %s22, 0
      %p165 = por %p163, %p164
      %p166 = scmp.ne.s32.totalorder %s154, %s155
      %p167 = scmp.eq.s32.totalorder %s23, 7
      %p168 = por %p166, %p167
      %p170 = scmp.ne.s32.totalorder %s155, %s169
      %p171 = scmp.eq.s32.totalorder %s23, 0
      %p172 = por %p170, %p171
      %s174 = sadd.s32 %s173, 1
      %p177 = scmp.eq.s32.totalorder %s17, 7
      %p178 = scmp.ne.s32.totalorder %s173, %s175
      %p179 = scmp.eq.s32.totalorder %s17, 0
      %p180 = por %p178, %p179
      %p181 = scmp.ne.s32.totalorder %s173, %s175
      %p182 = scmp.eq.s32.totalorder %s22, 7
      %p183 = por %p181, %p182
      %p184 = scmp.ne.s32.totalorder %s175, %s176
      %p185 = scmp.eq.s32.totalorder %s22, 0
      %p186 = por %p184, %p185
      %p187 = scmp.ne.s32.totalorder %s175, %s176
      %p188 = scmp.eq.s32.totalorder %s23, 7
      %p189 = por %p187, %p188
      %p191 = scmp.ne.s32.totalorder %s176, %s190
      %p192 = scmp.eq.s32.totalorder %s23, 0
      %p193 = por %p191, %p192
      %s195 = sadd.s32 %s194, 1
      %p198 = scmp.eq.s32.totalorder %s17, 7
      %p199 = scmp.ne.s32.totalorder %s194, %s196
      %p200 = scmp.eq.s32.totalorder %s17, 0
      %p201 = por %p199, %p200
      %p202 = scmp.ne.s32.totalorder %s194, %s196
      %p203 = scmp.eq.s32.totalorder %s22, 7
      %p204 = por %p202, %p203
      %p205 = scmp.ne.s32.totalorder %s196, %s197
      %p206 = scmp.eq.s32.totalorder %s22, 0
      %p207 = por %p205, %p206
      %p208 = scmp.ne.s32.totalorder %s196, %s197
      %p209 = scmp.eq.s32.totalorder %s23, 7
      %p210 = por %p208, %p209
      %p212 = scmp.ne.s32.totalorder %s197, %s211
      %p213 = scmp.eq.s32.totalorder %s23, 0
      %p214 = por %p212, %p213
      %s216 = sadd.s32 %s215, 1
      %p219 = scmp.eq.s32.totalorder %s17, 7
      %p220 = scmp.ne.s32.totalorder %s215, %s217
      %p221 = scmp.eq.s32.totalorder %s17, 0
      %p222 = por %p220, %p221
      %p223 = scmp.ne.s32.totalorder %s215, %s217
      %p224 = scmp.eq.s32.totalorder %s22, 7
      %p225 = por %p223, %p224
      %p226 = scmp.ne.s32.totalorder %s217, %s218
      %p227 = scmp.eq.s32.totalorder %s22, 0
      %p228 = por %p226, %p227
      %p229 = scmp.ne.s32.totalorder %s217, %s218
      %p230 = scmp.eq.s32.totalorder %s23, 7
      %p231 = por %p229, %p230
      %p233 = scmp.ne.s32.totalorder %s218, %s232
      %p234 = scmp.eq.s32.totalorder %s23, 0
      %p235 = por %p233, %p234
      %s236 = ssub.s32 %s24, %s43
      %s237 = ssub.s32 %s25, %s39
      %s238 = sor.u32 %s236, %s237
      %p239 = scmp.eq.s32.totalorder %s238, 0
      %s241 = sadd.s32 %s240, 1
      %s242 = scalar_select %p239, %s240, %s241
      %p245 = pneg %p239
      %p246 = scmp.eq.s32.totalorder %s17, 7
      %p247 = por %p245, %p246
      %p248 = scmp.ne.s32.totalorder %s240, %s243
      %p249 = scmp.eq.s32.totalorder %s17, 0
      %p250 = por %p248, %p249
      %p251 = scmp.ne.s32.totalorder %s240, %s243
      %p252 = scmp.eq.s32.totalorder %s22, 7
      %p253 = por %p251, %p252
      %p254 = scmp.ne.s32.totalorder %s243, %s244
      %p255 = scmp.eq.s32.totalorder %s22, 0
      %p256 = por %p254, %p255
      %p257 = scmp.ne.s32.totalorder %s243, %s244
      %p258 = scmp.eq.s32.totalorder %s23, 7
      %p259 = por %p257, %p258
      %p261 = scmp.ne.s32.totalorder %s244, %s260
      %p262 = scmp.eq.s32.totalorder %s23, 0
      %p263 = por %p261, %p262
      %p264 = scmp.le.s32.totalorder 1, %s17
      %p265 = scmp.lt.s32.totalorder %s17, 9
      %p266 = pnand %p264, %p265
      %p267 = pneg %p266
      // Predicated region
      $region9: #{tpu_custom_call.1} parent=5 // pred_check
        _
      $region10: #{tpu_custom_call.1} parent=5 // pred_check_branch
        %269 = sbr.rel (%p266) target = $region12
      $region11: #{tpu_custom_call.1} parent=5 // pred_region
        %s270 = ssub.s32 %s17, 1
        // Predicated region
        $region13: #{tpu_custom_call.1} parent=11 // pred_check
          %p271 = pneg %p165
        $region14: #{tpu_custom_call.1} parent=11 // pred_check_branch
          %273 = sbr.rel (%p271) target = $region16
        $region15: #{tpu_custom_call.1} parent=11 // pred_region
          _
        $region16: #{tpu_custom_call.1} parent=11 // pred_fallthru
          _
        // Predicated region
        $region17: #{tpu_custom_call.1} parent=11 // pred_check
          %p274 = pneg %p186
        $region18: #{tpu_custom_call.1} parent=11 // pred_check_branch
          %276 = sbr.rel (%p274) target = $region20
        $region19: #{tpu_custom_call.1} parent=11 // pred_region
          _
        $region20: #{tpu_custom_call.1} parent=11 // pred_fallthru
          _
        // Predicated region
        $region21: #{tpu_custom_call.1} parent=11 // pred_check
          %p277 = pneg %p207
        $region22: #{tpu_custom_call.1} parent=11 // pred_check_branch
          %279 = sbr.rel (%p277) target = $region24
        $region23: #{tpu_custom_call.1} parent=11 // pred_region
          _
        $region24: #{tpu_custom_call.1} parent=11 // pred_fallthru
          _
        // Predicated region
        $region25: #{tpu_custom_call.1} parent=11 // pred_check
          %p280 = pneg %p228
        $region26: #{tpu_custom_call.1} parent=11 // pred_check_branch
          %282 = sbr.rel (%p280) target = $region28
        $region27: #{tpu_custom_call.1} parent=11 // pred_region
          _
        $region28: #{tpu_custom_call.1} parent=11 // pred_fallthru
          _
      $region12: #{tpu_custom_call.1} parent=5 // pred_fallthru
        _
      %p283 = scmp.lt.s32.totalorder %s17, 8
      // Predicated region
      $region29: #{tpu_custom_call.1} parent=5 // pred_check
        %p284 = pneg %p283
      $region30: #{tpu_custom_call.1} parent=5 // pred_check_branch
        %286 = sbr.rel (%p284) target = $region32
      $region31: #{tpu_custom_call.1} parent=5 // pred_region
        // Predicated region
        $region33: #{tpu_custom_call.1} parent=31 // pred_check
          %p287 = pneg %p58
        $region34: #{tpu_custom_call.1} parent=31 // pred_check_branch
          %289 = sbr.rel (%p287) target = $region36
        $region35: #{tpu_custom_call.1} parent=31 // pred_region
          %p290 = scmp.lt.s32.totalorder %s24, 1
          %s291 = scalar_select %p290, %s24, 1
          %p292 = scmp.lt.s32.totalorder %s25, 1
          %s293 = scalar_select %p292, %s25, 1
          %s294 = smul.addr %s291, 2
          %s295 = sadd.s32 %s293, %s294
          %s296 = smul.addr %s295, 4
          %s297 = scalar_lea.vmem %s0, %s296
        $region36: #{tpu_custom_call.1} parent=31 // pred_fallthru
          _
        // Predicated region
        $region37: #{tpu_custom_call.1} parent=31 // pred_check
          %p298 = pneg %p84
        $region38: #{tpu_custom_call.1} parent=31 // pred_check_branch
          %300 = sbr.rel (%p298) target = $region40
        $region39: #{tpu_custom_call.1} parent=31 // pred_region
          %p301 = scmp.lt.s32.totalorder %s24, 1
          %s302 = scalar_select %p301, %s24, 1
          %s303 = smul.addr %s302, 2
          %s304 = smul.addr %s303, 4
          %s305 = scalar_lea.vmem %s1, %s304
        $region40: #{tpu_custom_call.1} parent=31 // pred_fallthru
          _
        // Predicated region
        $region41: #{tpu_custom_call.1} parent=31 // pred_check
          %p306 = pneg %p110
        $region42: #{tpu_custom_call.1} parent=31 // pred_check_branch
          %308 = sbr.rel (%p306) target = $region44
        $region43: #{tpu_custom_call.1} parent=31 // pred_region
          %p309 = scmp.lt.s32.totalorder %s24, 1
          %s310 = scalar_select %p309, %s24, 1
          %s311 = smul.addr %s310, 2
          %s312 = smul.addr %s311, 4
          %s313 = scalar_lea.vmem %s2, %s312
        $region44: #{tpu_custom_call.1} parent=31 // pred_fallthru
          _
        // Predicated region
        $region45: #{tpu_custom_call.1} parent=31 // pred_check
          %p314 = pneg %p138
        $region46: #{tpu_custom_call.1} parent=31 // pred_check_branch
          %316 = sbr.rel (%p314) target = $region48
        $region47: #{tpu_custom_call.1} parent=31 // pred_region
          %p317 = scmp.lt.s32.totalorder %s24, 1
          %s318 = scalar_select %p317, %s24, 1
          %p319 = scmp.lt.s32.totalorder %s25, 1
          %s320 = scalar_select %p319, %s25, 1
          %s321 = smul.addr %s318, 2
          %s322 = sadd.s32 %s320, %s321
          %s323 = smul.addr %s322, 2
          %s324 = scalar_lea.vmem %s3, %s323
        $region48: #{tpu_custom_call.1} parent=31 // pred_fallthru
          _
      $region32: #{tpu_custom_call.1} parent=5 // pred_fallthru
        _
      %p325 = scmp.le.s32.totalorder 1, %s17
      %p326 = scmp.lt.s32.totalorder %s17, 9
      %p327 = pnand %p325, %p326
      %p328 = pneg %p327
      // Predicated region
      $region49: #{tpu_custom_call.1} parent=5 // pred_check
        _
      $region50: #{tpu_custom_call.1} parent=5 // pred_check_branch
        %330 = sbr.rel (%p327) target = $region52
      $region51: #{tpu_custom_call.1} parent=5 // pred_region
        %s331 = ssub.s32 %s17, 1
        %p332 = scmp.lt.s32.totalorder %s27, 1
        %s333 = scalar_select %p332, %s27, 1
        %p334 = scmp.lt.s32.totalorder %s28, 1
        %s335 = scalar_select %p334, %s28, 1
        %s336 = smul.addr %s333, 2
        %s337 = sadd.s32 %s335, %s336
        %s338 = smul.addr %s337, 4
        %s339 = scalar_lea.vmem %s0, %s338
        %p340 = pneg %p64
        %p341 = pneg %p61
        %p342 = scmp.lt.s32.totalorder %s27, 1
        %s343 = scalar_select %p342, %s27, 1
        %s344 = smul.addr %s343, 2
        %s345 = smul.addr %s344, 4
        %s346 = scalar_lea.vmem %s1, %s345
        %p347 = pneg %p90
        %p348 = pneg %p87
        %p349 = scmp.lt.s32.totalorder %s27, 1
        %s350 = scalar_select %p349, %s27, 1
        %s351 = smul.addr %s350, 2
        %s352 = smul.addr %s351, 4
        %s353 = scalar_lea.vmem %s2, %s352
        %p354 = pneg %p116
        %p355 = pneg %p113
        %p356 = scmp.lt.s32.totalorder %s27, 1
        %s357 = scalar_select %p356, %s27, 1
        %p358 = scmp.lt.s32.totalorder %s28, 1
        %s359 = scalar_select %p358, %s28, 1
        %s360 = smul.addr %s357, 2
        %s361 = sadd.s32 %s359, %s360
        %s362 = smul.addr %s361, 2
        %s363 = scalar_lea.vmem %s3, %s362
        %p364 = pneg %p144
        %p365 = pneg %p141
        %p366 = pneg %p165
        %p367 = pneg %p162
        %p368 = pneg %p186
        %p369 = pneg %p183
        %p370 = pneg %p207
        %p371 = pneg %p204
        %p372 = pneg %p228
        %p373 = pneg %p225
        %p374 = pneg %p256
        %p375 = pneg %p253
        %s376 = sand.u32 %s243, 1
        %s377 = scalar_lea.sflag [#allocation7], %s376
        %s378 = sand.u32 %s243, 1
        %s379 = smul.addr %s378, 8
        %s380 = scalar_lea.vmem [#allocation6], %s379
        %p381 = scmp.lt.s32.totalorder %s27, 1
        %s382 = scalar_select %p381, %s27, 1
        %p383 = scmp.lt.s32.totalorder %s28, 1
        %s384 = scalar_select %p383, %s28, 1
        %s385 = smul.addr %s382, 2
        %s386 = sadd.s32 %s384, %s385
        %s387 = smul.addr %s386, 4
        %s388 = scalar_lea.vmem %s0, %s387
        %p389 = scmp.lt.s32.totalorder %s27, 1
        %s390 = scalar_select %p389, %s27, 1
        %s391 = smul.addr %s390, 2
        %s392 = smul.addr %s391, 4
        %s393 = scalar_lea.vmem %s1, %s392
        %p394 = scmp.lt.s32.totalorder %s27, 1
        %s395 = scalar_select %p394, %s27, 1
        %s396 = smul.addr %s395, 2
        %s397 = smul.addr %s396, 4
        %s398 = scalar_lea.vmem %s2, %s397
        %p399 = scmp.lt.s32.totalorder %s27, 1
        %s400 = scalar_select %p399, %s27, 1
        %p401 = scmp.lt.s32.totalorder %s28, 1
        %s402 = scalar_select %p401, %s28, 1
        %s403 = smul.addr %s400, 2
        %s404 = sadd.s32 %s402, %s403
        %s405 = smul.addr %s404, 2
        %s406 = scalar_lea.vmem %s3, %s405
        %p408 = scmp.eq.s32.totalorder %s29, 0
        // Predicated region
        $region53: #{tpu_custom_call.1} parent=51 // pred_check
          %p409 = pneg %p408
        $region54: #{tpu_custom_call.1} parent=51 // pred_check_branch
          %411 = sbr.rel (%p409) target = $region56
        $region55: #{tpu_custom_call.1} parent=51 // pred_region
          %vm412 = vcmask 261120
          %413 = vst.msk [vmem:[#allocation2] sm:$0xff] %vm412, 0.0
          %v414 = vld [vmem:[%s406] sm:$0x3]
          %v415 = vunpack.c.0.s8 %v414
          %v416 = vcvt.s32.f32 %v415
          %v417 = vsub.f32 %v416, 1.0
          %v418 = vmul.f32 %v417, 1e+09
          %v419 = vpack.c.bf16 %v418, %v418
          %vm420 = vcmask 125952
          %421 = vst.msk [vmem:[#allocation3] sm:$0xf] %vm420, %v419
        $region56: #{tpu_custom_call.1} parent=51 // pred_fallthru
          _
        %p422 = scmp.eq.s32.totalorder %s28, 0
        // Predicated region
        $region57: #{tpu_custom_call.1} parent=51 // pred_check
          %p423 = pneg %p422
        $region58: #{tpu_custom_call.1} parent=51 // pred_check_branch
          %425 = sbr.rel (%p423) target = $region60
        $region59: #{tpu_custom_call.1} parent=51 // pred_region
          %v426 = vld [vmem:[%s393] sm:$0xf]
          %v427 = vld [vmem:[%s393 + $0x4] sm:$0xf]
          %v428 = vld [vmem:[%s398] sm:$0xf]
          %v429 = vld [vmem:[%s398 + $0x4] sm:$0xf]
          %s430 = smul.u32 %s29, 2
          %s431 = smul.u32 %s430, 4
          %s432 = smul.addr %s431, 4
          %s433 = scalar_lea.vmem %s5, %s432
          %v434 = vld [vmem:[%s433] sm:$0xf]
          %v435 = vld [vmem:[%s433 + $0x4] sm:$0xf]
          %v436 = vld [vmem:[%s433 + $0x8] sm:$0xf]
          %v437 = vld [vmem:[%s433 + $0xc] sm:$0xf]
          %v440 = vunpack.c.l.b16 %v426
          %v441 = vunpack.c.l.b16 %v427
          %v442 = vpack.c.b16 %v441, %v440
          %v447 = vunpack.c.l.b16 %v434
          %v448 = vunpack.c.l.b16 %v435
          %v449 = vunpack.c.l.b16 %v436
          %v450 = vunpack.c.l.b16 %v437
          %v451 = vpack.c.b16 %v448, %v447
          %v452 = vpack.c.b16 %v450, %v449
          %vm455 = vcmask 261120
          %v457 = vsel %vm455, %v442, 0
          %459 = vmatprep.subr.bf16.mxu0 0
          %460 = vmatpush1.bf16.msra.mxu0 %v451
          %461 = vmatprep.subr.bf16.mxu0 0
          %462 = vmatpush1.bf16.msra.mxu0 %v452
          %463 = vmatprep.subr.bf16.mxu0 0
          %464 = vmatpush1.bf16.msra.mxu0 0
          %465 = vmatprep.subr.bf16.mxu0 0
          %466 = vmatpush1.bf16.msra.mxu0 0
          %467 = vmatprep.subr.bf16.mxu0 0
          %468 = vmatpush1.bf16.msra.mxu0 0
          %469 = vmatprep.subr.bf16.mxu0 0
          %470 = vmatpush1.bf16.msra.mxu0 0
          %471 = vmatprep.subr.bf16.mxu0 0
          %472 = vmatpush1.bf16.msra.mxu0 0
          %473 = vmatprep.subr.bf16.mxu0 0
          %474 = vmatpush1.bf16.msra.mxu0 0
          %475 = vmatprep.subr.bf16.mxu0 0
          %476 = vmatpush1.bf16.msra.mxu0 0
          %477 = vmatprep.subr.bf16.mxu0 0
          %478 = vmatpush1.bf16.msra.mxu0 0
          %479 = vmatprep.subr.bf16.mxu0 0
          %480 = vmatpush1.bf16.msra.mxu0 0
          %481 = vmatprep.subr.bf16.mxu0 0
          %482 = vmatpush1.bf16.msra.mxu0 0
          %483 = vmatprep.subr.bf16.mxu0 0
          %484 = vmatpush1.bf16.msra.mxu0 0
          %485 = vmatprep.subr.bf16.mxu0 0
          %486 = vmatpush1.bf16.msra.mxu0 0
          %487 = vmatprep.subr.bf16.mxu0 0
          %488 = vmatpush1.bf16.msra.mxu0 0
          %489 = vmatprep.subr.bf16.mxu0 0
          %490 = vmatpush1.bf16.msra.mxu0 0
          %491 = vmatprep.mubr.bf16.mxu0 0
          %492 = vmatmul.mubr.bf16.gmra.mrb[0].mxu0 %v457
          %v493 = vpop.f32.mrb[0].mxu0
          %v494 = vadd.f32 0.0, %v493
          %v495 = vpop.f32.mrb[0].mxu0
          %v496 = vpop.f32.mrb[0].mxu0
          %v497 = vadd.f32 0.0, %v496
          %v498 = vpop.f32.mrb[0].mxu0
          %499 = vdwg.mxu0
          %v500 = vpack.c.bf16 %v497, %v494
          %s501 = smul.addr %s430, 8
          %s502 = scalar_lea.vmem [#allocation4], %s501
          %vm503 = vcmask 64512
          %504 = vst.msk [vmem:[%s502] sm:$0xff] %vm503, %v500
          %s505 = smul.addr %s431, 4
          %s506 = scalar_lea.vmem %s6, %s505
          %v507 = vld [vmem:[%s506] sm:$0xf]
          %v508 = vld [vmem:[%s506 + $0x4] sm:$0xf]
          %v509 = vld [vmem:[%s506 + $0x8] sm:$0xf]
          %v510 = vld [vmem:[%s506 + $0xc] sm:$0xf]
          %v513 = vunpack.c.l.b16 %v428
          %v514 = vunpack.c.l.b16 %v429
          %v515 = vpack.c.b16 %v514, %v513
          %v520 = vunpack.c.l.b16 %v507
          %v521 = vunpack.c.l.b16 %v508
          %v522 = vunpack.c.l.b16 %v509
          %v523 = vunpack.c.l.b16 %v510
          %v524 = vpack.c.b16 %v521, %v520
          %v525 = vpack.c.b16 %v523, %v522
          %v529 = vsel %vm455, %v515, 0
          %531 = vmatprep.subr.bf16.mxu0 0
          %532 = vmatpush1.bf16.msra.mxu0 %v524
          %533 = vmatprep.subr.bf16.mxu0 0
          %534 = vmatpush1.bf16.msra.mxu0 %v525
          %535 = vmatprep.subr.bf16.mxu0 0
          %536 = vmatpush1.bf16.msra.mxu0 0
          %537 = vmatprep.subr.bf16.mxu0 0
          %538 = vmatpush1.bf16.msra.mxu0 0
          %539 = vmatprep.subr.bf16.mxu0 0
          %540 = vmatpush1.bf16.msra.mxu0 0
          %541 = vmatprep.subr.bf16.mxu0 0
          %542 = vmatpush1.bf16.msra.mxu0 0
          %543 = vmatprep.subr.bf16.mxu0 0
          %544 = vmatpush1.bf16.msra.mxu0 0
          %545 = vmatprep.subr.bf16.mxu0 0
          %546 = vmatpush1.bf16.msra.mxu0 0
          %547 = vmatprep.subr.bf16.mxu0 0
          %548 = vmatpush1.bf16.msra.mxu0 0
          %549 = vmatprep.subr.bf16.mxu0 0
          %550 = vmatpush1.bf16.msra.mxu0 0
          %551 = vmatprep.subr.bf16.mxu0 0
          %552 = vmatpush1.bf16.msra.mxu0 0
          %553 = vmatprep.subr.bf16.mxu0 0
          %554 = vmatpush1.bf16.msra.mxu0 0
          %555 = vmatprep.subr.bf16.mxu0 0
          %556 = vmatpush1.bf16.msra.mxu0 0
          %557 = vmatprep.subr.bf16.mxu0 0
          %558 = vmatpush1.bf16.msra.mxu0 0
          %559 = vmatprep.subr.bf16.mxu0 0
          %560 = vmatpush1.bf16.msra.mxu0 0
          %561 = vmatprep.subr.bf16.mxu0 0
          %562 = vmatpush1.bf16.msra.mxu0 0
          %563 = vmatprep.mubr.bf16.mxu0 0
          %564 = vmatmul.mubr.bf16.gmra.mrb[0].mxu0 %v529
          %v565 = vpop.f32.mrb[0].mxu0
          %v566 = vadd.f32 0.0, %v565
          %v567 = vpop.f32.mrb[0].mxu0
          %v568 = vpop.f32.mrb[0].mxu0
          %v569 = vadd.f32 0.0, %v568
          %v570 = vpop.f32.mrb[0].mxu0
          %571 = vdwg.mxu0
          %v572 = vpack.c.bf16 %v569, %v566
          %s573 = smul.addr %s430, 8
          %s574 = scalar_lea.vmem [#allocation5], %s573
          %575 = vst.msk [vmem:[%s574] sm:$0xff] %vm503, %v572
          %s576 = sadd.s32 %s430, 1
          %s577 = smul.u32 %s576, 4
          %s578 = smul.addr %s577, 4
          %s579 = scalar_lea.vmem %s5, %s578
          %v580 = vld [vmem:[%s579] sm:$0xf]
          %v581 = vld [vmem:[%s579 + $0x4] sm:$0xf]
          %v582 = vld [vmem:[%s579 + $0x8] sm:$0xf]
          %v583 = vld [vmem:[%s579 + $0xc] sm:$0xf]
          %v588 = vunpack.c.l.b16 %v580
          %v589 = vunpack.c.l.b16 %v581
          %v590 = vunpack.c.l.b16 %v582
          %v591 = vunpack.c.l.b16 %v583
          %v592 = vpack.c.b16 %v589, %v588
          %v593 = vpack.c.b16 %v591, %v590
          %596 = vmatprep.subr.bf16.mxu0 0
          %597 = vmatpush1.bf16.msra.mxu0 %v592
          %598 = vmatprep.subr.bf16.mxu0 0
          %599 = vmatpush1.bf16.msra.mxu0 %v593
          %600 = vmatprep.subr.bf16.mxu0 0
          %601 = vmatpush1.bf16.msra.mxu0 0
          %602 = vmatprep.subr.bf16.mxu0 0
          %603 = vmatpush1.bf16.msra.mxu0 0
          %604 = vmatprep.subr.bf16.mxu0 0
          %605 = vmatpush1.bf16.msra.mxu0 0
          %606 = vmatprep.subr.bf16.mxu0 0
          %607 = vmatpush1.bf16.msra.mxu0 0
          %608 = vmatprep.subr.bf16.mxu0 0
          %609 = vmatpush1.bf16.msra.mxu0 0
          %610 = vmatprep.subr.bf16.mxu0 0
          %611 = vmatpush1.bf16.msra.mxu0 0
          %612 = vmatprep.subr.bf16.mxu0 0
          %613 = vmatpush1.bf16.msra.mxu0 0
          %614 = vmatprep.subr.bf16.mxu0 0
          %615 = vmatpush1.bf16.msra.mxu0 0
          %616 = vmatprep.subr.bf16.mxu0 0
          %617 = vmatpush1.bf16.msra.mxu0 0
          %618 = vmatprep.subr.bf16.mxu0 0
          %619 = vmatpush1.bf16.msra.mxu0 0
          %620 = vmatprep.subr.bf16.mxu0 0
          %621 = vmatpush1.bf16.msra.mxu0 0
          %622 = vmatprep.subr.bf16.mxu0 0
          %623 = vmatpush1.bf16.msra.mxu0 0
          %624 = vmatprep.subr.bf16.mxu0 0
          %625 = vmatpush1.bf16.msra.mxu0 0
          %626 = vmatprep.subr.bf16.mxu0 0
          %627 = vmatpush1.bf16.msra.mxu0 0
          %628 = vmatprep.mubr.bf16.mxu0 0
          %629 = vmatmul.mubr.bf16.gmra.mrb[0].mxu0 %v457
          %v630 = vpop.f32.mrb[0].mxu0
          %v631 = vadd.f32 0.0, %v630
          %v632 = vpop.f32.mrb[0].mxu0
          %v633 = vpop.f32.mrb[0].mxu0
          %v634 = vadd.f32 0.0, %v633
          %v635 = vpop.f32.mrb[0].mxu0
          %636 = vdwg.mxu0
          %v637 = vpack.c.bf16 %v634, %v631
          %s638 = smul.addr %s576, 8
          %s639 = scalar_lea.vmem [#allocation4], %s638
          %640 = vst.msk [vmem:[%s639] sm:$0xff] %vm503, %v637
          %s641 = smul.addr %s577, 4
          %s642 = scalar_lea.vmem %s6, %s641
          %v643 = vld [vmem:[%s642] sm:$0xf]
          %v644 = vld [vmem:[%s642 + $0x4] sm:$0xf]
          %v645 = vld [vmem:[%s642 + $0x8] sm:$0xf]
          %v646 = vld [vmem:[%s642 + $0xc] sm:$0xf]
          %v651 = vunpack.c.l.b16 %v643
          %v652 = vunpack.c.l.b16 %v644
          %v653 = vunpack.c.l.b16 %v645
          %v654 = vunpack.c.l.b16 %v646
          %v655 = vpack.c.b16 %v652, %v651
          %v656 = vpack.c.b16 %v654, %v653
          %659 = vmatprep.subr.bf16.mxu0 0
          %660 = vmatpush1.bf16.msra.mxu0 %v655
          %661 = vmatprep.subr.bf16.mxu0 0
          %662 = vmatpush1.bf16.msra.mxu0 %v656
          %663 = vmatprep.subr.bf16.mxu0 0
          %664 = vmatpush1.bf16.msra.mxu0 0
          %665 = vmatprep.subr.bf16.mxu0 0
          %666 = vmatpush1.bf16.msra.mxu0 0
          %667 = vmatprep.subr.bf16.mxu0 0
          %668 = vmatpush1.bf16.msra.mxu0 0
          %669 = vmatprep.subr.bf16.mxu0 0
          %670 = vmatpush1.bf16.msra.mxu0 0
          %671 = vmatprep.subr.bf16.mxu0 0
          %672 = vmatpush1.bf16.msra.mxu0 0
          %673 = vmatprep.subr.bf16.mxu0 0
          %674 = vmatpush1.bf16.msra.mxu0 0
          %675 = vmatprep.subr.bf16.mxu0 0
          %676 = vmatpush1.bf16.msra.mxu0 0
          %677 = vmatprep.subr.bf16.mxu0 0
          %678 = vmatpush1.bf16.msra.mxu0 0
          %679 = vmatprep.subr.bf16.mxu0 0
          %680 = vmatpush1.bf16.msra.mxu0 0
          %681 = vmatprep.subr.bf16.mxu0 0
          %682 = vmatpush1.bf16.msra.mxu0 0
          %683 = vmatprep.subr.bf16.mxu0 0
          %684 = vmatpush1.bf16.msra.mxu0 0
          %685 = vmatprep.subr.bf16.mxu0 0
          %686 = vmatpush1.bf16.msra.mxu0 0
          %687 = vmatprep.subr.bf16.mxu0 0
          %688 = vmatpush1.bf16.msra.mxu0 0
          %689 = vmatprep.subr.bf16.mxu0 0
          %690 = vmatpush1.bf16.msra.mxu0 0
          %691 = vmatprep.mubr.bf16.mxu0 0
          %692 = vmatmul.mubr.bf16.gmra.mrb[0].mxu0 %v529
          %v693 = vpop.f32.mrb[0].mxu0
          %v694 = vadd.f32 0.0, %v693
          %v695 = vpop.f32.mrb[0].mxu0
          %v696 = vpop.f32.mrb[0].mxu0
          %v697 = vadd.f32 0.0, %v696
          %v698 = vpop.f32.mrb[0].mxu0
          %699 = vdwg.mxu0
          %v700 = vpack.c.bf16 %v697, %v694
          %s701 = smul.addr %s576, 8
          %s702 = scalar_lea.vmem [#allocation5], %s701
          %703 = vst.msk [vmem:[%s702] sm:$0xff] %vm503, %v700
        $region60: #{tpu_custom_call.1} parent=51 // pred_fallthru
          _
        %v704 = vld [vmem:[%s388] sm:$0xf]
        %v705 = vld [vmem:[#allocation3] sm:$0xf]
        %v706 = vunpack.c.l.bf16 %v705
        %s707 = smul.u32 %s29, 2
        %s708 = smul.u32 %s707, 4
        %s709 = smul.addr %s708, 4
        %s710 = scalar_lea.vmem %s4, %s709
        %v711 = vld [vmem:[%s710] sm:$0xf]
        %v712 = vld [vmem:[%s710 + $0x4] sm:$0xf]
        %v713 = vld [vmem:[%s710 + $0x8] sm:$0xf]
        %v714 = vld [vmem:[%s710 + $0xc] sm:$0xf]
        %v719 = vunpack.c.l.b16 %v711
        %v720 = vunpack.c.l.b16 %v712
        %v721 = vunpack.c.l.b16 %v713
        %v722 = vunpack.c.l.b16 %v714
        %v723 = vpack.c.b16 %v720, %v719
        %v724 = vpack.c.b16 %v722, %v721
        %vm727 = vcmask 261120
        %v729 = vsel %vm727, %v704, 0
        %731 = vmatprep.subr.bf16.mxu0 0
        %732 = vmatpush1.bf16.msra.mxu0 %v723
        %733 = vmatprep.subr.bf16.mxu0 0
        %734 = vmatpush1.bf16.msra.mxu0 %v724
        %735 = vmatprep.subr.bf16.mxu0 0
        %736 = vmatpush1.bf16.msra.mxu0 0
        %737 = vmatprep.subr.bf16.mxu0 0
        %738 = vmatpush1.bf16.msra.mxu0 0
        %739 = vmatprep.subr.bf16.mxu0 0
        %740 = vmatpush1.bf16.msra.mxu0 0
        %741 = vmatprep.subr.bf16.mxu0 0
        %742 = vmatpush1.bf16.msra.mxu0 0
        %743 = vmatprep.subr.bf16.mxu0 0
        %744 = vmatpush1.bf16.msra.mxu0 0
        %745 = vmatprep.subr.bf16.mxu0 0
        %746 = vmatpush1.bf16.msra.mxu0 0
        %747 = vmatprep.subr.bf16.mxu0 0
        %748 = vmatpush1.bf16.msra.mxu0 0
        %749 = vmatprep.subr.bf16.mxu0 0
        %750 = vmatpush1.bf16.msra.mxu0 0
        %751 = vmatprep.subr.bf16.mxu0 0
        %752 = vmatpush1.bf16.msra.mxu0 0
        %753 = vmatprep.subr.bf16.mxu0 0
        %754 = vmatpush1.bf16.msra.mxu0 0
        %755 = vmatprep.subr.bf16.mxu0 0
        %756 = vmatpush1.bf16.msra.mxu0 0
        %757 = vmatprep.subr.bf16.mxu0 0
        %758 = vmatpush1.bf16.msra.mxu0 0
        %759 = vmatprep.subr.bf16.mxu0 0
        %760 = vmatpush1.bf16.msra.mxu0 0
        %761 = vmatprep.subr.bf16.mxu0 0
        %762 = vmatpush1.bf16.msra.mxu0 0
        %763 = vmatprep.mubr.bf16.mxu0 0
        %764 = vmatmul.mubr.bf16.gmra.mrb[0].mxu0 %v729
        %v765 = vpop.f32.mrb[0].mxu0
        %v766 = vadd.f32 0.0, %v765
        %v767 = vpop.f32.mrb[0].mxu0
        %v768 = vpop.f32.mrb[0].mxu0
        %v769 = vpop.f32.mrb[0].mxu0
        %770 = vdwg.mxu0
        %v771 = vmul.f32 %v766, 0.35355338
        %v772 = vpack.c.bf16 %v771, %v771
        %s773 = smul.addr %s707, 8
        %s774 = scalar_lea.vmem [#allocation4], %s773
        %v775 = vld [vmem:[%s774] sm:$0xff]
        %vm776 = vcmask 64512
        %v778 = vsel %vm776, %v772, 0
        %v781 = vsel %vm776, %v775, 0
        %783 = vmatprep.subr.bf16.mxu0 0
        %784 = vmatpush1.bf16.xpose.msra.mxu0 %v781
        %785 = vmatprep.subr.bf16.mxu0 0
        %786 = vmatpush1.bf16.xpose.msra.mxu0 0
        %787 = vmatprep.subr.bf16.mxu0 0
        %788 = vmatpush1.bf16.xpose.msra.mxu0 0
        %789 = vmatprep.subr.bf16.mxu0 0
        %790 = vmatpush1.bf16.xpose.msra.mxu0 0
        %791 = vmatprep.subr.bf16.mxu0 0
        %792 = vmatpush1.bf16.xpose.msra.mxu0 0
        %793 = vmatprep.subr.bf16.mxu0 0
        %794 = vmatpush1.bf16.xpose.msra.mxu0 0
        %795 = vmatprep.subr.bf16.mxu0 0
        %796 = vmatpush1.bf16.xpose.msra.mxu0 0
        %797 = vmatprep.subr.bf16.mxu0 0
        %798 = vmatpush1.bf16.xpose.msra.mxu0 0
        %799 = vmatprep.subr.bf16.mxu0 0
        %800 = vmatpush1.bf16.xpose.msra.mxu0 0
        %801 = vmatprep.subr.bf16.mxu0 0
        %802 = vmatpush1.bf16.xpose.msra.mxu0 0
        %803 = vmatprep.subr.bf16.mxu0 0
        %804 = vmatpush1.bf16.xpose.msra.mxu0 0
        %805 = vmatprep.subr.bf16.mxu0 0
        %806 = vmatpush1.bf16.xpose.msra.mxu0 0
        %807 = vmatprep.subr.bf16.mxu0 0
        %808 = vmatpush1.bf16.xpose.msra.mxu0 0
        %809 = vmatprep.subr.bf16.mxu0 0
        %810 = vmatpush1.bf16.xpose.msra.mxu0 0
        %811 = vmatprep.subr.bf16.mxu0 0
        %812 = vmatpush1.bf16.xpose.msra.mxu0 0
        %813 = vmatprep.subr.bf16.mxu0 0
        %814 = vmatpush1.bf16.xpose.msra.mxu0 0
        %815 = vmatprep.mubr.bf16.mxu0 0
        %816 = vmatmul.mubr.bf16.gmra.mrb[0].mxu0 %v778
        %v817 = vpop.f32.mrb[0].mxu0
        %v818 = vadd.f32 %v706, %v817
        %v819 = vpop.f32.mrb[0].mxu0
        %v820 = vpop.f32.mrb[0].mxu0
        %v821 = vpop.f32.mrb[0].mxu0
        %822 = vdwg.mxu0
        %vm823 = vcmask 130048
        %v824 = vsel %vm823, %v818, -inf
        %825 = vmax.xlane.f32.xlu0 %v824
        %v826 = vpop.xlane.xlu0 %825
        %v827 = vsub.f32 %v818, %v826
        %v828 = vmul.f32 %v827, 1.442695
        %v829 = vpow.pop %v828
        %v830 = vsel %vm823, %v829, 0.0
        %831 = vadd.xlane.f32.xlu0 %v830
        %v832 = vpop.xlane.xlu0 %831
        %v833 = vrcp.pop %v832
        %v834 = vmul.f32 %v829, %v833
        %v835 = vpack.c.bf16 %v834, %v834
        %s836 = smul.addr %s707, 8
        %s837 = scalar_lea.vmem [#allocation5], %s836
        %v838 = vld [vmem:[%s837] sm:$0xff]
        %v840 = vsel %vm823, %v835, 0
        %842 = vmatprep.subr.bf16.mxu0 0
        %843 = vmatpush1.bf16.msra.mxu0 %v838
        %844 = vmatprep.subr.bf16.mxu0 0
        %845 = vmatpush1.bf16.msra.mxu0 0
        %846 = vmatprep.subr.bf16.mxu0 0
        %847 = vmatpush1.bf16.msra.mxu0 0
        %848 = vmatprep.subr.bf16.mxu0 0
        %849 = vmatpush1.bf16.msra.mxu0 0
        %850 = vmatprep.subr.bf16.mxu0 0
        %851 = vmatpush1.bf16.msra.mxu0 0
        %852 = vmatprep.subr.bf16.mxu0 0
        %853 = vmatpush1.bf16.msra.mxu0 0
        %854 = vmatprep.subr.bf16.mxu0 0
        %855 = vmatpush1.bf16.msra.mxu0 0
        %856 = vmatprep.subr.bf16.mxu0 0
        %857 = vmatpush1.bf16.msra.mxu0 0
        %858 = vmatprep.subr.bf16.mxu0 0
        %859 = vmatpush1.bf16.msra.mxu0 0
        %860 = vmatprep.subr.bf16.mxu0 0
        %861 = vmatpush1.bf16.msra.mxu0 0
        %862 = vmatprep.subr.bf16.mxu0 0
        %863 = vmatpush1.bf16.msra.mxu0 0
        %864 = vmatprep.subr.bf16.mxu0 0
        %865 = vmatpush1.bf16.msra.mxu0 0
        %866 = vmatprep.subr.bf16.mxu0 0
        %867 = vmatpush1.bf16.msra.mxu0 0
        %868 = vmatprep.subr.bf16.mxu0 0
        %869 = vmatpush1.bf16.msra.mxu0 0
        %870 = vmatprep.subr.bf16.mxu0 0
        %871 = vmatpush1.bf16.msra.mxu0 0
        %872 = vmatprep.subr.bf16.mxu0 0
        %873 = vmatpush1.bf16.msra.mxu0 0
        %874 = vmatprep.mubr.bf16.mxu0 0
        %875 = vmatmul.mubr.bf16.gmra.mrb[0].mxu0 %v840
        %v876 = vpop.f32.mrb[0].mxu0
        %v877 = vadd.f32 0.0, %v876
        %v878 = vpop.f32.mrb[0].mxu0
        %v879 = vpop.f32.mrb[0].mxu0
        %v880 = vpop.f32.mrb[0].mxu0
        %881 = vdwg.mxu0
        %v882 = vpack.c.bf16 %v877, %v877
        %s883 = smul.addr %s707, 4
        %s884 = scalar_lea.vmem %s7, %s883
        %v885 = vld [vmem:[%s884] sm:$0xf]
        %s886 = sadd.s32 %s707, 1
        %s887 = smul.u32 %s886, 4
        %s888 = smul.addr %s887, 4
        %s889 = scalar_lea.vmem %s4, %s888
        %v890 = vld [vmem:[%s889] sm:$0xf]
        %v891 = vld [vmem:[%s889 + $0x4] sm:$0xf]
        %v892 = vld [vmem:[%s889 + $0x8] sm:$0xf]
        %v893 = vld [vmem:[%s889 + $0xc] sm:$0xf]
        %v898 = vunpack.c.l.b16 %v890
        %v899 = vunpack.c.l.b16 %v891
        %v900 = vunpack.c.l.b16 %v892
        %v901 = vunpack.c.l.b16 %v893
        %v902 = vpack.c.b16 %v899, %v898
        %v903 = vpack.c.b16 %v901, %v900
        %906 = vmatprep.subr.bf16.mxu0 0
        %907 = vmatpush1.bf16.msra.mxu0 %v902
        %908 = vmatprep.subr.bf16.mxu0 0
        %909 = vmatpush1.bf16.msra.mxu0 %v903
        %910 = vmatprep.subr.bf16.mxu0 0
        %911 = vmatpush1.bf16.msra.mxu0 0
        %912 = vmatprep.subr.bf16.mxu0 0
        %913 = vmatpush1.bf16.msra.mxu0 0
        %914 = vmatprep.subr.bf16.mxu0 0
        %915 = vmatpush1.bf16.msra.mxu0 0
        %916 = vmatprep.subr.bf16.mxu0 0
        %917 = vmatpush1.bf16.msra.mxu0 0
        %918 = vmatprep.subr.bf16.mxu0 0
        %919 = vmatpush1.bf16.msra.mxu0 0
        %920 = vmatprep.subr.bf16.mxu0 0
        %921 = vmatpush1.bf16.msra.mxu0 0
        %922 = vmatprep.subr.bf16.mxu0 0
        %923 = vmatpush1.bf16.msra.mxu0 0
        %924 = vmatprep.subr.bf16.mxu0 0
        %925 = vmatpush1.bf16.msra.mxu0 0
        %926 = vmatprep.subr.bf16.mxu0 0
        %927 = vmatpush1.bf16.msra.mxu0 0
        %928 = vmatprep.subr.bf16.mxu0 0
        %929 = vmatpush1.bf16.msra.mxu0 0
        %930 = vmatprep.subr.bf16.mxu0 0
        %931 = vmatpush1.bf16.msra.mxu0 0
        %932 = vmatprep.subr.bf16.mxu0 0
        %933 = vmatpush1.bf16.msra.mxu0 0
        %934 = vmatprep.subr.bf16.mxu0 0
        %935 = vmatpush1.bf16.msra.mxu0 0
        %936 = vmatprep.subr.bf16.mxu0 0
        %937 = vmatpush1.bf16.msra.mxu0 0
        %938 = vmatprep.mubr.bf16.mxu0 0
        %939 = vmatmul.mubr.bf16.gmra.mrb[0].mxu0 %v729
        %v940 = vpop.f32.mrb[0].mxu0
        %v941 = vadd.f32 0.0, %v940
        %v942 = vpop.f32.mrb[0].mxu0
        %v943 = vpop.f32.mrb[0].mxu0
        %v944 = vpop.f32.mrb[0].mxu0
        %945 = vdwg.mxu0
        %v946 = vmul.f32 %v941, 0.35355338
        %v947 = vpack.c.bf16 %v946, %v946
        %s948 = smul.addr %s886, 8
        %s949 = scalar_lea.vmem [#allocation4], %s948
        %v950 = vld [vmem:[%s949] sm:$0xff]
        %v952 = vsel %vm776, %v947, 0
        %v955 = vsel %vm776, %v950, 0
        %957 = vmatprep.subr.bf16.mxu0 0
        %958 = vmatpush1.bf16.xpose.msra.mxu0 %v955
        %959 = vmatprep.subr.bf16.mxu0 0
        %960 = vmatpush1.bf16.xpose.msra.mxu0 0
        %961 = vmatprep.subr.bf16.mxu0 0
        %962 = vmatpush1.bf16.xpose.msra.mxu0 0
        %963 = vmatprep.subr.bf16.mxu0 0
        %964 = vmatpush1.bf16.xpose.msra.mxu0 0
        %965 = vmatprep.subr.bf16.mxu0 0
        %966 = vmatpush1.bf16.xpose.msra.mxu0 0
        %967 = vmatprep.subr.bf16.mxu0 0
        %968 = vmatpush1.bf16.xpose.msra.mxu0 0
        %969 = vmatprep.subr.bf16.mxu0 0
        %970 = vmatpush1.bf16.xpose.msra.mxu0 0
        %971 = vmatprep.subr.bf16.mxu0 0
        %972 = vmatpush1.bf16.xpose.msra.mxu0 0
        %973 = vmatprep.subr.bf16.mxu0 0
        %974 = vmatpush1.bf16.xpose.msra.mxu0 0
        %975 = vmatprep.subr.bf16.mxu0 0
        %976 = vmatpush1.bf16.xpose.msra.mxu0 0
        %977 = vmatprep.subr.bf16.mxu0 0
        %978 = vmatpush1.bf16.xpose.msra.mxu0 0
        %979 = vmatprep.subr.bf16.mxu0 0
        %980 = vmatpush1.bf16.xpose.msra.mxu0 0
        %981 = vmatprep.subr.bf16.mxu0 0
        %982 = vmatpush1.bf16.xpose.msra.mxu0 0
        %983 = vmatprep.subr.bf16.mxu0 0
        %984 = vmatpush1.bf16.xpose.msra.mxu0 0
        %985 = vmatprep.subr.bf16.mxu0 0
        %986 = vmatpush1.bf16.xpose.msra.mxu0 0
        %987 = vmatprep.subr.bf16.mxu0 0
        %988 = vmatpush1.bf16.xpose.msra.mxu0 0
        %989 = vmatprep.mubr.bf16.mxu0 0
        %990 = vmatmul.mubr.bf16.gmra.mrb[0].mxu0 %v952
        %v991 = vpop.f32.mrb[0].mxu0
        %v992 = vadd.f32 %v706, %v991
        %v993 = vpop.f32.mrb[0].mxu0
        %v994 = vpop.f32.mrb[0].mxu0
        %v995 = vpop.f32.mrb[0].mxu0
        %996 = vdwg.mxu0
        %v997 = vsel %vm823, %v992, -inf
        %998 = vmax.xlane.f32.xlu0 %v997
        %v999 = vpop.xlane.xlu0 %998
        %v1000 = vsub.f32 %v992, %v999
        %v1001 = vmul.f32 %v1000, 1.442695
        %v1002 = vpow.pop %v1001
        %v1003 = vsel %vm823, %v1002, 0.0
        %1004 = vadd.xlane.f32.xlu0 %v1003
        %v1005 = vpop.xlane.xlu0 %1004
        %v1006 = vrcp.pop %v1005
        %v1007 = vmul.f32 %v1002, %v1006
        %v1008 = vpack.c.bf16 %v1007, %v1007
        %s1009 = smul.addr %s886, 8
        %s1010 = scalar_lea.vmem [#allocation5], %s1009
        %v1011 = vld [vmem:[%s1010] sm:$0xff]
        %v1013 = vsel %vm823, %v1008, 0
        %1015 = vmatprep.subr.bf16.mxu0 0
        %1016 = vmatpush1.bf16.msra.mxu0 %v1011
        %1017 = vmatprep.subr.bf16.mxu0 0
        %1018 = vmatpush1.bf16.msra.mxu0 0
        %1019 = vmatprep.subr.bf16.mxu0 0
        %1020 = vmatpush1.bf16.msra.mxu0 0
        %1021 = vmatprep.subr.bf16.mxu0 0
        %1022 = vmatpush1.bf16.msra.mxu0 0
        %1023 = vmatprep.subr.bf16.mxu0 0
        %1024 = vmatpush1.bf16.msra.mxu0 0
        %1025 = vmatprep.subr.bf16.mxu0 0
        %1026 = vmatpush1.bf16.msra.mxu0 0
        %1027 = vmatprep.subr.bf16.mxu0 0
        %1028 = vmatpush1.bf16.msra.mxu0 0
        %1029 = vmatprep.subr.bf16.mxu0 0
        %1030 = vmatpush1.bf16.msra.mxu0 0
        %1031 = vmatprep.subr.bf16.mxu0 0
        %1032 = vmatpush1.bf16.msra.mxu0 0
        %1033 = vmatprep.subr.bf16.mxu0 0
        %1034 = vmatpush1.bf16.msra.mxu0 0
        %1035 = vmatprep.subr.bf16.mxu0 0
        %1036 = vmatpush1.bf16.msra.mxu0 0
        %1037 = vmatprep.subr.bf16.mxu0 0
        %1038 = vmatpush1.bf16.msra.mxu0 0
        %1039 = vmatprep.subr.bf16.mxu0 0
        %1040 = vmatpush1.bf16.msra.mxu0 0
        %1041 = vmatprep.subr.bf16.mxu0 0
        %1042 = vmatpush1.bf16.msra.mxu0 0
        %1043 = vmatprep.subr.bf16.mxu0 0
        %1044 = vmatpush1.bf16.msra.mxu0 0
        %1045 = vmatprep.subr.bf16.mxu0 0
        %1046 = vmatpush1.bf16.msra.mxu0 0
        %1047 = vmatprep.mubr.bf16.mxu0 0
        %1048 = vmatmul.mubr.bf16.gmra.mrb[0].mxu0 %v1013
        %v1049 = vpop.f32.mrb[0].mxu0
        %v1050 = vadd.f32 0.0, %v1049
        %v1051 = vpop.f32.mrb[0].mxu0
        %v1052 = vpop.f32.mrb[0].mxu0
        %v1053 = vpop.f32.mrb[0].mxu0
        %1054 = vdwg.mxu0
        %v1055 = vpack.c.bf16 %v1050, %v1050
        %s1056 = smul.addr %s886, 4
        %s1057 = scalar_lea.vmem %s7, %s1056
        %v1058 = vld [vmem:[%s1057] sm:$0xf]
        %v1060 = vsel %vm776, %v1055, 0
        %vm1062 = vcmask 1043456
        %v1064 = vsel %vm1062, %v1058, 0
        %1066 = vmatprep.subr.bf16.mxu0 0
        %1067 = vmatpush1.bf16.msra.mxu0 %v1064
        %1068 = vmatprep.subr.bf16.mxu0 0
        %1069 = vmatpush1.bf16.msra.mxu0 0
        %1070 = vmatprep.subr.bf16.mxu0 0
        %1071 = vmatpush1.bf16.msra.mxu0 0
        %1072 = vmatprep.subr.bf16.mxu0 0
        %1073 = vmatpush1.bf16.msra.mxu0 0
        %1074 = vmatprep.subr.bf16.mxu0 0
        %1075 = vmatpush1.bf16.msra.mxu0 0
        %1076 = vmatprep.subr.bf16.mxu0 0
        %1077 = vmatpush1.bf16.msra.mxu0 0
        %1078 = vmatprep.subr.bf16.mxu0 0
        %1079 = vmatpush1.bf16.msra.mxu0 0
        %1080 = vmatprep.subr.bf16.mxu0 0
        %1081 = vmatpush1.bf16.msra.mxu0 0
        %1082 = vmatprep.subr.bf16.mxu0 0
        %1083 = vmatpush1.bf16.msra.mxu0 0
        %1084 = vmatprep.subr.bf16.mxu0 0
        %1085 = vmatpush1.bf16.msra.mxu0 0
        %1086 = vmatprep.subr.bf16.mxu0 0
        %1087 = vmatpush1.bf16.msra.mxu0 0
        %1088 = vmatprep.subr.bf16.mxu0 0
        %1089 = vmatpush1.bf16.msra.mxu0 0
        %1090 = vmatprep.subr.bf16.mxu0 0
        %1091 = vmatpush1.bf16.msra.mxu0 0
        %1092 = vmatprep.subr.bf16.mxu0 0
        %1093 = vmatpush1.bf16.msra.mxu0 0
        %1094 = vmatprep.subr.bf16.mxu0 0
        %1095 = vmatpush1.bf16.msra.mxu0 0
        %1096 = vmatprep.subr.bf16.mxu0 0
        %1097 = vmatpush1.bf16.msra.mxu0 0
        %1098 = vmatprep.mubr.bf16.mxu0 0
        %1099 = vmatmul.mubr.bf16.gmra.mrb[0].mxu0 %v1060
        %v1100 = vpop.f32.mrb[0].mxu0
        %v1101 = vadd.f32 0.0, %v1100
        %v1102 = vpop.f32.mrb[0].mxu0
        %v1103 = vpop.f32.mrb[0].mxu0
        %v1104 = vpop.f32.mrb[0].mxu0
        %1105 = vdwg.mxu0
        %v1107 = vsel %vm776, %v882, 0
        %v1110 = vsel %vm1062, %v885, 0
        %1112 = vmatprep.subr.bf16.mxu0 0
        %1113 = vmatpush1.bf16.msra.mxu0 %v1110
        %1114 = vmatprep.subr.bf16.mxu0 0
        %1115 = vmatpush1.bf16.msra.mxu0 0
        %1116 = vmatprep.subr.bf16.mxu0 0
        %1117 = vmatpush1.bf16.msra.mxu0 0
        %1118 = vmatprep.subr.bf16.mxu0 0
        %1119 = vmatpush1.bf16.msra.mxu0 0
        %1120 = vmatprep.subr.bf16.mxu0 0
        %1121 = vmatpush1.bf16.msra.mxu0 0
        %1122 = vmatprep.subr.bf16.mxu0 0
        %1123 = vmatpush1.bf16.msra.mxu0 0
        %1124 = vmatprep.subr.bf16.mxu0 0
        %1125 = vmatpush1.bf16.msra.mxu0 0
        %1126 = vmatprep.subr.bf16.mxu0 0
        %1127 = vmatpush1.bf16.msra.mxu0 0
        %1128 = vmatprep.subr.bf16.mxu0 0
        %1129 = vmatpush1.bf16.msra.mxu0 0
        %1130 = vmatprep.subr.bf16.mxu0 0
        %1131 = vmatpush1.bf16.msra.mxu0 0
        %1132 = vmatprep.subr.bf16.mxu0 0
        %1133 = vmatpush1.bf16.msra.mxu0 0
        %1134 = vmatprep.subr.bf16.mxu0 0
        %1135 = vmatpush1.bf16.msra.mxu0 0
        %1136 = vmatprep.subr.bf16.mxu0 0
        %1137 = vmatpush1.bf16.msra.mxu0 0
        %1138 = vmatprep.subr.bf16.mxu0 0
        %1139 = vmatpush1.bf16.msra.mxu0 0
        %1140 = vmatprep.subr.bf16.mxu0 0
        %1141 = vmatpush1.bf16.msra.mxu0 0
        %1142 = vmatprep.subr.bf16.mxu0 0
        %1143 = vmatpush1.bf16.msra.mxu0 0
        %1144 = vmatprep.mubr.bf16.mxu0 0
        %1145 = vmatmul.mubr.bf16.gmra.mrb[0].mxu0 %v1107
        %v1146 = vpop.f32.mrb[0].mxu0
        %v1147 = vadd.f32 %v1101, %v1146
        %v1148 = vpop.f32.mrb[0].mxu0
        %v1149 = vpop.f32.mrb[0].mxu0
        %v1150 = vpop.f32.mrb[0].mxu0
        %1151 = vdwg.mxu0
        %v1152 = vld [vmem:[#allocation2] sm:$0xff]
        %v1153 = vadd.f32 %v1152, %v1147
        %1154 = vst.msk [vmem:[#allocation2] sm:$0xff] %vm727, %v1153
        %p1155 = scmp.eq.s32.totalorder %s29, 1
        // Predicated region
        $region61: #{tpu_custom_call.1} parent=51 // pred_check
          %p1156 = pneg %p1155
        $region62: #{tpu_custom_call.1} parent=51 // pred_check_branch
          %1158 = sbr.rel (%p1156) target = $region64
        $region63: #{tpu_custom_call.1} parent=51 // pred_region
          %v1159 = vld [vmem:[#allocation2] sm:$0xff]
          %1160 = vst.msk [vmem:[%s380] sm:$0xff] %vm727, %v1159
        $region64: #{tpu_custom_call.1} parent=51 // pred_fallthru
          _
        %s1161 = sand.u32 %s243, 1
        %s1162 = scalar_lea.sflag [#allocation7], %s1161
        %s1163 = sand.u32 %s243, 1
        %s1164 = smul.addr %s1163, 8
        %s1165 = scalar_lea.vmem [#allocation6], %s1164
        // Predicated region
        $region65: #{tpu_custom_call.1} parent=51 // pred_check
          %p1166 = pneg %p253
        $region66: #{tpu_custom_call.1} parent=51 // pred_check_branch
          %1168 = sbr.rel (%p1166) target = $region68
        $region67: #{tpu_custom_call.1} parent=51 // pred_region
          %s1170 = ssub.s32 128, 128
          %1171 = vsyncadd %s1162, %s1170
          %s1172 = smul.addr %s27, 2
          %s1173 = sadd.s32 %s28, %s1172
          %s1174 = smul.addr %s1173, 128
          %s1175 = scalar_lea.hbm %s8, %s1174
          %s1177 = sshll.u32 %s1165, 4
          %s1178 = int_to_ptr.vmem [resolvable:$true] %s1177
          %1180 = dma.vmem_to_hbm [thread:$0]  %s1178, 128, %s1175, %s1162
        $region68: #{tpu_custom_call.1} parent=51 // pred_fallthru
          _
      $region52: #{tpu_custom_call.1} parent=5 // pred_fallthru
        _
      %p1181 = scmp.le.s32.totalorder 2, %s17
      // Predicated region
      $region69: #{tpu_custom_call.1} parent=5 // pred_check
        %p1182 = pneg %p1181
      $region70: #{tpu_custom_call.1} parent=5 // pred_check_branch
        %1184 = sbr.rel (%p1182) target = $region72
      $region71: #{tpu_custom_call.1} parent=5 // pred_region
        %s1185 = ssub.s32 %s17, 2
        // Predicated region
        $region73: #{tpu_custom_call.1} parent=71 // pred_check
          %p1186 = pneg %p259
        $region74: #{tpu_custom_call.1} parent=71 // pred_check_branch
          %1188 = sbr.rel (%p1186) target = $region76
        $region75: #{tpu_custom_call.1} parent=71 // pred_region
          %s1189 = sand.u32 %s244, 1
          %s1190 = scalar_lea.sflag [#allocation7], %s1189
          %s1191 = sand.u32 %s244, 1
          %s1192 = smul.addr %s1191, 8
          %s1193 = scalar_lea.vmem [#allocation6], %s1192
          %1194 = dma.done %s1190, 128
        $region76: #{tpu_custom_call.1} parent=71 // pred_fallthru
          _
      $region72: #{tpu_custom_call.1} parent=5 // pred_fallthru
        _
    $region6: #{tpu_custom_call.1} parent=1 // loop_footer
      %s21 = sadd.s32 1, %s17
    $region7: #{tpu_custom_call.1} parent=1 // loop_footer_branch
      %16 = sbr.rel target = $region3
    $region8: #{tpu_custom_call.1} parent=1 // loop_exit
      _
    %1195 = vsyncpa [#allocation7], 1
    %s1196 = scalar_lea.sflag [#allocation7], 1
    %1197 = vsyncpa %s1196, 1

</llo_original>
